<compile_context>
chip_gen: v6e
topology: v6e:2x2x1
jax: 0.10.0
libtpu: 0.0.40
codegen_flags: <defaults>
</compile_context>

<pallas_src>
import functools

import jax
import jax.numpy as jnp
from jax import lax
from jax.experimental import pallas as pl
from jax.experimental.pallas import tpu as pltpu


# ----------------------------------------------------------------------------
# Fused conv kernel:
#   per-row-tile [BN scale/shift + ReLU] -> halo/pad tile in compute dtype ->
#   im2col -> single MXU matmul -> bias [-> + residual] -> store,
#   plus optional per-tile per-channel sum / sum-of-squares side outputs
#   (of the raw input, or of the conv output) for the next BatchNorm.
# ----------------------------------------------------------------------------
def _fused_conv_kernel(*refs, stride, pad, kh_kw, apply_bn_relu, add_residual,
                       in_stats, out_stats, bot_oob):
    KH, KW = kh_kw
    it = iter(refs)
    x_ref = next(it)                                   # (1, H, W, Cin)
    w_ref = next(it)                                   # (KH*KW*Cin, TC)
    b_ref = next(it)                                   # (1, TC) f32
    scale_ref = next(it) if apply_bn_relu else None    # (1, Cin) f32
    shift_ref = next(it) if apply_bn_relu else None    # (1, Cin) f32
    res_ref = next(it) if add_residual else None       # (1, TH, Wo, TC)
    o_ref = next(it)                                   # (1, TH, Wo, TC)
    isum_ref = next(it) if in_stats else None          # (1, 1, Cin) f32
    isq_ref = next(it) if in_stats else None
    osum_ref = next(it) if out_stats else None         # (1, 1, TC) f32
    osq_ref = next(it) if out_stats else None

    H, W, Cin = x_ref.shape[1], x_ref.shape[2], x_ref.shape[3]
    TH, Wo, TC = o_ref.shape[1], o_ref.shape[2], o_ref.shape[3]
    cdt = w_ref.dtype
    t = pl.program_id(1)
    HT = pl.num_programs(1)

    th_in = (TH - 1) * stride + KH          # input rows this tile needs
    mid_rows = th_in - 2 * pad              # rows that are always in-bounds
    step = TH * stride
    row0 = t * step
    if step % 8 == 0:
        row0 = pl.multiple_of(row0, 8)

    def xform(v):                           # raw rows -> BN+ReLU, compute dtype
        v = v.astype(jnp.float32)
        if apply_bn_relu:
            v = jnp.maximum(v * scale_ref[...] + shift_ref[...], 0.0)
        return v.astype(cdt)

    # BN1 batch-statistics of the *raw* input, one partial per (image, tile).
    if in_stats:
        xown = x_ref[0, pl.ds(row0, step), :, :].astype(jnp.float32)
        isum_ref[0] = jnp.sum(xown, axis=(0, 1))[None, :]
        isq_ref[0] = jnp.sum(xown * xown, axis=(0, 1))[None, :]

    # --- build the halo'd / padded input tile (th_in, Wp, Cin), cdt ---------
    mid = xform(x_ref[0, pl.ds(row0, mid_rows), :, :])          # (mid, W, Cin)
    if pad > 0:
        # top halo (pad rows): only tile 0 falls off the image (TH*stride>=pad)
        tstart = jnp.maximum(row0 - pad, 0)
        top_raw = xform(x_ref[0, pl.ds(tstart, pad), :, :])
        top = jnp.where(t > 0, top_raw, jnp.zeros_like(top_raw))
        # bottom halo (pad rows): only the last tile can fall off, by the
        # statically known amount `bot_oob`.
        bstart = jnp.minimum(row0 + mid_rows, H - pad)
        bot_raw = xform(x_ref[0, pl.ds(bstart, pad), :, :])
        if bot_oob == 0:
            bot = bot_raw
        elif bot_oob >= pad:
            bot = jnp.where(t == HT - 1, jnp.zeros_like(bot_raw), bot_raw)
        else:
            shifted = jnp.concatenate(
                [bot_raw[bot_oob:],
                 jnp.zeros((bot_oob, W, Cin), bot_raw.dtype)], axis=0)
            bot = jnp.where(t == HT - 1, shifted, bot_raw)
        rows_act = jnp.concatenate([top, mid, bot], axis=0)     # (th_in, W, .)
        zcol = jnp.zeros((th_in, pad, Cin), rows_act.dtype)
        xt = jnp.concatenate([zcol, rows_act, zcol], axis=1)    # (th_in, Wp, .)
    else:
        xt = mid                                                # (th_in, W, .)

    # --- im2col: one matmul per tile, contraction = KH*KW*Cin ---------------
    parts = []
    if stride == 1:
        for kh in range(KH):
            slab = xt[kh:kh + TH]                               # (TH, Wp, Cin)
            for kw in range(KW):
                parts.append(slab[:, kw:kw + Wo, :])            # (TH, Wo, Cin)
    else:
        # De-interleave row/column parity once; per-tap slices are contiguous.
        quads = [[xt[pr::stride, pc::stride, :] for pc in range(stride)]
                 for pr in range(stride)]
        for kh in range(KH):
            for kw in range(KW):
                q = quads[kh % stride][kw % stride]
                parts.append(q[kh // stride:kh // stride + TH,
                               kw // stride:kw // stride + Wo, :])
    patch = parts[0] if len(parts) == 1 else jnp.concatenate(parts, axis=-1)
    acc = jnp.dot(patch.reshape(TH * Wo, KH * KW * Cin), w_ref[...],
                  preferred_element_type=jnp.float32)
    out = acc + b_ref[...]                                      # (TH*Wo, TC)

    if out_stats:                       # BN2 stats of the raw conv output
        osum_ref[0] = jnp.sum(out, axis=0, keepdims=True)
        osq_ref[0] = jnp.sum(out * out, axis=0, keepdims=True)

    y = out.reshape(TH, Wo, TC)
    if add_residual:
        y = y + res_ref[0].astype(jnp.float32)
    o_ref[0] = y.astype(o_ref.dtype)


def fused_conv(x, w, b, *, stride=1, pad=0, scale=None, shift=None,
               residual=None, in_stats=False, out_stats=False,
               compute_dtype=jnp.float32, out_dtype=None,
               row_tile=None, cout_tile=None):
    """Conv2d (NHWC x HWIO) with optional fused BN+ReLU on the input, fused
    residual add on the output and fused BN statistics accumulation.

    Returns (y, channel_sum, channel_sumsq); stats are None unless requested.
    """
    N, H, W, Cin = x.shape
    KH, KW, wCin, Cout = w.shape
    assert wCin == Cin
    Hp, Wp = H + 2 * pad, W + 2 * pad
    Ho = (Hp - KH) // stride + 1
    Wo = (Wp - KW) // stride + 1
    out_dtype = out_dtype or x.dtype
    apply_bn = scale is not None
    if in_stats:
        # fused input stats sweep x in non-overlapping (TH*stride)-row chunks
        assert pad == 0 and stride * Ho == H, "fused in_stats needs exact cover"
    if residual is not None:
        assert residual.shape == (N, Ho, Wo, Cout), residual.shape

    csize = jnp.dtype(compute_dtype).itemsize
    xsize = jnp.dtype(x.dtype).itemsize

    def _tile_bytes(th):
        thi = (th - 1) * stride + KH
        return (th * Wo * KH * KW * Cin * csize       # im2col patch
                + 3 * th * Wo * Cout * 4              # acc / epilogue temps
                + 2 * thi * Wp * Cin * 4)             # halo tile temporaries

    # Row tile: grow until TH*Wo saturates the MXU M dim (~512 rows), within
    # a conservative VMEM budget (tighter chips: v7x has 64 MiB physical).
    if row_tile is None:
        budget = 8 * 1024 * 1024
        cands = [d for d in range(1, Ho + 1)
                 if Ho % d == 0 and d * stride >= pad] or [Ho]
        good = [d for d in cands if _tile_bytes(d) <= budget]
        row_tile = max(good) if good else min(cands)
        for d in sorted(good):
            if d * Wo >= 512:
                row_tile = d
                break
    TH = row_tile
    assert Ho % TH == 0 and TH * stride >= pad
    HT = Ho // TH

    # Optional Cout tiling (bounds weight VMEM / accumulator vregs, item for
    # v7x-sized channel counts); disabled when input stats ride this conv.
    if cout_tile is None:
        cout_tile = 256 if (not in_stats and Cout > 256 and Cout % 256 == 0) \
            else Cout
    TC = cout_tile
    assert Cout % TC == 0
    CT = Cout // TC
    if CT > 1:
        assert TC % 128 == 0 and not in_stats

    bot_oob = max(0, (Ho - 1) * stride + KH - pad - H)
    kernel = functools.partial(
        _fused_conv_kernel, stride=stride, pad=pad, kh_kw=(KH, KW),
        apply_bn_relu=apply_bn, add_residual=residual is not None,
        in_stats=in_stats, out_stats=out_stats, bot_oob=bot_oob)

    w2 = w.reshape(KH * KW * Cin, Cout).astype(compute_dtype)
    in_specs = [
        pl.BlockSpec((1, H, W, Cin), lambda n, t, c: (n, 0, 0, 0)),
        pl.BlockSpec((KH * KW * Cin, TC), lambda n, t, c: (0, c)),
        pl.BlockSpec((1, TC), lambda n, t, c: (0, c)),
    ]
    args = [x, w2, jnp.asarray(b, jnp.float32).reshape(1, Cout)]
    if apply_bn:
        in_specs += [pl.BlockSpec((1, Cin), lambda n, t, c: (0, 0))] * 2
        args += [jnp.asarray(scale, jnp.float32).reshape(1, Cin),
                 jnp.asarray(shift, jnp.float32).reshape(1, Cin)]
    if residual is not None:
        in_specs.append(pl.BlockSpec((1, TH, Wo, TC),
                                     lambda n, t, c: (n, t, 0, c)))
        args.append(residual)

    out_shape = [jax.ShapeDtypeStruct((N, Ho, Wo, Cout), out_dtype)]
    out_specs = [pl.BlockSpec((1, TH, Wo, TC), lambda n, t, c: (n, t, 0, c))]
    if in_stats:   # one partial per (image, row tile) -> no revisited writes
        out_shape += [jax.ShapeDtypeStruct((N * HT, 1, Cin), jnp.float32)] * 2
        out_specs += [pl.BlockSpec((1, 1, Cin),
                                   lambda n, t, c: (n * HT + t, 0, 0))] * 2
    if out_stats:
        out_shape += [jax.ShapeDtypeStruct((N * HT, 1, Cout), jnp.float32)] * 2
        out_specs += [pl.BlockSpec((1, 1, TC),
                                   lambda n, t, c: (n * HT + t, 0, c))] * 2

    est = (2 * H * W * Cin * xsize                     # resident x block (x2)
           + 2 * KH * KW * Cin * TC * csize            # weight block (x2)
           + 4 * TH * Wo * TC * jnp.dtype(out_dtype).itemsize
           + _tile_bytes(TH))
    vmem_limit = int(min(100 * 1024 * 1024, max(32 * 1024 * 1024, 2 * est)))

    results = pl.pallas_call(
        kernel,
        grid=(N, HT, CT),
        in_specs=in_specs,
        out_specs=tuple(out_specs),
        out_shape=tuple(out_shape),
        compiler_params=pltpu.CompilerParams(
            dimension_semantics=("parallel", "parallel", "arbitrary"),
            vmem_limit_bytes=vmem_limit),
    )(*args)

    y = results[0]
    if in_stats or out_stats:
        s, q = results[1], results[2]
        return y, jnp.sum(s, axis=(0, 1)), jnp.sum(q, axis=(0, 1))
    return y, None, None


# ----------------------------------------------------------------------------
# Standalone BN stats kernel (identity-skip case: no conv pass to fuse into).
# Row-tiled, per-(image, tile) partials, both grid axes parallel.
# ----------------------------------------------------------------------------
def _bn_stats_kernel(x_ref, sum_ref, sq_ref):
    x = x_ref[0].astype(jnp.float32)                   # (TH, W, C)
    sum_ref[0] = jnp.sum(x, axis=(0, 1))[None, :]
    sq_ref[0] = jnp.sum(x * x, axis=(0, 1))[None, :]


def bn_input_stats(x, row_tile=None):
    N, H, W, C = x.shape
    if row_tile is None:
        budget = 2 * 1024 * 1024
        cands = [d for d in range(1, H + 1) if H % d == 0]
        good = [d for d in cands if 3 * d * W * C * 4 <= budget] or [1]
        row_tile = max(good)
    TH = row_tile
    HT = H // TH
    s, q = pl.pallas_call(
        _bn_stats_kernel,
        grid=(N, HT),
        in_specs=[pl.BlockSpec((1, TH, W, C), lambda n, t: (n, t, 0, 0))],
        out_specs=(pl.BlockSpec((1, 1, C), lambda n, t: (n * HT + t, 0, 0)),
                   pl.BlockSpec((1, 1, C), lambda n, t: (n * HT + t, 0, 0))),
        out_shape=(jax.ShapeDtypeStruct((N * HT, 1, C), jnp.float32),
                   jax.ShapeDtypeStruct((N * HT, 1, C), jnp.float32)),
        compiler_params=pltpu.CompilerParams(
            dimension_semantics=("parallel", "parallel")),
    )(x)
    return jnp.sum(s, axis=(0, 1)), jnp.sum(q, axis=(0, 1))


def _bn_affine(ssum, sqsum, count, gamma, beta, eps=1e-5):
    # PyTorch training-mode BatchNorm: batch mean / biased batch variance.
    mean = ssum / count
    var = jnp.maximum(sqsum / count - mean * mean, 0.0)
    scale = gamma / jnp.sqrt(var + eps)
    return scale, beta - mean * scale


# ----------------------------------------------------------------------------
# ResidualBlock: parameter init + forward
# ----------------------------------------------------------------------------
def init_residual_block(key, in_channels, out_channels, kernel_size,
                        downsample=False):
    def conv_init(k, kh, kw, cin, cout):
        kw_, kb_ = jax.random.split(k)
        bound = 1.0 / jnp.sqrt(float(cin * kh * kw))
        w = jax.random.uniform(kw_, (kh, kw, cin, cout), jnp.float32,
                               -bound, bound)
        b = jax.random.uniform(kb_, (cout,), jnp.float32, -bound, bound)
        return w, b

    k1, k2, k3 = jax.random.split(key, 3)
    p = {
        "bn1_gamma": jnp.ones((in_channels,), jnp.float32),
        "bn1_beta": jnp.zeros((in_channels,), jnp.float32),
        "bn2_gamma": jnp.ones((out_channels,), jnp.float32),
        "bn2_beta": jnp.zeros((out_channels,), jnp.float32),
    }
    p["conv1_w"], p["conv1_b"] = conv_init(k1, kernel_size, kernel_size,
                                           in_channels, out_channels)
    p["conv2_w"], p["conv2_b"] = conv_init(k2, kernel_size, kernel_size,
                                           out_channels, out_channels)
    if in_channels != out_channels or downsample:
        p["res_w"], p["res_b"] = conv_init(k3, 1, 1, in_channels, out_channels)
    else:
        p["res_w"], p["res_b"] = None, None
    return p


def residual_block_forward_nhwc(x, params, *, kernel_size, downsample=False,
                                compute_dtype=jnp.float32, eps=1e-5):
    """NHWC forward (preferred entry point: no HBM layout transposes)."""
    assert kernel_size % 2 == 1, "padding='same' path assumes odd kernel"
    stride = 2 if downsample else 1
    pad = kernel_size // 2
    x = x.astype(jnp.float32)
    N, H, W, Cin = x.shape

    # Skip connection.  When it is a 1x1 conv, BN1's input statistics ride the
    # same pass over x (per-row-tile partials).
    if params["res_w"] is not None:
        fuse = (stride * ((H - 1) // stride + 1) == H)
        skip, s1, q1 = fused_conv(
            x, params["res_w"], params["res_b"], stride=stride, pad=0,
            in_stats=fuse, compute_dtype=compute_dtype, out_dtype=compute_dtype)
        if not fuse:
            s1, q1 = bn_input_stats(x)
    else:
        skip = x
        s1, q1 = bn_input_stats(x)

    scale1, shift1 = _bn_affine(s1, q1, N * H * W,
                                params["bn1_gamma"], params["bn1_beta"], eps)

    # conv1: fused BN1+ReLU on its input, fused BN2 statistics of its output.
    h, s2, q2 = fused_conv(
        x, params["conv1_w"], params["conv1_b"], stride=stride, pad=pad,
        scale=scale1, shift=shift1, out_stats=True,
        compute_dtype=compute_dtype, out_dtype=compute_dtype)
    _, Ho, Wo, _ = h.shape

    scale2, shift2 = _bn_affine(s2, q2, N * Ho * Wo,
                                params["bn2_gamma"], params["bn2_beta"], eps)

    # conv2: fused BN2+ReLU on its input, residual add fused into the epilogue.
    out, _, _ = fused_conv(
        h, params["conv2_w"], params["conv2_b"], stride=1, pad=pad,
        scale=scale2, shift=shift2, residual=skip,
        compute_dtype=compute_dtype, out_dtype=jnp.float32)
    return out


def residual_block_forward(x_nchw, params, *, kernel_size, downsample=False,
                           compute_dtype=jnp.float32, eps=1e-5):
    # NCHW boundary kept only for parity with the PyTorch module.
    x = jnp.transpose(x_nchw, (0, 2, 3, 1))
    out = residual_block_forward_nhwc(
        x, params, kernel_size=kernel_size, downsample=downsample,
        compute_dtype=compute_dtype, eps=eps)
    return jnp.transpose(out, (0, 3, 1, 2))


# ----------------------------------------------------------------------------
# Pure-JAX reference (mirrors the PyTorch module semantics) for verification
# ----------------------------------------------------------------------------
def _ref_bn_relu(x, gamma, beta, eps=1e-5):
    mean = jnp.mean(x, axis=(0, 1, 2))
    var = jnp.mean((x - mean) ** 2, axis=(0, 1, 2))
    return jnp.maximum((x - mean) / jnp.sqrt(var + eps) * gamma + beta, 0.0)


def _ref_conv(x, w, b, stride, padding):
    y = lax.conv_general_dilated(
        x, w, window_strides=(stride, stride),
        padding=((padding, padding), (padding, padding)),
        dimension_numbers=("NHWC", "HWIO", "NHWC"))
    return y + b


def ref_forward(x_nchw, params, *, kernel_size, downsample=False):
    stride = 2 if downsample else 1
    padding = kernel_size // 2
    x = jnp.transpose(x_nchw, (0, 2, 3, 1))
    if params["res_w"] is not None:
        skip = _ref_conv(x, params["res_w"], params["res_b"], stride, 0)
    else:
        skip = x
    h = _ref_bn_relu(x, params["bn1_gamma"], params["bn1_beta"])
    h = _ref_conv(h, params["conv1_w"], params["conv1_b"], stride, padding)
    h = _ref_bn_relu(h, params["bn2_gamma"], params["bn2_beta"])
    h = _ref_conv(h, params["conv2_w"], params["conv2_b"], 1, padding)
    return jnp.transpose(h + skip, (0, 3, 1, 2))


# ----------------------------------------------------------------------------
if __name__ == "__main__":
    N, C_IN, C_OUT, HW, K = 2, 4, 8, 16, 3
    key = jax.random.PRNGKey(0)
    kx, kp1, kp2 = jax.random.split(key, 3)
    x = jax.random.normal(kx, (N, C_IN, HW, HW), jnp.float32)   # NCHW input

    # Case 1: in_channels != out_channels -> 1x1-conv skip (BN1 stats fused).
    params = init_residual_block(kp1, C_IN, C_OUT, K, downsample=False)
    ref = jax.block_until_ready(
        ref_forward(x, params, kernel_size=K, downsample=False))

    fwd = jax.jit(functools.partial(residual_block_forward,
                                    kernel_size=K, downsample=False))
    out = jax.block_until_ready(fwd(x, params))
    assert out.shape == (N, C_OUT, HW, HW), out.shape
    err = float(jnp.max(jnp.abs(out - ref)))
    assert err < 1e-3, err

    # bf16 MXU-operand path (f32 accumulation): looser tolerance.
    fwd_bf16 = jax.jit(functools.partial(residual_block_forward,
                                         kernel_size=K, downsample=False,
                                         compute_dtype=jnp.bfloat16))
    out_bf16 = jax.block_until_ready(fwd_bf16(x, params))
    err_bf16 = float(jnp.max(jnp.abs(out_bf16 - ref)))
    assert err_bf16 < 0.15, err_bf16

    # Case 2: identity skip (in == out channels) -> standalone BN1 stats kernel.
    params2 = init_residual_block(kp2, C_IN, C_IN, K, downsample=False)
    ref2 = jax.block_until_ready(
        ref_forward(x, params2, kernel_size=K, downsample=False))
    fwd2 = jax.jit(functools.partial(residual_block_forward,
                                     kernel_size=K, downsample=False))
    out2 = jax.block_until_ready(fwd2(x, params2))
    err2 = float(jnp.max(jnp.abs(out2 - ref2)))
    assert err2 < 1e-3, err2

    print("KERNEL_OK")
</pallas_src>

<mosaic_0001>
module attributes {stable_mosaic.version = 11 : i64} {
  func.func @_fused_conv_kernel(%arg0: i32, %arg1: i32, %arg2: i32, %arg3: memref<1x16x16x4xf32, #tpu.memory_space<vmem>>, %arg4: memref<4x8xf32, #tpu.memory_space<vmem>>, %arg5: memref<1x8xf32, #tpu.memory_space<vmem>>, %arg6: memref<1x16x16x8xf32, #tpu.memory_space<vmem>>, %arg7: memref<1x1x4xf32, #tpu.memory_space<vmem>>, %arg8: memref<1x1x4xf32, #tpu.memory_space<vmem>>) attributes {dimension_semantics = [#tpu.dimension_semantics<parallel>, #tpu.dimension_semantics<parallel>, #tpu.dimension_semantics<arbitrary>], iteration_bounds = array<i64: 2, 1, 1>, scalar_prefetch = 0 : i64, scratch_operands = 0 : i64, tpu.core_type = #tpu.core_type<tc>, window_params = [{transform_indices = @transform_0, window_bounds = array<i64: 1, 16, 16, 4>}, {transform_indices = @transform_1, window_bounds = array<i64: 4, 8>}, {transform_indices = @transform_2, window_bounds = array<i64: 1, 8>}, {transform_indices = @transform_3, window_bounds = array<i64: 1, 16, 16, 8>}, {transform_indices = @transform_4, window_bounds = array<i64: 1, 1, 4>}, {transform_indices = @transform_5, window_bounds = array<i64: 1, 1, 4>}]} {
    %c16_i32 = arith.constant 16 : i32
    %0 = arith.muli %arg1, %c16_i32 : i32
    %1 = tpu.assume_multiple %0, 8 : i32
    %c0 = arith.constant 0 : index
    %2 = arith.index_cast %1 : i32 to index
    %c0_0 = arith.constant 0 : index
    %c0_1 = arith.constant 0 : index
    %3 = vector.load %arg3[%c0, %2, %c0_0, %c0_1] : memref<1x16x16x4xf32, #tpu.memory_space<vmem>>, vector<1x16x16x4xf32>
    %4 = vector.shape_cast %3 : vector<1x16x16x4xf32> to vector<16x16x4xf32>
    %cst = arith.constant dense<0.000000e+00> : vector<4xf32>
    %5 = vector.multi_reduction <add>, %4, %cst [0, 1] : vector<16x16x4xf32> to vector<4xf32>
    %6 = vector.shape_cast %5 : vector<4xf32> to vector<1x4xf32>
    %c0_2 = arith.constant 0 : index
    %c0_3 = arith.constant 0 : index
    %c0_4 = arith.constant 0 : index
    %7 = vector.load %arg7[%c0_2, %c0_3, %c0_4] : memref<1x1x4xf32, #tpu.memory_space<vmem>>, vector<1x1x4xf32>
    %8 = vector.shape_cast %7 : vector<1x1x4xf32> to vector<1x4xf32>
    %9 = vector.shape_cast %6 : vector<1x4xf32> to vector<1x1x4xf32>
    tpu.vector_store %arg7[%c0_2, %c0_3, %c0_4], %9 {strides = array<i32>} : memref<1x1x4xf32, #tpu.memory_space<vmem>>, vector<1x1x4xf32>,
    %10 = arith.mulf %4, %4 : vector<16x16x4xf32>
    %cst_5 = arith.constant dense<0.000000e+00> : vector<4xf32>
    %11 = vector.multi_reduction <add>, %10, %cst_5 [0, 1] : vector<16x16x4xf32> to vector<4xf32>
    %12 = vector.shape_cast %11 : vector<4xf32> to vector<1x4xf32>
    %c0_6 = arith.constant 0 : index
    %c0_7 = arith.constant 0 : index
    %c0_8 = arith.constant 0 : index
    %13 = vector.load %arg8[%c0_6, %c0_7, %c0_8] : memref<1x1x4xf32, #tpu.memory_space<vmem>>, vector<1x1x4xf32>
    %14 = vector.shape_cast %13 : vector<1x1x4xf32> to vector<1x4xf32>
    %15 = vector.shape_cast %12 : vector<1x4xf32> to vector<1x1x4xf32>
    tpu.vector_store %arg8[%c0_6, %c0_7, %c0_8], %15 {strides = array<i32>} : memref<1x1x4xf32, #tpu.memory_space<vmem>>, vector<1x1x4xf32>,
    %c0_9 = arith.constant 0 : index
    %16 = arith.index_cast %1 : i32 to index
    %c0_10 = arith.constant 0 : index
    %c0_11 = arith.constant 0 : index
    %17 = vector.load %arg3[%c0_9, %16, %c0_10, %c0_11] : memref<1x16x16x4xf32, #tpu.memory_space<vmem>>, vector<1x16x16x4xf32>
    %18 = vector.shape_cast %17 : vector<1x16x16x4xf32> to vector<16x16x4xf32>
    %19 = vector.shape_cast %18 : vector<16x16x4xf32> to vector<256x4xf32>
    %c0_12 = arith.constant 0 : index
    %c0_13 = arith.constant 0 : index
    %20 = vector.load %arg4[%c0_12, %c0_13] : memref<4x8xf32, #tpu.memory_space<vmem>>, vector<4x8xf32>
    %cst_14 = arith.constant dense<0.000000e+00> : vector<256x8xf32>
    %21 = tpu.matmul %19, %20, %cst_14 {dimension_numbers = #tpu.dot_dimension_numbers<[1], [0], [0], [1], [0, 0, 1, 1], [], []>} : vector<256x4xf32>, vector<4x8xf32>, vector<256x8xf32> -> vector<256x8xf32>
    %c0_15 = arith.constant 0 : index
    %c0_16 = arith.constant 0 : index
    %22 = vector.load %arg5[%c0_15, %c0_16] : memref<1x8xf32, #tpu.memory_space<vmem>>, vector<1x8xf32>
    %23 = vector.broadcast %22 : vector<1x8xf32> to vector<256x8xf32>
    %24 = arith.addf %21, %23 : vector<256x8xf32>
    %25 = vector.shape_cast %24 : vector<256x8xf32> to vector<16x16x8xf32>
    %c0_17 = arith.constant 0 : index
    %c0_18 = arith.constant 0 : index
    %c0_19 = arith.constant 0 : index
    %c0_20 = arith.constant 0 : index
    %26 = vector.load %arg6[%c0_17, %c0_18, %c0_19, %c0_20] : memref<1x16x16x8xf32, #tpu.memory_space<vmem>>, vector<1x16x16x8xf32>
    %27 = vector.shape_cast %26 : vector<1x16x16x8xf32> to vector<16x16x8xf32>
    %28 = vector.shape_cast %25 : vector<16x16x8xf32> to vector<1x16x16x8xf32>
    tpu.vector_store %arg6[%c0_17, %c0_18, %c0_19, %c0_20], %28 {strides = array<i32>} : memref<1x16x16x8xf32, #tpu.memory_space<vmem>>, vector<1x16x16x8xf32>,
    return
  }
  func.func @transform_0(%arg0: i32, %arg1: i32, %arg2: i32) -> (i32, i32, i32, i32) {
    %c0_i32 = arith.constant 0 : i32
    %c0_i32_0 = arith.constant 0 : i32
    %c0_i32_1 = arith.constant 0 : i32
    %c0_i32_2 = arith.constant 0 : i32
    return %arg0, %c0_i32, %c0_i32_0, %c0_i32_1 : i32, i32, i32, i32
  }
  func.func @transform_1(%arg0: i32, %arg1: i32, %arg2: i32) -> (i32, i32) {
    %c0_i32 = arith.constant 0 : i32
    %c0_i32_0 = arith.constant 0 : i32
    return %c0_i32, %arg2 : i32, i32
  }
  func.func @transform_2(%arg0: i32, %arg1: i32, %arg2: i32) -> (i32, i32) {
    %c0_i32 = arith.constant 0 : i32
    %c0_i32_0 = arith.constant 0 : i32
    return %c0_i32, %arg2 : i32, i32
  }
  func.func @transform_3(%arg0: i32, %arg1: i32, %arg2: i32) -> (i32, i32, i32, i32) {
    %c0_i32 = arith.constant 0 : i32
    %c0_i32_0 = arith.constant 0 : i32
    return %arg0, %arg1, %c0_i32, %arg2 : i32, i32, i32, i32
  }
  func.func @transform_4(%arg0: i32, %arg1: i32, %arg2: i32) -> (i32, i32, i32) {
    %c1_i32 = arith.constant 1 : i32
    %0 = arith.muli %arg0, %c1_i32 : i32
    %1 = arith.addi %0, %arg1 : i32
    %c0_i32 = arith.constant 0 : i32
    %c0_i32_0 = arith.constant 0 : i32
    %c0_i32_1 = arith.constant 0 : i32
    return %1, %c0_i32, %c0_i32_0 : i32, i32, i32
  }
  func.func @transform_5(%arg0: i32, %arg1: i32, %arg2: i32) -> (i32, i32, i32) {
    %c1_i32 = arith.constant 1 : i32
    %0 = arith.muli %arg0, %c1_i32 : i32
    %1 = arith.addi %0, %arg1 : i32
    %c0_i32 = arith.constant 0 : i32
    %c0_i32_0 = arith.constant 0 : i32
    %c0_i32_1 = arith.constant 0 : i32
    return %1, %c0_i32, %c0_i32_0 : i32, i32, i32
  }
}

module attributes {stable_mosaic.version = 11 : i64} {
  func.func @_fused_conv_kernel(%arg0: i32, %arg1: i32, %arg2: i32, %arg3: memref<1x16x16x4xf32, #tpu.memory_space<vmem>>, %arg4: memref<36x8xf32, #tpu.memory_space<vmem>>, %arg5: memref<1x8xf32, #tpu.memory_space<vmem>>, %arg6: memref<1x4xf32, #tpu.memory_space<vmem>>, %arg7: memref<1x4xf32, #tpu.memory_space<vmem>>, %arg8: memref<1x16x16x8xf32, #tpu.memory_space<vmem>>, %arg9: memref<1x1x8xf32, #tpu.memory_space<vmem>>, %arg10: memref<1x1x8xf32, #tpu.memory_space<vmem>>) attributes {dimension_semantics = [#tpu.dimension_semantics<parallel>, #tpu.dimension_semantics<parallel>, #tpu.dimension_semantics<arbitrary>], iteration_bounds = array<i64: 2, 1, 1>, scalar_prefetch = 0 : i64, scratch_operands = 0 : i64, tpu.core_type = #tpu.core_type<tc>, window_params = [{transform_indices = @transform_0, window_bounds = array<i64: 1, 16, 16, 4>}, {transform_indices = @transform_1, window_bounds = array<i64: 36, 8>}, {transform_indices = @transform_2, window_bounds = array<i64: 1, 8>}, {pipeline_mode = #tpu.pipeline_mode<synchronous>, transform_indices = @transform_3, window_bounds = array<i64: 1, 4>}, {pipeline_mode = #tpu.pipeline_mode<synchronous>, transform_indices = @transform_4, window_bounds = array<i64: 1, 4>}, {transform_indices = @transform_5, window_bounds = array<i64: 1, 16, 16, 8>}, {transform_indices = @transform_6, window_bounds = array<i64: 1, 1, 8>}, {transform_indices = @transform_7, window_bounds = array<i64: 1, 1, 8>}]} {
    %c16_i32 = arith.constant 16 : i32
    %0 = arith.muli %arg1, %c16_i32 : i32
    %1 = tpu.assume_multiple %0, 8 : i32
    %c0 = arith.constant 0 : index
    %2 = arith.index_cast %1 : i32 to index
    %c0_0 = arith.constant 0 : index
    %c0_1 = arith.constant 0 : index
    %3 = vector.load %arg3[%c0, %2, %c0_0, %c0_1] : memref<1x16x16x4xf32, #tpu.memory_space<vmem>>, vector<1x16x16x4xf32>
    %4 = vector.shape_cast %3 : vector<1x16x16x4xf32> to vector<16x16x4xf32>
    %c0_2 = arith.constant 0 : index
    %c0_3 = arith.constant 0 : index
    %5 = vector.load %arg6[%c0_2, %c0_3] : memref<1x4xf32, #tpu.memory_space<vmem>>, vector<1x4xf32>
    %6 = vector.shape_cast %5 : vector<1x4xf32> to vector<1x1x4xf32>
    %7 = vector.broadcast %6 : vector<1x1x4xf32> to vector<16x16x4xf32>
    %8 = arith.mulf %4, %7 : vector<16x16x4xf32>
    %c0_4 = arith.constant 0 : index
    %c0_5 = arith.constant 0 : index
    %9 = vector.load %arg7[%c0_4, %c0_5] : memref<1x4xf32, #tpu.memory_space<vmem>>, vector<1x4xf32>
    %10 = vector.shape_cast %9 : vector<1x4xf32> to vector<1x1x4xf32>
    %11 = vector.broadcast %10 : vector<1x1x4xf32> to vector<16x16x4xf32>
    %12 = arith.addf %8, %11 : vector<16x16x4xf32>
    %cst = arith.constant 0.000000e+00 : f32
    %13 = vector.broadcast %cst : f32 to vector<16x16x4xf32>
    %14 = arith.maximumf %12, %13 : vector<16x16x4xf32>
    %c1_i32 = arith.constant 1 : i32
    %15 = arith.subi %1, %c1_i32 : i32
    %c0_i32 = arith.constant 0 : i32
    %16 = arith.maxsi %15, %c0_i32 : i32
    %c0_6 = arith.constant 0 : index
    %17 = arith.index_cast %16 : i32 to index
    %c0_7 = arith.constant 0 : index
    %c0_8 = arith.constant 0 : index
    %18 = vector.load %arg3[%c0_6, %17, %c0_7, %c0_8] : memref<1x16x16x4xf32, #tpu.memory_space<vmem>>, vector<1x1x16x4xf32>
    %19 = vector.shape_cast %18 : vector<1x1x16x4xf32> to vector<1x16x4xf32>
    %c0_9 = arith.constant 0 : index
    %c0_10 = arith.constant 0 : index
    %20 = vector.load %arg6[%c0_9, %c0_10] : memref<1x4xf32, #tpu.memory_space<vmem>>, vector<1x4xf32>
    %21 = vector.shape_cast %20 : vector<1x4xf32> to vector<1x1x4xf32>
    %22 = vector.broadcast %21 : vector<1x1x4xf32> to vector<1x16x4xf32>
    %23 = arith.mulf %19, %22 : vector<1x16x4xf32>
    %c0_11 = arith.constant 0 : index
    %c0_12 = arith.constant 0 : index
    %24 = vector.load %arg7[%c0_11, %c0_12] : memref<1x4xf32, #tpu.memory_space<vmem>>, vector<1x4xf32>
    %25 = vector.shape_cast %24 : vector<1x4xf32> to vector<1x1x4xf32>
    %26 = vector.broadcast %25 : vector<1x1x4xf32> to vector<1x16x4xf32>
    %27 = arith.addf %23, %26 : vector<1x16x4xf32>
    %cst_13 = arith.constant 0.000000e+00 : f32
    %28 = vector.broadcast %cst_13 : f32 to vector<1x16x4xf32>
    %29 = arith.maximumf %27, %28 : vector<1x16x4xf32>
    %c0_i32_14 = arith.constant 0 : i32
    %30 = arith.cmpi sgt, %arg1, %c0_i32_14 : i32
    %cst_15 = arith.constant 0.000000e+00 : f32
    %31 = vector.broadcast %cst_15 : f32 to vector<1x16x4xf32>
    %32 = arith.select %30, %29, %31 : vector<1x16x4xf32>
    %c16_i32_16 = arith.constant 16 : i32
    %33 = arith.addi %1, %c16_i32_16 : i32
    %c15_i32 = arith.constant 15 : i32
    %34 = arith.minsi %33, %c15_i32 : i32
    %c0_17 = arith.constant 0 : index
    %35 = arith.index_cast %34 : i32 to index
    %c0_18 = arith.constant 0 : index
    %c0_19 = arith.constant 0 : index
    %36 = vector.load %arg3[%c0_17, %35, %c0_18, %c0_19] : memref<1x16x16x4xf32, #tpu.memory_space<vmem>>, vector<1x1x16x4xf32>
    %37 = vector.shape_cast %36 : vector<1x1x16x4xf32> to vector<1x16x4xf32>
    %c0_20 = arith.constant 0 : index
    %c0_21 = arith.constant 0 : index
    %38 = vector.load %arg6[%c0_20, %c0_21] : memref<1x4xf32, #tpu.memory_space<vmem>>, vector<1x4xf32>
    %39 = vector.shape_cast %38 : vector<1x4xf32> to vector<1x1x4xf32>
    %40 = vector.broadcast %39 : vector<1x1x4xf32> to vector<1x16x4xf32>
    %41 = arith.mulf %37, %40 : vector<1x16x4xf32>
    %c0_22 = arith.constant 0 : index
    %c0_23 = arith.constant 0 : index
    %42 = vector.load %arg7[%c0_22, %c0_23] : memref<1x4xf32, #tpu.memory_space<vmem>>, vector<1x4xf32>
    %43 = vector.shape_cast %42 : vector<1x4xf32> to vector<1x1x4xf32>
    %44 = vector.broadcast %43 : vector<1x1x4xf32> to vector<1x16x4xf32>
    %45 = arith.addf %41, %44 : vector<1x16x4xf32>
    %cst_24 = arith.constant 0.000000e+00 : f32
    %46 = vector.broadcast %cst_24 : f32 to vector<1x16x4xf32>
    %47 = arith.maximumf %45, %46 : vector<1x16x4xf32>
    %c0_i32_25 = arith.constant 0 : i32
    %48 = arith.cmpi eq, %arg1, %c0_i32_25 : i32
    %cst_26 = arith.constant 0.000000e+00 : f32
    %49 = vector.broadcast %cst_26 : f32 to vector<1x16x4xf32>
    %50 = arith.select %48, %49, %47 : vector<1x16x4xf32>
    %51 = tpu.concatenate %32, %14, %50 in 0 : vector<1x16x4xf32>, vector<16x16x4xf32>, vector<1x16x4xf32> -> vector<18x16x4xf32>
    %cst_27 = arith.constant 0.000000e+00 : f32
    %52 = vector.broadcast %cst_27 : f32 to vector<18x1x4xf32>
    %53 = tpu.concatenate %52, %51, %52 in 1 : vector<18x1x4xf32>, vector<18x16x4xf32>, vector<18x1x4xf32> -> vector<18x18x4xf32>
    %54 = vector.extract_strided_slice %53 {offsets = [0, 0, 0], sizes = [16, 18, 4], strides = [1, 1, 1]} : vector<18x18x4xf32> to vector<16x18x4xf32>
    %55 = vector.extract_strided_slice %54 {offsets = [0, 0, 0], sizes = [16, 16, 4], strides = [1, 1, 1]} : vector<16x18x4xf32> to vector<16x16x4xf32>
    %56 = vector.extract_strided_slice %54 {offsets = [0, 1, 0], sizes = [16, 16, 4], strides = [1, 1, 1]} : vector<16x18x4xf32> to vector<16x16x4xf32>
    %57 = vector.extract_strided_slice %54 {offsets = [0, 2, 0], sizes = [16, 16, 4], strides = [1, 1, 1]} : vector<16x18x4xf32> to vector<16x16x4xf32>
    %58 = vector.extract_strided_slice %53 {offsets = [1, 0, 0], sizes = [16, 18, 4], strides = [1, 1, 1]} : vector<18x18x4xf32> to vector<16x18x4xf32>
    %59 = vector.extract_strided_slice %58 {offsets = [0, 0, 0], sizes = [16, 16, 4], strides = [1, 1, 1]} : vector<16x18x4xf32> to vector<16x16x4xf32>
    %60 = vector.extract_strided_slice %58 {offsets = [0, 1, 0], sizes = [16, 16, 4], strides = [1, 1, 1]} : vector<16x18x4xf32> to vector<16x16x4xf32>
    %61 = vector.extract_strided_slice %58 {offsets = [0, 2, 0], sizes = [16, 16, 4], strides = [1, 1, 1]} : vector<16x18x4xf32> to vector<16x16x4xf32>
    %62 = vector.extract_strided_slice %53 {offsets = [2, 0, 0], sizes = [16, 18, 4], strides = [1, 1, 1]} : vector<18x18x4xf32> to vector<16x18x4xf32>
    %63 = vector.extract_strided_slice %62 {offsets = [0, 0, 0], sizes = [16, 16, 4], strides = [1, 1, 1]} : vector<16x18x4xf32> to vector<16x16x4xf32>
    %64 = vector.extract_strided_slice %62 {offsets = [0, 1, 0], sizes = [16, 16, 4], strides = [1, 1, 1]} : vector<16x18x4xf32> to vector<16x16x4xf32>
    %65 = vector.extract_strided_slice %62 {offsets = [0, 2, 0], sizes = [16, 16, 4], strides = [1, 1, 1]} : vector<16x18x4xf32> to vector<16x16x4xf32>
    %66 = tpu.concatenate %55, %56, %57, %59, %60, %61, %63, %64, %65 in 2 : vector<16x16x4xf32>, vector<16x16x4xf32>, vector<16x16x4xf32>, vector<16x16x4xf32>, vector<16x16x4xf32>, vector<16x16x4xf32>, vector<16x16x4xf32>, vector<16x16x4xf32>, vector<16x16x4xf32> -> vector<16x16x36xf32>
    %67 = vector.shape_cast %66 : vector<16x16x36xf32> to vector<256x36xf32>
    %c0_28 = arith.constant 0 : index
    %c0_29 = arith.constant 0 : index
    %68 = vector.load %arg4[%c0_28, %c0_29] : memref<36x8xf32, #tpu.memory_space<vmem>>, vector<36x8xf32>
    %cst_30 = arith.constant dense<0.000000e+00> : vector<256x8xf32>
    %69 = tpu.matmul %67, %68, %cst_30 {dimension_numbers = #tpu.dot_dimension_numbers<[1], [0], [0], [1], [0, 0, 1, 1], [], []>} : vector<256x36xf32>, vector<36x8xf32>, vector<256x8xf32> -> vector<256x8xf32>
    %c0_31 = arith.constant 0 : index
    %c0_32 = arith.constant 0 : index
    %70 = vector.load %arg5[%c0_31, %c0_32] : memref<1x8xf32, #tpu.memory_space<vmem>>, vector<1x8xf32>
    %71 = vector.broadcast %70 : vector<1x8xf32> to vector<256x8xf32>
    %72 = arith.addf %69, %71 : vector<256x8xf32>
    %cst_33 = arith.constant dense<0.000000e+00> : vector<8xf32>
    %73 = vector.multi_reduction <add>, %72, %cst_33 [0] : vector<256x8xf32> to vector<8xf32>
    %74 = vector.shape_cast %73 : vector<8xf32> to vector<1x8xf32>
    %c0_34 = arith.constant 0 : index
    %c0_35 = arith.constant 0 : index
    %c0_36 = arith.constant 0 : index
    %75 = vector.load %arg9[%c0_34, %c0_35, %c0_36] : memref<1x1x8xf32, #tpu.memory_space<vmem>>, vector<1x1x8xf32>
    %76 = vector.shape_cast %75 : vector<1x1x8xf32> to vector<1x8xf32>
    %77 = vector.shape_cast %74 : vector<1x8xf32> to vector<1x1x8xf32>
    tpu.vector_store %arg9[%c0_34, %c0_35, %c0_36], %77 {strides = array<i32>} : memref<1x1x8xf32, #tpu.memory_space<vmem>>, vector<1x1x8xf32>,
    %78 = arith.mulf %72, %72 : vector<256x8xf32>
    %cst_37 = arith.constant dense<0.000000e+00> : vector<8xf32>
    %79 = vector.multi_reduction <add>, %78, %cst_37 [0] : vector<256x8xf32> to vector<8xf32>
    %80 = vector.shape_cast %79 : vector<8xf32> to vector<1x8xf32>
    %c0_38 = arith.constant 0 : index
    %c0_39 = arith.constant 0 : index
    %c0_40 = arith.constant 0 : index
    %81 = vector.load %arg10[%c0_38, %c0_39, %c0_40] : memref<1x1x8xf32, #tpu.memory_space<vmem>>, vector<1x1x8xf32>
    %82 = vector.shape_cast %81 : vector<1x1x8xf32> to vector<1x8xf32>
    %83 = vector.shape_cast %80 : vector<1x8xf32> to vector<1x1x8xf32>
    tpu.vector_store %arg10[%c0_38, %c0_39, %c0_40], %83 {strides = array<i32>} : memref<1x1x8xf32, #tpu.memory_space<vmem>>, vector<1x1x8xf32>,
    %84 = vector.shape_cast %72 : vector<256x8xf32> to vector<16x16x8xf32>
    %c0_41 = arith.constant 0 : index
    %c0_42 = arith.constant 0 : index
    %c0_43 = arith.constant 0 : index
    %c0_44 = arith.constant 0 : index
    %85 = vector.load %arg8[%c0_41, %c0_42, %c0_43, %c0_44] : memref<1x16x16x8xf32, #tpu.memory_space<vmem>>, vector<1x16x16x8xf32>
    %86 = vector.shape_cast %85 : vector<1x16x16x8xf32> to vector<16x16x8xf32>
    %87 = vector.shape_cast %84 : vector<16x16x8xf32> to vector<1x16x16x8xf32>
    tpu.vector_store %arg8[%c0_41, %c0_42, %c0_43, %c0_44], %87 {strides = array<i32>} : memref<1x16x16x8xf32, #tpu.memory_space<vmem>>, vector<1x16x16x8xf32>,
    return
  }
  func.func @transform_0(%arg0: i32, %arg1: i32, %arg2: i32) -> (i32, i32, i32, i32) {
    %c0_i32 = arith.constant 0 : i32
    %c0_i32_0 = arith.constant 0 : i32
    %c0_i32_1 = arith.constant 0 : i32
    %c0_i32_2 = arith.constant 0 : i32
    return %arg0, %c0_i32, %c0_i32_0, %c0_i32_1 : i32, i32, i32, i32
  }
  func.func @transform_1(%arg0: i32, %arg1: i32, %arg2: i32) -> (i32, i32) {
    %c0_i32 = arith.constant 0 : i32
    %c0_i32_0 = arith.constant 0 : i32
    return %c0_i32, %arg2 : i32, i32
  }
  func.func @transform_2(%arg0: i32, %arg1: i32, %arg2: i32) -> (i32, i32) {
    %c0_i32 = arith.constant 0 : i32
    %c0_i32_0 = arith.constant 0 : i32
    return %c0_i32, %arg2 : i32, i32
  }
  func.func @transform_3(%arg0: i32, %arg1: i32, %arg2: i32) -> (i32, i32) {
    %c0_i32 = arith.constant 0 : i32
    %c0_i32_0 = arith.constant 0 : i32
    %c0_i32_1 = arith.constant 0 : i32
    return %c0_i32, %c0_i32_0 : i32, i32
  }
  func.func @transform_4(%arg0: i32, %arg1: i32, %arg2: i32) -> (i32, i32) {
    %c0_i32 = arith.constant 0 : i32
    %c0_i32_0 = arith.constant 0 : i32
    %c0_i32_1 = arith.constant 0 : i32
    return %c0_i32, %c0_i32_0 : i32, i32
  }
  func.func @transform_5(%arg0: i32, %arg1: i32, %arg2: i32) -> (i32, i32, i32, i32) {
    %c0_i32 = arith.constant 0 : i32
    %c0_i32_0 = arith.constant 0 : i32
    return %arg0, %arg1, %c0_i32, %arg2 : i32, i32, i32, i32
  }
  func.func @transform_6(%arg0: i32, %arg1: i32, %arg2: i32) -> (i32, i32, i32) {
    %c1_i32 = arith.constant 1 : i32
    %0 = arith.muli %arg0, %c1_i32 : i32
    %1 = arith.addi %0, %arg1 : i32
    %c0_i32 = arith.constant 0 : i32
    %c0_i32_0 = arith.constant 0 : i32
    return %1, %c0_i32, %arg2 : i32, i32, i32
  }
  func.func @transform_7(%arg0: i32, %arg1: i32, %arg2: i32) -> (i32, i32, i32) {
    %c1_i32 = arith.constant 1 : i32
    %0 = arith.muli %arg0, %c1_i32 : i32
    %1 = arith.addi %0, %arg1 : i32
    %c0_i32 = arith.constant 0 : i32
    %c0_i32_0 = arith.constant 0 : i32
    return %1, %c0_i32, %arg2 : i32, i32, i32
  }
}

module attributes {stable_mosaic.version = 11 : i64} {
  func.func @_fused_conv_kernel(%arg0: i32, %arg1: i32, %arg2: i32, %arg3: memref<1x16x16x8xf32, #tpu.memory_space<vmem>>, %arg4: memref<72x8xf32, #tpu.memory_space<vmem>>, %arg5: memref<1x8xf32, #tpu.memory_space<vmem>>, %arg6: memref<1x8xf32, #tpu.memory_space<vmem>>, %arg7: memref<1x8xf32, #tpu.memory_space<vmem>>, %arg8: memref<1x16x16x8xf32, #tpu.memory_space<vmem>>, %arg9: memref<1x16x16x8xf32, #tpu.memory_space<vmem>>) attributes {dimension_semantics = [#tpu.dimension_semantics<parallel>, #tpu.dimension_semantics<parallel>, #tpu.dimension_semantics<arbitrary>], iteration_bounds = array<i64: 2, 1, 1>, scalar_prefetch = 0 : i64, scratch_operands = 0 : i64, tpu.core_type = #tpu.core_type<tc>, window_params = [{transform_indices = @transform_0, window_bounds = array<i64: 1, 16, 16, 8>}, {transform_indices = @transform_1, window_bounds = array<i64: 72, 8>}, {transform_indices = @transform_2, window_bounds = array<i64: 1, 8>}, {pipeline_mode = #tpu.pipeline_mode<synchronous>, transform_indices = @transform_3, window_bounds = array<i64: 1, 8>}, {pipeline_mode = #tpu.pipeline_mode<synchronous>, transform_indices = @transform_4, window_bounds = array<i64: 1, 8>}, {transform_indices = @transform_5, window_bounds = array<i64: 1, 16, 16, 8>}, {transform_indices = @transform_6, window_bounds = array<i64: 1, 16, 16, 8>}]} {
    %c16_i32 = arith.constant 16 : i32
    %0 = arith.muli %arg1, %c16_i32 : i32
    %1 = tpu.assume_multiple %0, 8 : i32
    %c0 = arith.constant 0 : index
    %2 = arith.index_cast %1 : i32 to index
    %c0_0 = arith.constant 0 : index
    %c0_1 = arith.constant 0 : index
    %3 = vector.load %arg3[%c0, %2, %c0_0, %c0_1] : memref<1x16x16x8xf32, #tpu.memory_space<vmem>>, vector<1x16x16x8xf32>
    %4 = vector.shape_cast %3 : vector<1x16x16x8xf32> to vector<16x16x8xf32>
    %c0_2 = arith.constant 0 : index
    %c0_3 = arith.constant 0 : index
    %5 = vector.load %arg6[%c0_2, %c0_3] : memref<1x8xf32, #tpu.memory_space<vmem>>, vector<1x8xf32>
    %6 = vector.shape_cast %5 : vector<1x8xf32> to vector<1x1x8xf32>
    %7 = vector.broadcast %6 : vector<1x1x8xf32> to vector<16x16x8xf32>
    %8 = arith.mulf %4, %7 : vector<16x16x8xf32>
    %c0_4 = arith.constant 0 : index
    %c0_5 = arith.constant 0 : index
    %9 = vector.load %arg7[%c0_4, %c0_5] : memref<1x8xf32, #tpu.memory_space<vmem>>, vector<1x8xf32>
    %10 = vector.shape_cast %9 : vector<1x8xf32> to vector<1x1x8xf32>
    %11 = vector.broadcast %10 : vector<1x1x8xf32> to vector<16x16x8xf32>
    %12 = arith.addf %8, %11 : vector<16x16x8xf32>
    %cst = arith.constant 0.000000e+00 : f32
    %13 = vector.broadcast %cst : f32 to vector<16x16x8xf32>
    %14 = arith.maximumf %12, %13 : vector<16x16x8xf32>
    %c1_i32 = arith.constant 1 : i32
    %15 = arith.subi %1, %c1_i32 : i32
    %c0_i32 = arith.constant 0 : i32
    %16 = arith.maxsi %15, %c0_i32 : i32
    %c0_6 = arith.constant 0 : index
    %17 = arith.index_cast %16 : i32 to index
    %c0_7 = arith.constant 0 : index
    %c0_8 = arith.constant 0 : index
    %18 = vector.load %arg3[%c0_6, %17, %c0_7, %c0_8] : memref<1x16x16x8xf32, #tpu.memory_space<vmem>>, vector<1x1x16x8xf32>
    %19 = vector.shape_cast %18 : vector<1x1x16x8xf32> to vector<1x16x8xf32>
    %c0_9 = arith.constant 0 : index
    %c0_10 = arith.constant 0 : index
    %20 = vector.load %arg6[%c0_9, %c0_10] : memref<1x8xf32, #tpu.memory_space<vmem>>, vector<1x8xf32>
    %21 = vector.shape_cast %20 : vector<1x8xf32> to vector<1x1x8xf32>
    %22 = vector.broadcast %21 : vector<1x1x8xf32> to vector<1x16x8xf32>
    %23 = arith.mulf %19, %22 : vector<1x16x8xf32>
    %c0_11 = arith.constant 0 : index
    %c0_12 = arith.constant 0 : index
    %24 = vector.load %arg7[%c0_11, %c0_12] : memref<1x8xf32, #tpu.memory_space<vmem>>, vector<1x8xf32>
    %25 = vector.shape_cast %24 : vector<1x8xf32> to vector<1x1x8xf32>
    %26 = vector.broadcast %25 : vector<1x1x8xf32> to vector<1x16x8xf32>
    %27 = arith.addf %23, %26 : vector<1x16x8xf32>
    %cst_13 = arith.constant 0.000000e+00 : f32
    %28 = vector.broadcast %cst_13 : f32 to vector<1x16x8xf32>
    %29 = arith.maximumf %27, %28 : vector<1x16x8xf32>
    %c0_i32_14 = arith.constant 0 : i32
    %30 = arith.cmpi sgt, %arg1, %c0_i32_14 : i32
    %cst_15 = arith.constant 0.000000e+00 : f32
    %31 = vector.broadcast %cst_15 : f32 to vector<1x16x8xf32>
    %32 = arith.select %30, %29, %31 : vector<1x16x8xf32>
    %c16_i32_16 = arith.constant 16 : i32
    %33 = arith.addi %1, %c16_i32_16 : i32
    %c15_i32 = arith.constant 15 : i32
    %34 = arith.minsi %33, %c15_i32 : i32
    %c0_17 = arith.constant 0 : index
    %35 = arith.index_cast %34 : i32 to index
    %c0_18 = arith.constant 0 : index
    %c0_19 = arith.constant 0 : index
    %36 = vector.load %arg3[%c0_17, %35, %c0_18, %c0_19] : memref<1x16x16x8xf32, #tpu.memory_space<vmem>>, vector<1x1x16x8xf32>
    %37 = vector.shape_cast %36 : vector<1x1x16x8xf32> to vector<1x16x8xf32>
    %c0_20 = arith.constant 0 : index
    %c0_21 = arith.constant 0 : index
    %38 = vector.load %arg6[%c0_20, %c0_21] : memref<1x8xf32, #tpu.memory_space<vmem>>, vector<1x8xf32>
    %39 = vector.shape_cast %38 : vector<1x8xf32> to vector<1x1x8xf32>
    %40 = vector.broadcast %39 : vector<1x1x8xf32> to vector<1x16x8xf32>
    %41 = arith.mulf %37, %40 : vector<1x16x8xf32>
    %c0_22 = arith.constant 0 : index
    %c0_23 = arith.constant 0 : index
    %42 = vector.load %arg7[%c0_22, %c0_23] : memref<1x8xf32, #tpu.memory_space<vmem>>, vector<1x8xf32>
    %43 = vector.shape_cast %42 : vector<1x8xf32> to vector<1x1x8xf32>
    %44 = vector.broadcast %43 : vector<1x1x8xf32> to vector<1x16x8xf32>
    %45 = arith.addf %41, %44 : vector<1x16x8xf32>
    %cst_24 = arith.constant 0.000000e+00 : f32
    %46 = vector.broadcast %cst_24 : f32 to vector<1x16x8xf32>
    %47 = arith.maximumf %45, %46 : vector<1x16x8xf32>
    %c0_i32_25 = arith.constant 0 : i32
    %48 = arith.cmpi eq, %arg1, %c0_i32_25 : i32
    %cst_26 = arith.constant 0.000000e+00 : f32
    %49 = vector.broadcast %cst_26 : f32 to vector<1x16x8xf32>
    %50 = arith.select %48, %49, %47 : vector<1x16x8xf32>
    %51 = tpu.concatenate %32, %14, %50 in 0 : vector<1x16x8xf32>, vector<16x16x8xf32>, vector<1x16x8xf32> -> vector<18x16x8xf32>
    %cst_27 = arith.constant 0.000000e+00 : f32
    %52 = vector.broadcast %cst_27 : f32 to vector<18x1x8xf32>
    %53 = tpu.concatenate %52, %51, %52 in 1 : vector<18x1x8xf32>, vector<18x16x8xf32>, vector<18x1x8xf32> -> vector<18x18x8xf32>
    %54 = vector.extract_strided_slice %53 {offsets = [0, 0, 0], sizes = [16, 18, 8], strides = [1, 1, 1]} : vector<18x18x8xf32> to vector<16x18x8xf32>
    %55 = vector.extract_strided_slice %54 {offsets = [0, 0, 0], sizes = [16, 16, 8], strides = [1, 1, 1]} : vector<16x18x8xf32> to vector<16x16x8xf32>
    %56 = vector.extract_strided_slice %54 {offsets = [0, 1, 0], sizes = [16, 16, 8], strides = [1, 1, 1]} : vector<16x18x8xf32> to vector<16x16x8xf32>
    %57 = vector.extract_strided_slice %54 {offsets = [0, 2, 0], sizes = [16, 16, 8], strides = [1, 1, 1]} : vector<16x18x8xf32> to vector<16x16x8xf32>
    %58 = vector.extract_strided_slice %53 {offsets = [1, 0, 0], sizes = [16, 18, 8], strides = [1, 1, 1]} : vector<18x18x8xf32> to vector<16x18x8xf32>
    %59 = vector.extract_strided_slice %58 {offsets = [0, 0, 0], sizes = [16, 16, 8], strides = [1, 1, 1]} : vector<16x18x8xf32> to vector<16x16x8xf32>
    %60 = vector.extract_strided_slice %58 {offsets = [0, 1, 0], sizes = [16, 16, 8], strides = [1, 1, 1]} : vector<16x18x8xf32> to vector<16x16x8xf32>
    %61 = vector.extract_strided_slice %58 {offsets = [0, 2, 0], sizes = [16, 16, 8], strides = [1, 1, 1]} : vector<16x18x8xf32> to vector<16x16x8xf32>
    %62 = vector.extract_strided_slice %53 {offsets = [2, 0, 0], sizes = [16, 18, 8], strides = [1, 1, 1]} : vector<18x18x8xf32> to vector<16x18x8xf32>
    %63 = vector.extract_strided_slice %62 {offsets = [0, 0, 0], sizes = [16, 16, 8], strides = [1, 1, 1]} : vector<16x18x8xf32> to vector<16x16x8xf32>
    %64 = vector.extract_strided_slice %62 {offsets = [0, 1, 0], sizes = [16, 16, 8], strides = [1, 1, 1]} : vector<16x18x8xf32> to vector<16x16x8xf32>
    %65 = vector.extract_strided_slice %62 {offsets = [0, 2, 0], sizes = [16, 16, 8], strides = [1, 1, 1]} : vector<16x18x8xf32> to vector<16x16x8xf32>
    %66 = tpu.concatenate %55, %56, %57, %59, %60, %61, %63, %64, %65 in 2 : vector<16x16x8xf32>, vector<16x16x8xf32>, vector<16x16x8xf32>, vector<16x16x8xf32>, vector<16x16x8xf32>, vector<16x16x8xf32>, vector<16x16x8xf32>, vector<16x16x8xf32>, vector<16x16x8xf32> -> vector<16x16x72xf32>
    %67 = vector.shape_cast %66 : vector<16x16x72xf32> to vector<256x72xf32>
    %c0_28 = arith.constant 0 : index
    %c0_29 = arith.constant 0 : index
    %68 = vector.load %arg4[%c0_28, %c0_29] : memref<72x8xf32, #tpu.memory_space<vmem>>, vector<72x8xf32>
    %cst_30 = arith.constant dense<0.000000e+00> : vector<256x8xf32>
    %69 = tpu.matmul %67, %68, %cst_30 {dimension_numbers = #tpu.dot_dimension_numbers<[1], [0], [0], [1], [0, 0, 1, 1], [], []>} : vector<256x72xf32>, vector<72x8xf32>, vector<256x8xf32> -> vector<256x8xf32>
    %c0_31 = arith.constant 0 : index
    %c0_32 = arith.constant 0 : index
    %70 = vector.load %arg5[%c0_31, %c0_32] : memref<1x8xf32, #tpu.memory_space<vmem>>, vector<1x8xf32>
    %71 = vector.broadcast %70 : vector<1x8xf32> to vector<256x8xf32>
    %72 = arith.addf %69, %71 : vector<256x8xf32>
    %73 = vector.shape_cast %72 : vector<256x8xf32> to vector<16x16x8xf32>
    %c0_33 = arith.constant 0 : index
    %c0_34 = arith.constant 0 : index
    %c0_35 = arith.constant 0 : index
    %c0_36 = arith.constant 0 : index
    %74 = vector.load %arg8[%c0_33, %c0_34, %c0_35, %c0_36] : memref<1x16x16x8xf32, #tpu.memory_space<vmem>>, vector<1x16x16x8xf32>
    %75 = vector.shape_cast %74 : vector<1x16x16x8xf32> to vector<16x16x8xf32>
    %76 = arith.addf %73, %75 : vector<16x16x8xf32>
    %c0_37 = arith.constant 0 : index
    %c0_38 = arith.constant 0 : index
    %c0_39 = arith.constant 0 : index
    %c0_40 = arith.constant 0 : index
    %77 = vector.load %arg9[%c0_37, %c0_38, %c0_39, %c0_40] : memref<1x16x16x8xf32, #tpu.memory_space<vmem>>, vector<1x16x16x8xf32>
    %78 = vector.shape_cast %77 : vector<1x16x16x8xf32> to vector<16x16x8xf32>
    %79 = vector.shape_cast %76 : vector<16x16x8xf32> to vector<1x16x16x8xf32>
    tpu.vector_store %arg9[%c0_37, %c0_38, %c0_39, %c0_40], %79 {strides = array<i32>} : memref<1x16x16x8xf32, #tpu.memory_space<vmem>>, vector<1x16x16x8xf32>,
    return
  }
  func.func @transform_0(%arg0: i32, %arg1: i32, %arg2: i32) -> (i32, i32, i32, i32) {
    %c0_i32 = arith.constant 0 : i32
    %c0_i32_0 = arith.constant 0 : i32
    %c0_i32_1 = arith.constant 0 : i32
    %c0_i32_2 = arith.constant 0 : i32
    return %arg0, %c0_i32, %c0_i32_0, %c0_i32_1 : i32, i32, i32, i32
  }
  func.func @transform_1(%arg0: i32, %arg1: i32, %arg2: i32) -> (i32, i32) {
    %c0_i32 = arith.constant 0 : i32
    %c0_i32_0 = arith.constant 0 : i32
    return %c0_i32, %arg2 : i32, i32
  }
  func.func @transform_2(%arg0: i32, %arg1: i32, %arg2: i32) -> (i32, i32) {
    %c0_i32 = arith.constant 0 : i32
    %c0_i32_0 = arith.constant 0 : i32
    return %c0_i32, %arg2 : i32, i32
  }
  func.func @transform_3(%arg0: i32, %arg1: i32, %arg2: i32) -> (i32, i32) {
    %c0_i32 = arith.constant 0 : i32
    %c0_i32_0 = arith.constant 0 : i32
    %c0_i32_1 = arith.constant 0 : i32
    return %c0_i32, %c0_i32_0 : i32, i32
  }
  func.func @transform_4(%arg0: i32, %arg1: i32, %arg2: i32) -> (i32, i32) {
    %c0_i32 = arith.constant 0 : i32
    %c0_i32_0 = arith.constant 0 : i32
    %c0_i32_1 = arith.constant 0 : i32
    return %c0_i32, %c0_i32_0 : i32, i32
  }
  func.func @transform_5(%arg0: i32, %arg1: i32, %arg2: i32) -> (i32, i32, i32, i32) {
    %c0_i32 = arith.constant 0 : i32
    %c0_i32_0 = arith.constant 0 : i32
    return %arg0, %arg1, %c0_i32, %arg2 : i32, i32, i32, i32
  }
  func.func @transform_6(%arg0: i32, %arg1: i32, %arg2: i32) -> (i32, i32, i32, i32) {
    %c0_i32 = arith.constant 0 : i32
    %c0_i32_0 = arith.constant 0 : i32
    return %arg0, %arg1, %c0_i32, %arg2 : i32, i32, i32, i32
  }
}

</mosaic_0001>

<llo_original>
// kernel: residual_block_forward.3
$region0: #{residual_block_forward.3}
  #allocation0 [shape = 'u32[]', space=smem, size = 0x4, offset = 0x4, fixed_abs, tag = 'smem constant byte address 0x4 - core index']
  #allocation1 [shape = 'u32[144,128]{1,0:T(1,128)}', space=vmem, size = 0x12000, scoped, tag = 'internal scratch']
  %s0 = inlined_call_operand.vmem [shape: f32[2,16,16,4], index: 0, kind: input, shape index: {}]
  %s1 = inlined_call_operand.vmem [shape: f32[4,8], index: 1, kind: input, shape index: {}]
  %s2 = inlined_call_operand.vmem [shape: f32[1,8], index: 2, kind: input, shape index: {}]
  %s3 = inlined_call_operand.vmem [shape: f32[2,16,16,8], index: 3, kind: output, shape index: {0}]
  %s4 = inlined_call_operand.vmem [shape: f32[2,1,4], index: 4, kind: output, shape index: {1}]
  %s5 = inlined_call_operand.vmem [shape: f32[2,1,4], index: 5, kind: output, shape index: {2}]
  %6 = xla_tuple %s3, %s4, %s5
  %s7 = sld [smem:[#allocation0]]
  $region61: #{residual_block_forward.3} parent=0
    _
  %s9 = ssub.s32 1, %s7
  %s10 = scalar_select 0, %s9, %s7
  loop: start=0, step=1, limit=4
  $region2: #{residual_block_forward.3} parent=0 // loop_pre_header
    _
  $region3: #{residual_block_forward.3} parent=0 // loop_header
    %s12 = sphi 0, %s16
    %p13 = scmp.ge.s32.totalorder %s12, 4
    %s19 = sphi 0, %s38
    %s20 = sphi 0, %s34
    %s21 = sphi 0, %s30
    %s22 = sphi 0, %s19
    %s23 = sphi 0, %s20
    %s24 = sphi 0, %s21
    %s25 = sphi 0, %s22
    %s26 = sphi 0, %s23
    %s27 = sphi 0, %s24
    %s41 = sphi 0, %s43
    %s44 = sphi 0, %s41
    %s45 = sphi 0, %s44
    %s61 = sphi 0, %s45
    %s67 = sphi 0, %s69
    %s70 = sphi 0, %s67
    %s71 = sphi 0, %s70
    %s87 = sphi 0, %s71
    %s93 = sphi 0, %s95
    %s96 = sphi 0, %s93
    %s97 = sphi 0, %s96
    %s113 = sphi 0, %s97
    %s123 = sphi 0, %s125
    %s126 = sphi 0, %s123
    %s127 = sphi 0, %s126
    %s143 = sphi 0, %s127
    %s151 = sphi 0, %s153
    %s154 = sphi 0, %s151
    %s155 = sphi 0, %s154
    %s171 = sphi 0, %s155
    %s179 = sphi 0, %s181
    %s182 = sphi 0, %s179
    %s183 = sphi 0, %s182
    %s199 = sphi 0, %s183
  $region4: #{residual_block_forward.3} parent=0 // loop_header_branch
    %15 = sbr.rel (%p13) target = $region8
  $region5: #{residual_block_forward.3} parent=0 // loop_body
    %s17 = ssub.s32 %s12, 1
    %s18 = ssub.s32 %s12, 2
    %s28 = sadd.s32 1, %s21
    %p29 = scmp.ge.s32.totalorder %s28, 1
    %s30 = scalar_select %p29, 0, %s28
    %s31 = sadd.s32 1, %s20
    %s32 = scalar_select %p29, %s31, %s20
    %p33 = scmp.ge.s32.totalorder %s32, 1
    %s34 = scalar_select %p33, 0, %s32
    %s35 = sadd.s32 1, %s19
    %s36 = scalar_select %p33, %s35, %s19
    %p37 = scmp.ge.s32.totalorder %s36, 2
    %s38 = scalar_select %p37, 0, %s36
    %s39 = ssub.s32 %s19, %s38
    %p40 = scmp.eq.s32.totalorder %s39, 0
    %s42 = sadd.s32 %s41, 1
    %s43 = scalar_select %p40, %s41, %s42
    %p46 = pneg %p40
    %p47 = scmp.eq.s32.totalorder %s12, 1
    %p48 = por %p46, %p47
    %p49 = scmp.ne.s32.totalorder %s41, %s44
    %p50 = scmp.eq.s32.totalorder %s12, 0
    %p51 = por %p49, %p50
    %p52 = scmp.ne.s32.totalorder %s41, %s44
    %p53 = scmp.eq.s32.totalorder %s17, 1
    %p54 = por %p52, %p53
    %p55 = scmp.ne.s32.totalorder %s44, %s45
    %p56 = scmp.eq.s32.totalorder %s17, 0
    %p57 = por %p55, %p56
    %p58 = scmp.ne.s32.totalorder %s44, %s45
    %p59 = scmp.eq.s32.totalorder %s18, 1
    %p60 = por %p58, %p59
    %p62 = scmp.ne.s32.totalorder %s45, %s61
    %p63 = scmp.eq.s32.totalorder %s18, 0
    %p64 = por %p62, %p63
    %s65 = ssub.s32 %s21, %s30
    %p66 = scmp.eq.s32.totalorder %s65, 0
    %s68 = sadd.s32 %s67, 1
    %s69 = scalar_select %p66, %s67, %s68
    %p72 = pneg %p66
    %p73 = scmp.eq.s32.totalorder %s12, 1
    %p74 = por %p72, %p73
    %p75 = scmp.ne.s32.totalorder %s67, %s70
    %p76 = scmp.eq.s32.totalorder %s12, 0
    %p77 = por %p75, %p76
    %p78 = scmp.ne.s32.totalorder %s67, %s70
    %p79 = scmp.eq.s32.totalorder %s17, 1
    %p80 = por %p78, %p79
    %p81 = scmp.ne.s32.totalorder %s70, %s71
    %p82 = scmp.eq.s32.totalorder %s17, 0
    %p83 = por %p81, %p82
    %p84 = scmp.ne.s32.totalorder %s70, %s71
    %p85 = scmp.eq.s32.totalorder %s18, 1
    %p86 = por %p84, %p85
    %p88 = scmp.ne.s32.totalorder %s71, %s87
    %p89 = scmp.eq.s32.totalorder %s18, 0
    %p90 = por %p88, %p89
    %s91 = ssub.s32 %s21, %s30
    %p92 = scmp.eq.s32.totalorder %s91, 0
    %s94 = sadd.s32 %s93, 1
    %s95 = scalar_select %p92, %s93, %s94
    %p98 = pneg %p92
    %p99 = scmp.eq.s32.totalorder %s12, 1
    %p100 = por %p98, %p99
    %p101 = scmp.ne.s32.totalorder %s93, %s96
    %p102 = scmp.eq.s32.totalorder %s12, 0
    %p103 = por %p101, %p102
    %p104 = scmp.ne.s32.totalorder %s93, %s96
    %p105 = scmp.eq.s32.totalorder %s17, 1
    %p106 = por %p104, %p105
    %p107 = scmp.ne.s32.totalorder %s96, %s97
    %p108 = scmp.eq.s32.totalorder %s17, 0
    %p109 = por %p107, %p108
    %p110 = scmp.ne.s32.totalorder %s96, %s97
    %p111 = scmp.eq.s32.totalorder %s18, 1
    %p112 = por %p110, %p111
    %p114 = scmp.ne.s32.totalorder %s97, %s113
    %p115 = scmp.eq.s32.totalorder %s18, 0
    %p116 = por %p114, %p115
    %s117 = ssub.s32 %s19, %s38
    %s118 = ssub.s32 %s20, %s34
    %s119 = sor.u32 %s117, %s118
    %s120 = ssub.s32 %s21, %s30
    %s121 = sor.u32 %s119, %s120
    %p122 = scmp.eq.s32.totalorder %s121, 0
    %s124 = sadd.s32 %s123, 1
    %s125 = scalar_select %p122, %s123, %s124
    %p128 = pneg %p122
    %p129 = scmp.eq.s32.totalorder %s12, 1
    %p130 = por %p128, %p129
    %p131 = scmp.ne.s32.totalorder %s123, %s126
    %p132 = scmp.eq.s32.totalorder %s12, 0
    %p133 = por %p131, %p132
    %p134 = scmp.ne.s32.totalorder %s123, %s126
    %p135 = scmp.eq.s32.totalorder %s17, 1
    %p136 = por %p134, %p135
    %p137 = scmp.ne.s32.totalorder %s126, %s127
    %p138 = scmp.eq.s32.totalorder %s17, 0
    %p139 = por %p137, %p138
    %p140 = scmp.ne.s32.totalorder %s126, %s127
    %p141 = scmp.eq.s32.totalorder %s18, 1
    %p142 = por %p140, %p141
    %p144 = scmp.ne.s32.totalorder %s127, %s143
    %p145 = scmp.eq.s32.totalorder %s18, 0
    %p146 = por %p144, %p145
    %s147 = sadd.s32 %s19, %s20
    %s148 = sadd.s32 %s38, %s34
    %s149 = ssub.s32 %s147, %s148
    %p150 = scmp.eq.s32.totalorder %s149, 0
    %s152 = sadd.s32 %s151, 1
    %s153 = scalar_select %p150, %s151, %s152
    %p156 = pneg %p150
    %p157 = scmp.eq.s32.totalorder %s12, 1
    %p158 = por %p156, %p157
    %p159 = scmp.ne.s32.totalorder %s151, %s154
    %p160 = scmp.eq.s32.totalorder %s12, 0
    %p161 = por %p159, %p160
    %p162 = scmp.ne.s32.totalorder %s151, %s154
    %p163 = scmp.eq.s32.totalorder %s17, 1
    %p164 = por %p162, %p163
    %p165 = scmp.ne.s32.totalorder %s154, %s155
    %p166 = scmp.eq.s32.totalorder %s17, 0
    %p167 = por %p165, %p166
    %p168 = scmp.ne.s32.totalorder %s154, %s155
    %p169 = scmp.eq.s32.totalorder %s18, 1
    %p170 = por %p168, %p169
    %p172 = scmp.ne.s32.totalorder %s155, %s171
    %p173 = scmp.eq.s32.totalorder %s18, 0
    %p174 = por %p172, %p173
    %s175 = sadd.s32 %s19, %s20
    %s176 = sadd.s32 %s38, %s34
    %s177 = ssub.s32 %s175, %s176
    %p178 = scmp.eq.s32.totalorder %s177, 0
    %s180 = sadd.s32 %s179, 1
    %s181 = scalar_select %p178, %s179, %s180
    %p184 = pneg %p178
    %p185 = scmp.eq.s32.totalorder %s12, 1
    %p186 = por %p184, %p185
    %p187 = scmp.ne.s32.totalorder %s179, %s182
    %p188 = scmp.eq.s32.totalorder %s12, 0
    %p189 = por %p187, %p188
    %p190 = scmp.ne.s32.totalorder %s179, %s182
    %p191 = scmp.eq.s32.totalorder %s17, 1
    %p192 = por %p190, %p191
    %p193 = scmp.ne.s32.totalorder %s182, %s183
    %p194 = scmp.eq.s32.totalorder %s17, 0
    %p195 = por %p193, %p194
    %p196 = scmp.ne.s32.totalorder %s182, %s183
    %p197 = scmp.eq.s32.totalorder %s18, 1
    %p198 = por %p196, %p197
    %p200 = scmp.ne.s32.totalorder %s183, %s199
    %p201 = scmp.eq.s32.totalorder %s18, 0
    %p202 = por %p200, %p201
    %p203 = scmp.le.s32.totalorder 1, %s12
    %p204 = scmp.lt.s32.totalorder %s12, 3
    %p205 = pnand %p203, %p204
    %p206 = pneg %p205
    // Predicated region
    $region9: #{residual_block_forward.3} parent=5 // pred_check
      _
    $region10: #{residual_block_forward.3} parent=5 // pred_check_branch
      %208 = sbr.rel (%p205) target = $region12
    $region11: #{residual_block_forward.3} parent=5 // pred_region
      %s209 = ssub.s32 %s12, 1
      // Predicated region
      $region13: #{residual_block_forward.3} parent=11 // pred_check
        %p210 = pneg %p83
      $region14: #{residual_block_forward.3} parent=11 // pred_check_branch
        %212 = sbr.rel (%p210) target = $region16
      $region15: #{residual_block_forward.3} parent=11 // pred_region
        %p213 = scmp.lt.s32.totalorder %s24, 0
        %s214 = scalar_select %p213, %s24, 0
        %s215 = smul.addr %s214, 4
        %s216 = scalar_lea.vmem %s1, %s215
      $region16: #{residual_block_forward.3} parent=11 // pred_fallthru
        _
      // Predicated region
      $region17: #{residual_block_forward.3} parent=11 // pred_check
        %p217 = pneg %p109
      $region18: #{residual_block_forward.3} parent=11 // pred_check_branch
        %219 = sbr.rel (%p217) target = $region20
      $region19: #{residual_block_forward.3} parent=11 // pred_region
        %p220 = scmp.lt.s32.totalorder %s24, 0
        %s221 = scalar_select %p220, %s24, 0
        %s222 = scalar_lea.vmem %s2, %s221
      $region20: #{residual_block_forward.3} parent=11 // pred_fallthru
        _
    $region12: #{residual_block_forward.3} parent=5 // pred_fallthru
      _
    %p223 = scmp.lt.s32.totalorder %s12, 2
    // Predicated region
    $region21: #{residual_block_forward.3} parent=5 // pred_check
      %p224 = pneg %p223
    $region22: #{residual_block_forward.3} parent=5 // pred_check_branch
      %226 = sbr.rel (%p224) target = $region24
    $region23: #{residual_block_forward.3} parent=5 // pred_region
      // Predicated region
      $region25: #{residual_block_forward.3} parent=23 // pred_check
        %p227 = pneg %p51
      $region26: #{residual_block_forward.3} parent=23 // pred_check_branch
        %229 = sbr.rel (%p227) target = $region28
      $region27: #{residual_block_forward.3} parent=23 // pred_region
        %p230 = scmp.lt.s32.totalorder %s19, 1
        %s231 = scalar_select %p230, %s19, 1
        %s232 = smul.addr %s231, 32
        %s233 = smul.addr %s232, 8
        %s234 = scalar_lea.vmem %s0, %s233
      $region28: #{residual_block_forward.3} parent=23 // pred_fallthru
        _
    $region24: #{residual_block_forward.3} parent=5 // pred_fallthru
      _
    %p235 = scmp.le.s32.totalorder 1, %s12
    %p236 = scmp.lt.s32.totalorder %s12, 3
    %p237 = pnand %p235, %p236
    %p238 = pneg %p237
    // Predicated region
    $region29: #{residual_block_forward.3} parent=5 // pred_check
      _
    $region30: #{residual_block_forward.3} parent=5 // pred_check_branch
      %240 = sbr.rel (%p237) target = $region32
    $region31: #{residual_block_forward.3} parent=5 // pred_region
      %s241 = ssub.s32 %s12, 1
      %p242 = scmp.lt.s32.totalorder %s22, 1
      %s243 = scalar_select %p242, %s22, 1
      %s244 = smul.addr %s243, 32
      %s245 = smul.addr %s244, 8
      %s246 = scalar_lea.vmem %s0, %s245
      %p247 = pneg %p57
      %p248 = pneg %p54
      %p249 = scmp.lt.s32.totalorder %s24, 0
      %s250 = scalar_select %p249, %s24, 0
      %s251 = smul.addr %s250, 4
      %s252 = scalar_lea.vmem %s1, %s251
      %p253 = pneg %p83
      %p254 = pneg %p80
      %p255 = scmp.lt.s32.totalorder %s24, 0
      %s256 = scalar_select %p255, %s24, 0
      %s257 = scalar_lea.vmem %s2, %s256
      %p258 = pneg %p109
      %p259 = pneg %p106
      %p260 = pneg %p139
      %p261 = pneg %p136
      %s262 = smul.u32 16, %s23
      %p263 = scmp.lt.s32.totalorder %s22, 1
      %s264 = scalar_select %p263, %s22, 1
      %p265 = scmp.lt.s32.totalorder %s262, 15
      %s266 = scalar_select %p265, %s262, 15
      %p267 = scmp.lt.s32.totalorder %s24, 0
      %s268 = scalar_select %p267, %s24, 0
      %s269 = smul.addr %s266, 2
      %s270 = sadd.s32 %s268, %s269
      %s271 = smul.addr %s264, 32
      %s272 = sadd.s32 %s270, %s271
      %s273 = smul.addr %s272, 8
      %s274 = scalar_lea.vmem %s3, %s273
      %p275 = pneg %p167
      %p276 = pneg %p164
      %s277 = sadd.s32 %s22, %s23
      %p278 = scmp.lt.s32.totalorder %s277, 1
      %s279 = scalar_select %p278, %s277, 1
      %s280 = scalar_lea.vmem %s4, %s279
      %p281 = pneg %p195
      %p282 = pneg %p192
      %s283 = sadd.s32 %s22, %s23
      %p284 = scmp.lt.s32.totalorder %s283, 1
      %s285 = scalar_select %p284, %s283, 1
      %s286 = scalar_lea.vmem %s5, %s285
      %p287 = scmp.lt.s32.totalorder %s22, 1
      %s288 = scalar_select %p287, %s22, 1
      %s289 = smul.addr %s288, 32
      %s290 = smul.addr %s289, 8
      %s291 = scalar_lea.vmem %s0, %s290
      %p292 = scmp.lt.s32.totalorder %s24, 0
      %s293 = scalar_select %p292, %s24, 0
      %s294 = smul.addr %s293, 4
      %s295 = scalar_lea.vmem %s1, %s294
      %p296 = scmp.lt.s32.totalorder %s24, 0
      %s297 = scalar_select %p296, %s24, 0
      %s298 = scalar_lea.vmem %s2, %s297
      %s299 = smul.u32 16, %s23
      %p300 = scmp.lt.s32.totalorder %s22, 1
      %s301 = scalar_select %p300, %s22, 1
      %p302 = scmp.lt.s32.totalorder %s299, 15
      %s303 = scalar_select %p302, %s299, 15
      %p304 = scmp.lt.s32.totalorder %s24, 0
      %s305 = scalar_select %p304, %s24, 0
      %s306 = smul.addr %s303, 2
      %s307 = sadd.s32 %s305, %s306
      %s308 = smul.addr %s301, 32
      %s309 = sadd.s32 %s307, %s308
      %s310 = smul.addr %s309, 8
      %s311 = scalar_lea.vmem %s3, %s310
      %s312 = smul.u32 16, %s23
      %s313 = sadd.s32 %s22, %s23
      %p314 = scmp.lt.s32.totalorder %s313, 1
      %s315 = scalar_select %p314, %s313, 1
      %s316 = scalar_lea.vmem %s4, %s315
      %s317 = sadd.s32 %s22, %s23
      %s318 = sadd.s32 %s22, %s23
      %p319 = scmp.lt.s32.totalorder %s318, 1
      %s320 = scalar_select %p319, %s318, 1
      %s321 = scalar_lea.vmem %s5, %s320
      %s322 = sadd.s32 %s22, %s23
      %s323 = smul.u32 %s23, 16
      %s324 = smul.u32 %s323, 16
      %s325 = scalar_lea.vmem %s291, %s324
      %v326 = vld [vmem:[%s325] sm:$0xff]
      %v327 = vld [vmem:[%s325 + $0x8] sm:$0xff]
      %v328 = vld [vmem:[%s325 + $0x10] sm:$0xff]
      %v329 = vld [vmem:[%s325 + $0x18] sm:$0xff]
      %v330 = vld [vmem:[%s325 + $0x20] sm:$0xff]
      %v331 = vld [vmem:[%s325 + $0x28] sm:$0xff]
      %v332 = vld [vmem:[%s325 + $0x30] sm:$0xff]
      %v333 = vld [vmem:[%s325 + $0x38] sm:$0xff]
      %v334 = vld [vmem:[%s325 + $0x40] sm:$0xff]
      %v335 = vld [vmem:[%s325 + $0x48] sm:$0xff]
      %v336 = vld [vmem:[%s325 + $0x50] sm:$0xff]
      %v337 = vld [vmem:[%s325 + $0x58] sm:$0xff]
      %v338 = vld [vmem:[%s325 + $0x60] sm:$0xff]
      %v339 = vld [vmem:[%s325 + $0x68] sm:$0xff]
      %v340 = vld [vmem:[%s325 + $0x70] sm:$0xff]
      %v341 = vld [vmem:[%s325 + $0x78] sm:$0xff]
      %v342 = vld [vmem:[%s325 + $0x80] sm:$0xff]
      %v343 = vld [vmem:[%s325 + $0x88] sm:$0xff]
      %v344 = vld [vmem:[%s325 + $0x90] sm:$0xff]
      %v345 = vld [vmem:[%s325 + $0x98] sm:$0xff]
      %v346 = vld [vmem:[%s325 + $0xa0] sm:$0xff]
      %v347 = vld [vmem:[%s325 + $0xa8] sm:$0xff]
      %v348 = vld [vmem:[%s325 + $0xb0] sm:$0xff]
      %v349 = vld [vmem:[%s325 + $0xb8] sm:$0xff]
      %v350 = vld [vmem:[%s325 + $0xc0] sm:$0xff]
      %v351 = vld [vmem:[%s325 + $0xc8] sm:$0xff]
      %v352 = vld [vmem:[%s325 + $0xd0] sm:$0xff]
      %v353 = vld [vmem:[%s325 + $0xd8] sm:$0xff]
      %v354 = vld [vmem:[%s325 + $0xe0] sm:$0xff]
      %v355 = vld [vmem:[%s325 + $0xe8] sm:$0xff]
      %v356 = vld [vmem:[%s325 + $0xf0] sm:$0xff]
      %v357 = vld [vmem:[%s325 + $0xf8] sm:$0xff]
      %vm358 = vcmask 31744
      %v359 = vsel %vm358, %v326, 0.0
      %v360 = vsel %vm358, %v327, 0.0
      %v361 = vadd.f32 %v359, %v360
      %v362 = vsel %vm358, %v328, 0.0
      %v363 = vadd.f32 %v361, %v362
      %v364 = vsel %vm358, %v329, 0.0
      %v365 = vadd.f32 %v363, %v364
      %v366 = vsel %vm358, %v330, 0.0
      %v367 = vadd.f32 %v365, %v366
      %v368 = vsel %vm358, %v331, 0.0
      %v369 = vadd.f32 %v367, %v368
      %v370 = vsel %vm358, %v332, 0.0
      %v371 = vadd.f32 %v369, %v370
      %v372 = vsel %vm358, %v333, 0.0
      %v373 = vadd.f32 %v371, %v372
      %v374 = vsel %vm358, %v334, 0.0
      %v375 = vadd.f32 %v373, %v374
      %v376 = vsel %vm358, %v335, 0.0
      %v377 = vadd.f32 %v375, %v376
      %v378 = vsel %vm358, %v336, 0.0
      %v379 = vadd.f32 %v377, %v378
      %v380 = vsel %vm358, %v337, 0.0
      %v381 = vadd.f32 %v379, %v380
      %v382 = vsel %vm358, %v338, 0.0
      %v383 = vadd.f32 %v381, %v382
      %v384 = vsel %vm358, %v339, 0.0
      %v385 = vadd.f32 %v383, %v384
      %v386 = vsel %vm358, %v340, 0.0
      %v387 = vadd.f32 %v385, %v386
      %v388 = vsel %vm358, %v341, 0.0
      %v389 = vadd.f32 %v387, %v388
      %v390 = vsel %vm358, %v342, 0.0
      %v391 = vadd.f32 %v389, %v390
      %v392 = vsel %vm358, %v343, 0.0
      %v393 = vadd.f32 %v391, %v392
      %v394 = vsel %vm358, %v344, 0.0
      %v395 = vadd.f32 %v393, %v394
      %v396 = vsel %vm358, %v345, 0.0
      %v397 = vadd.f32 %v395, %v396
      %v398 = vsel %vm358, %v346, 0.0
      %v399 = vadd.f32 %v397, %v398
      %v400 = vsel %vm358, %v347, 0.0
      %v401 = vadd.f32 %v399, %v400
      %v402 = vsel %vm358, %v348, 0.0
      %v403 = vadd.f32 %v401, %v402
      %v404 = vsel %vm358, %v349, 0.0
      %v405 = vadd.f32 %v403, %v404
      %v406 = vsel %vm358, %v350, 0.0
      %v407 = vadd.f32 %v405, %v406
      %v408 = vsel %vm358, %v351, 0.0
      %v409 = vadd.f32 %v407, %v408
      %v410 = vsel %vm358, %v352, 0.0
      %v411 = vadd.f32 %v409, %v410
      %v412 = vsel %vm358, %v353, 0.0
      %v413 = vadd.f32 %v411, %v412
      %v414 = vsel %vm358, %v354, 0.0
      %v415 = vadd.f32 %v413, %v414
      %v416 = vsel %vm358, %v355, 0.0
      %v417 = vadd.f32 %v415, %v416
      %v418 = vsel %vm358, %v356, 0.0
      %v419 = vadd.f32 %v417, %v418
      %v420 = vsel %vm358, %v357, 0.0
      %v421 = vadd.f32 %v419, %v420
      %v422 = vrot.slane %v421, 4
      %v423 = vadd.f32 %v421, %v422
      %v424 = vrot.slane %v423, 2
      %v425 = vadd.f32 %v423, %v424
      %v426 = vrot.slane %v425, 1
      %v427 = vadd.f32 %v425, %v426
      %vm428 = vcmask 24576
      %429 = vst.msk [vmem:[%s316] sm:$0x1] %vm428, %v427
      %v430 = vmul.f32 %v326, %v326
      %v431 = vmul.f32 %v327, %v327
      %v432 = vmul.f32 %v328, %v328
      %v433 = vmul.f32 %v329, %v329
      %v434 = vmul.f32 %v330, %v330
      %v435 = vmul.f32 %v331, %v331
      %v436 = vmul.f32 %v332, %v332
      %v437 = vmul.f32 %v333, %v333
      %v438 = vmul.f32 %v334, %v334
      %v439 = vmul.f32 %v335, %v335
      %v440 = vmul.f32 %v336, %v336
      %v441 = vmul.f32 %v337, %v337
      %v442 = vmul.f32 %v338, %v338
      %v443 = vmul.f32 %v339, %v339
      %v444 = vmul.f32 %v340, %v340
      %v445 = vmul.f32 %v341, %v341
      %v446 = vmul.f32 %v342, %v342
      %v447 = vmul.f32 %v343, %v343
      %v448 = vmul.f32 %v344, %v344
      %v449 = vmul.f32 %v345, %v345
      %v450 = vmul.f32 %v346, %v346
      %v451 = vmul.f32 %v347, %v347
      %v452 = vmul.f32 %v348, %v348
      %v453 = vmul.f32 %v349, %v349
      %v454 = vmul.f32 %v350, %v350
      %v455 = vmul.f32 %v351, %v351
      %v456 = vmul.f32 %v352, %v352
      %v457 = vmul.f32 %v353, %v353
      %v458 = vmul.f32 %v354, %v354
      %v459 = vmul.f32 %v355, %v355
      %v460 = vmul.f32 %v356, %v356
      %v461 = vmul.f32 %v357, %v357
      %v462 = vsel %vm358, %v430, 0.0
      %v463 = vsel %vm358, %v431, 0.0
      %v464 = vadd.f32 %v462, %v463
      %v465 = vsel %vm358, %v432, 0.0
      %v466 = vadd.f32 %v464, %v465
      %v467 = vsel %vm358, %v433, 0.0
      %v468 = vadd.f32 %v466, %v467
      %v469 = vsel %vm358, %v434, 0.0
      %v470 = vadd.f32 %v468, %v469
      %v471 = vsel %vm358, %v435, 0.0
      %v472 = vadd.f32 %v470, %v471
      %v473 = vsel %vm358, %v436, 0.0
      %v474 = vadd.f32 %v472, %v473
      %v475 = vsel %vm358, %v437, 0.0
      %v476 = vadd.f32 %v474, %v475
      %v477 = vsel %vm358, %v438, 0.0
      %v478 = vadd.f32 %v476, %v477
      %v479 = vsel %vm358, %v439, 0.0
      %v480 = vadd.f32 %v478, %v479
      %v481 = vsel %vm358, %v440, 0.0
      %v482 = vadd.f32 %v480, %v481
      %v483 = vsel %vm358, %v441, 0.0
      %v484 = vadd.f32 %v482, %v483
      %v485 = vsel %vm358, %v442, 0.0
      %v486 = vadd.f32 %v484, %v485
      %v487 = vsel %vm358, %v443, 0.0
      %v488 = vadd.f32 %v486, %v487
      %v489 = vsel %vm358, %v444, 0.0
      %v490 = vadd.f32 %v488, %v489
      %v491 = vsel %vm358, %v445, 0.0
      %v492 = vadd.f32 %v490, %v491
      %v493 = vsel %vm358, %v446, 0.0
      %v494 = vadd.f32 %v492, %v493
      %v495 = vsel %vm358, %v447, 0.0
      %v496 = vadd.f32 %v494, %v495
      %v497 = vsel %vm358, %v448, 0.0
      %v498 = vadd.f32 %v496, %v497
      %v499 = vsel %vm358, %v449, 0.0
      %v500 = vadd.f32 %v498, %v499
      %v501 = vsel %vm358, %v450, 0.0
      %v502 = vadd.f32 %v500, %v501
      %v503 = vsel %vm358, %v451, 0.0
      %v504 = vadd.f32 %v502, %v503
      %v505 = vsel %vm358, %v452, 0.0
      %v506 = vadd.f32 %v504, %v505
      %v507 = vsel %vm358, %v453, 0.0
      %v508 = vadd.f32 %v506, %v507
      %v509 = vsel %vm358, %v454, 0.0
      %v510 = vadd.f32 %v508, %v509
      %v511 = vsel %vm358, %v455, 0.0
      %v512 = vadd.f32 %v510, %v511
      %v513 = vsel %vm358, %v456, 0.0
      %v514 = vadd.f32 %v512, %v513
      %v515 = vsel %vm358, %v457, 0.0
      %v516 = vadd.f32 %v514, %v515
      %v517 = vsel %vm358, %v458, 0.0
      %v518 = vadd.f32 %v516, %v517
      %v519 = vsel %vm358, %v459, 0.0
      %v520 = vadd.f32 %v518, %v519
      %v521 = vsel %vm358, %v460, 0.0
      %v522 = vadd.f32 %v520, %v521
      %v523 = vsel %vm358, %v461, 0.0
      %v524 = vadd.f32 %v522, %v523
      %v525 = vrot.slane %v524, 4
      %v526 = vadd.f32 %v524, %v525
      %v527 = vrot.slane %v526, 2
      %v528 = vadd.f32 %v526, %v527
      %v529 = vrot.slane %v528, 1
      %v530 = vadd.f32 %v528, %v529
      %531 = vst.msk [vmem:[%s321] sm:$0x1] %vm428, %v530
      %v532 = vld [vmem:[%s325] sm:$0xff]
      %v533 = vld [vmem:[%s325 + $0x8] sm:$0xff]
      %v534 = vld [vmem:[%s325 + $0x10] sm:$0xff]
      %v535 = vld [vmem:[%s325 + $0x18] sm:$0xff]
      %v536 = vld [vmem:[%s325 + $0x20] sm:$0xff]
      %v537 = vld [vmem:[%s325 + $0x28] sm:$0xff]
      %v538 = vld [vmem:[%s325 + $0x30] sm:$0xff]
      %v539 = vld [vmem:[%s325 + $0x38] sm:$0xff]
      %v540 = vld [vmem:[%s325 + $0x40] sm:$0xff]
      %v541 = vld [vmem:[%s325 + $0x48] sm:$0xff]
      %v542 = vld [vmem:[%s325 + $0x50] sm:$0xff]
      %v543 = vld [vmem:[%s325 + $0x58] sm:$0xff]
      %v544 = vld [vmem:[%s325 + $0x60] sm:$0xff]
      %v545 = vld [vmem:[%s325 + $0x68] sm:$0xff]
      %v546 = vld [vmem:[%s325 + $0x70] sm:$0xff]
      %v547 = vld [vmem:[%s325 + $0x78] sm:$0xff]
      %v548 = vld [vmem:[%s325 + $0x80] sm:$0xff]
      %v549 = vld [vmem:[%s325 + $0x88] sm:$0xff]
      %v550 = vld [vmem:[%s325 + $0x90] sm:$0xff]
      %v551 = vld [vmem:[%s325 + $0x98] sm:$0xff]
      %v552 = vld [vmem:[%s325 + $0xa0] sm:$0xff]
      %v553 = vld [vmem:[%s325 + $0xa8] sm:$0xff]
      %v554 = vld [vmem:[%s325 + $0xb0] sm:$0xff]
      %v555 = vld [vmem:[%s325 + $0xb8] sm:$0xff]
      %v556 = vld [vmem:[%s325 + $0xc0] sm:$0xff]
      %v557 = vld [vmem:[%s325 + $0xc8] sm:$0xff]
      %v558 = vld [vmem:[%s325 + $0xd0] sm:$0xff]
      %v559 = vld [vmem:[%s325 + $0xd8] sm:$0xff]
      %v560 = vld [vmem:[%s325 + $0xe0] sm:$0xff]
      %v561 = vld [vmem:[%s325 + $0xe8] sm:$0xff]
      %v562 = vld [vmem:[%s325 + $0xf0] sm:$0xff]
      %v563 = vld [vmem:[%s325 + $0xf8] sm:$0xff]
      %v564 = vld [vmem:[%s295] sm:$0xf]
      %v565 = vld [vmem:[%s298] sm:$0x1]
      %v567 = vlaneseq
      %v568 = vshrl.u32 %v567, 7
      %v569 = vsub.s32 0, %v568
      %v570 = vrot.slane %v565, %v569
      %v573 = vsel %vm358, %v532, 0
      %v576 = vsel %vm358, %v533, 0
      %v579 = vsel %vm358, %v534, 0
      %v582 = vsel %vm358, %v535, 0
      %v585 = vsel %vm358, %v536, 0
      %v588 = vsel %vm358, %v537, 0
      %v591 = vsel %vm358, %v538, 0
      %v594 = vsel %vm358, %v539, 0
      %v597 = vsel %vm358, %v540, 0
      %v600 = vsel %vm358, %v541, 0
      %v603 = vsel %vm358, %v542, 0
      %v606 = vsel %vm358, %v543, 0
      %v609 = vsel %vm358, %v544, 0
      %v612 = vsel %vm358, %v545, 0
      %v615 = vsel %vm358, %v546, 0
      %v618 = vsel %vm358, %v547, 0
      %v621 = vsel %vm358, %v548, 0
      %v624 = vsel %vm358, %v549, 0
      %v627 = vsel %vm358, %v550, 0
      %v630 = vsel %vm358, %v551, 0
      %v633 = vsel %vm358, %v552, 0
      %v636 = vsel %vm358, %v553, 0
      %v639 = vsel %vm358, %v554, 0
      %v642 = vsel %vm358, %v555, 0
      %v645 = vsel %vm358, %v556, 0
      %v648 = vsel %vm358, %v557, 0
      %v651 = vsel %vm358, %v558, 0
      %v654 = vsel %vm358, %v559, 0
      %v657 = vsel %vm358, %v560, 0
      %v660 = vsel %vm358, %v561, 0
      %v663 = vsel %vm358, %v562, 0
      %v666 = vsel %vm358, %v563, 0
      %vm668 = vcmask 1043456
      %v670 = vsel %vm668, %v564, 0
      %672 = vmatprep.subr.mxu0 0.0
      %673 = vmatpush1.msra.mxu0 0.0
      %674 = vmatprep.subr.mxu0 0.0
      %675 = vmatpush1.msra.mxu0 0.0
      %676 = vmatprep.subr.mxu0 0.0
      %677 = vmatpush1.msra.mxu0 0.0
      %678 = vmatprep.subr.mxu0 0.0
      %679 = vmatpush1.msra.mxu0 0.0
      %680 = vmatprep.subr.mxu0 0.0
      %681 = vmatpush1.msra.mxu0 0.0
      %682 = vmatprep.subr.mxu0 0.0
      %683 = vmatpush1.msra.mxu0 0.0
      %684 = vmatprep.subr.mxu0 0.0
      %685 = vmatpush1.msra.mxu0 0.0
      %686 = vmatprep.subr.mxu0 0.0
      %687 = vmatpush1.msra.mxu0 0.0
      %688 = vmatprep.subr.mxu0 0.0
      %689 = vmatpush1.msra.mxu0 0.0
      %690 = vmatprep.subr.mxu0 0.0
      %691 = vmatpush1.msra.mxu0 0.0
      %692 = vmatprep.subr.mxu0 0.0
      %693 = vmatpush1.msra.mxu0 0.0
      %694 = vmatprep.subr.mxu0 0.0
      %695 = vmatpush1.msra.mxu0 0.0
      %696 = vmatprep.subr.mxu0 0.0
      %697 = vmatpush1.msra.mxu0 0.0
      %698 = vmatprep.subr.mxu0 0.0
      %699 = vmatpush1.msra.mxu0 0.0
      %700 = vmatprep.subr.mxu0 0.0
      %701 = vmatpush1.msra.mxu0 0.0
      %702 = vmatprep.subr.mxu0 0.0
      %703 = vmatpush1.msra.mxu0 %v670
      %704 = vmatprep.subr.mxu0 0.0
      %705 = vmatpush2.msra.mxu0 0.0
      %706 = vmatprep.subr.mxu0 0.0
      %707 = vmatpush2.msra.mxu0 0.0
      %708 = vmatprep.subr.mxu0 0.0
      %709 = vmatpush2.msra.mxu0 0.0
      %710 = vmatprep.subr.mxu0 0.0
      %711 = vmatpush2.msra.mxu0 0.0
      %712 = vmatprep.subr.mxu0 0.0
      %713 = vmatpush2.msra.mxu0 0.0
      %714 = vmatprep.subr.mxu0 0.0
      %715 = vmatpush2.msra.mxu0 0.0
      %716 = vmatprep.subr.mxu0 0.0
      %717 = vmatpush2.msra.mxu0 0.0
      %718 = vmatprep.subr.mxu0 0.0
      %719 = vmatpush2.msra.mxu0 0.0
      %720 = vmatprep.subr.mxu0 0.0
      %721 = vmatpush2.msra.mxu0 0.0
      %722 = vmatprep.subr.mxu0 0.0
      %723 = vmatpush2.msra.mxu0 0.0
      %724 = vmatprep.subr.mxu0 0.0
      %725 = vmatpush2.msra.mxu0 0.0
      %726 = vmatprep.subr.mxu0 0.0
      %727 = vmatpush2.msra.mxu0 0.0
      %728 = vmatprep.subr.mxu0 0.0
      %729 = vmatpush2.msra.mxu0 0.0
      %730 = vmatprep.subr.mxu0 0.0
      %731 = vmatpush2.msra.mxu0 0.0
      %732 = vmatprep.subr.mxu0 0.0
      %733 = vmatpush2.msra.mxu0 0.0
      %734 = vmatprep.subr.mxu0 0.0
      %735 = vmatpush2.msra.mxu0 0.0
      %736 = vmatprep.mubr.f32.mxu0 0.0
      %737 = vmatmul.mubr.f32.gmra.mxu0 %v573
      %v738 = vpop.f32.mrf.mxu0
      %v739 = vadd.f32 %v570, %v738
      %v740 = vpop.f32.mrf.mxu0
      %741 = vmatprep.mubr.f32.mxu0 0.0
      %742 = vmatmul.mubr.f32.gmra.mxu0 %v576
      %v743 = vpop.f32.mrf.mxu0
      %v744 = vadd.f32 %v570, %v743
      %v745 = vpop.f32.mrf.mxu0
      %746 = vmatprep.mubr.f32.mxu0 0.0
      %747 = vmatmul.mubr.f32.gmra.mxu0 %v579
      %v748 = vpop.f32.mrf.mxu0
      %v749 = vadd.f32 %v570, %v748
      %v750 = vpop.f32.mrf.mxu0
      %751 = vmatprep.mubr.f32.mxu0 0.0
      %752 = vmatmul.mubr.f32.gmra.mxu0 %v582
      %v753 = vpop.f32.mrf.mxu0
      %v754 = vadd.f32 %v570, %v753
      %v755 = vpop.f32.mrf.mxu0
      %756 = vmatprep.mubr.f32.mxu0 0.0
      %757 = vmatmul.mubr.f32.gmra.mxu0 %v585
      %v758 = vpop.f32.mrf.mxu0
      %v759 = vadd.f32 %v570, %v758
      %v760 = vpop.f32.mrf.mxu0
      %761 = vmatprep.mubr.f32.mxu0 0.0
      %762 = vmatmul.mubr.f32.gmra.mxu0 %v588
      %v763 = vpop.f32.mrf.mxu0
      %v764 = vadd.f32 %v570, %v763
      %v765 = vpop.f32.mrf.mxu0
      %766 = vmatprep.mubr.f32.mxu0 0.0
      %767 = vmatmul.mubr.f32.gmra.mxu0 %v591
      %v768 = vpop.f32.mrf.mxu0
      %v769 = vadd.f32 %v570, %v768
      %v770 = vpop.f32.mrf.mxu0
      %771 = vmatprep.mubr.f32.mxu0 0.0
      %772 = vmatmul.mubr.f32.gmra.mxu0 %v594
      %v773 = vpop.f32.mrf.mxu0
      %v774 = vadd.f32 %v570, %v773
      %v775 = vpop.f32.mrf.mxu0
      %776 = vmatprep.mubr.f32.mxu0 0.0
      %777 = vmatmul.mubr.f32.gmra.mxu0 %v597
      %v778 = vpop.f32.mrf.mxu0
      %v779 = vadd.f32 %v570, %v778
      %v780 = vpop.f32.mrf.mxu0
      %781 = vmatprep.mubr.f32.mxu0 0.0
      %782 = vmatmul.mubr.f32.gmra.mxu0 %v600
      %v783 = vpop.f32.mrf.mxu0
      %v784 = vadd.f32 %v570, %v783
      %v785 = vpop.f32.mrf.mxu0
      %786 = vmatprep.mubr.f32.mxu0 0.0
      %787 = vmatmul.mubr.f32.gmra.mxu0 %v603
      %v788 = vpop.f32.mrf.mxu0
      %v789 = vadd.f32 %v570, %v788
      %v790 = vpop.f32.mrf.mxu0
      %791 = vmatprep.mubr.f32.mxu0 0.0
      %792 = vmatmul.mubr.f32.gmra.mxu0 %v606
      %v793 = vpop.f32.mrf.mxu0
      %v794 = vadd.f32 %v570, %v793
      %v795 = vpop.f32.mrf.mxu0
      %796 = vmatprep.mubr.f32.mxu0 0.0
      %797 = vmatmul.mubr.f32.gmra.mxu0 %v609
      %v798 = vpop.f32.mrf.mxu0
      %v799 = vadd.f32 %v570, %v798
      %v800 = vpop.f32.mrf.mxu0
      %801 = vmatprep.mubr.f32.mxu0 0.0
      %802 = vmatmul.mubr.f32.gmra.mxu0 %v612
      %v803 = vpop.f32.mrf.mxu0
      %v804 = vadd.f32 %v570, %v803
      %v805 = vpop.f32.mrf.mxu0
      %806 = vmatprep.mubr.f32.mxu0 0.0
      %807 = vmatmul.mubr.f32.gmra.mxu0 %v615
      %v808 = vpop.f32.mrf.mxu0
      %v809 = vadd.f32 %v570, %v808
      %v810 = vpop.f32.mrf.mxu0
      %811 = vmatprep.mubr.f32.mxu0 0.0
      %812 = vmatmul.mubr.f32.gmra.mxu0 %v618
      %v813 = vpop.f32.mrf.mxu0
      %v814 = vadd.f32 %v570, %v813
      %v815 = vpop.f32.mrf.mxu0
      %816 = vmatprep.mubr.f32.mxu0 0.0
      %817 = vmatmul.mubr.f32.gmra.mxu0 %v621
      %v818 = vpop.f32.mrf.mxu0
      %v819 = vadd.f32 %v570, %v818
      %v820 = vpop.f32.mrf.mxu0
      %821 = vmatprep.mubr.f32.mxu0 0.0
      %822 = vmatmul.mubr.f32.gmra.mxu0 %v624
      %v823 = vpop.f32.mrf.mxu0
      %v824 = vadd.f32 %v570, %v823
      %v825 = vpop.f32.mrf.mxu0
      %826 = vmatprep.mubr.f32.mxu0 0.0
      %827 = vmatmul.mubr.f32.gmra.mxu0 %v627
      %v828 = vpop.f32.mrf.mxu0
      %v829 = vadd.f32 %v570, %v828
      %v830 = vpop.f32.mrf.mxu0
      %831 = vmatprep.mubr.f32.mxu0 0.0
      %832 = vmatmul.mubr.f32.gmra.mxu0 %v630
      %v833 = vpop.f32.mrf.mxu0
      %v834 = vadd.f32 %v570, %v833
      %v835 = vpop.f32.mrf.mxu0
      %836 = vmatprep.mubr.f32.mxu0 0.0
      %837 = vmatmul.mubr.f32.gmra.mxu0 %v633
      %v838 = vpop.f32.mrf.mxu0
      %v839 = vadd.f32 %v570, %v838
      %v840 = vpop.f32.mrf.mxu0
      %841 = vmatprep.mubr.f32.mxu0 0.0
      %842 = vmatmul.mubr.f32.gmra.mxu0 %v636
      %v843 = vpop.f32.mrf.mxu0
      %v844 = vadd.f32 %v570, %v843
      %v845 = vpop.f32.mrf.mxu0
      %846 = vmatprep.mubr.f32.mxu0 0.0
      %847 = vmatmul.mubr.f32.gmra.mxu0 %v639
      %v848 = vpop.f32.mrf.mxu0
      %v849 = vadd.f32 %v570, %v848
      %v850 = vpop.f32.mrf.mxu0
      %851 = vmatprep.mubr.f32.mxu0 0.0
      %852 = vmatmul.mubr.f32.gmra.mxu0 %v642
      %v853 = vpop.f32.mrf.mxu0
      %v854 = vadd.f32 %v570, %v853
      %v855 = vpop.f32.mrf.mxu0
      %856 = vmatprep.mubr.f32.mxu0 0.0
      %857 = vmatmul.mubr.f32.gmra.mxu0 %v645
      %v858 = vpop.f32.mrf.mxu0
      %v859 = vadd.f32 %v570, %v858
      %v860 = vpop.f32.mrf.mxu0
      %861 = vmatprep.mubr.f32.mxu0 0.0
      %862 = vmatmul.mubr.f32.gmra.mxu0 %v648
      %v863 = vpop.f32.mrf.mxu0
      %v864 = vadd.f32 %v570, %v863
      %v865 = vpop.f32.mrf.mxu0
      %866 = vmatprep.mubr.f32.mxu0 0.0
      %867 = vmatmul.mubr.f32.gmra.mxu0 %v651
      %v868 = vpop.f32.mrf.mxu0
      %v869 = vadd.f32 %v570, %v868
      %v870 = vpop.f32.mrf.mxu0
      %871 = vmatprep.mubr.f32.mxu0 0.0
      %872 = vmatmul.mubr.f32.gmra.mxu0 %v654
      %v873 = vpop.f32.mrf.mxu0
      %v874 = vadd.f32 %v570, %v873
      %v875 = vpop.f32.mrf.mxu0
      %876 = vmatprep.mubr.f32.mxu0 0.0
      %877 = vmatmul.mubr.f32.gmra.mxu0 %v657
      %v878 = vpop.f32.mrf.mxu0
      %v879 = vadd.f32 %v570, %v878
      %v880 = vpop.f32.mrf.mxu0
      %881 = vmatprep.mubr.f32.mxu0 0.0
      %882 = vmatmul.mubr.f32.gmra.mxu0 %v660
      %v883 = vpop.f32.mrf.mxu0
      %v884 = vadd.f32 %v570, %v883
      %v885 = vpop.f32.mrf.mxu0
      %886 = vmatprep.mubr.f32.mxu0 0.0
      %887 = vmatmul.mubr.f32.gmra.mxu0 %v663
      %v888 = vpop.f32.mrf.mxu0
      %v889 = vadd.f32 %v570, %v888
      %v890 = vpop.f32.mrf.mxu0
      %891 = vmatprep.mubr.f32.mxu0 0.0
      %892 = vmatmul.mubr.f32.gmra.mxu0 %v666
      %v893 = vpop.f32.mrf.mxu0
      %v894 = vadd.f32 %v570, %v893
      %v895 = vpop.f32.mrf.mxu0
      %896 = vdwg.mxu0
      %vm897 = vcmask 64512
      %898 = vst.msk [vmem:[%s311] sm:$0xff] %vm897, %v739
      %899 = vst.msk [vmem:[%s311 + $0x8] sm:$0xff] %vm897, %v744
      %900 = vst.msk [vmem:[%s311 + $0x10] sm:$0xff] %vm897, %v749
      %901 = vst.msk [vmem:[%s311 + $0x18] sm:$0xff] %vm897, %v754
      %902 = vst.msk [vmem:[%s311 + $0x20] sm:$0xff] %vm897, %v759
      %903 = vst.msk [vmem:[%s311 + $0x28] sm:$0xff] %vm897, %v764
      %904 = vst.msk [vmem:[%s311 + $0x30] sm:$0xff] %vm897, %v769
      %905 = vst.msk [vmem:[%s311 + $0x38] sm:$0xff] %vm897, %v774
      %906 = vst.msk [vmem:[%s311 + $0x40] sm:$0xff] %vm897, %v779
      %907 = vst.msk [vmem:[%s311 + $0x48] sm:$0xff] %vm897, %v784
      %908 = vst.msk [vmem:[%s311 + $0x50] sm:$0xff] %vm897, %v789
      %909 = vst.msk [vmem:[%s311 + $0x58] sm:$0xff] %vm897, %v794
      %910 = vst.msk [vmem:[%s311 + $0x60] sm:$0xff] %vm897, %v799
      %911 = vst.msk [vmem:[%s311 + $0x68] sm:$0xff] %vm897, %v804
      %912 = vst.msk [vmem:[%s311 + $0x70] sm:$0xff] %vm897, %v809
      %913 = vst.msk [vmem:[%s311 + $0x78] sm:$0xff] %vm897, %v814
      %914 = vst.msk [vmem:[%s311 + $0x80] sm:$0xff] %vm897, %v819
      %915 = vst.msk [vmem:[%s311 + $0x88] sm:$0xff] %vm897, %v824
      %916 = vst.msk [vmem:[%s311 + $0x90] sm:$0xff] %vm897, %v829
      %917 = vst.msk [vmem:[%s311 + $0x98] sm:$0xff] %vm897, %v834
      %918 = vst.msk [vmem:[%s311 + $0xa0] sm:$0xff] %vm897, %v839
      %919 = vst.msk [vmem:[%s311 + $0xa8] sm:$0xff] %vm897, %v844
      %920 = vst.msk [vmem:[%s311 + $0xb0] sm:$0xff] %vm897, %v849
      %921 = vst.msk [vmem:[%s311 + $0xb8] sm:$0xff] %vm897, %v854
      %922 = vst.msk [vmem:[%s311 + $0xc0] sm:$0xff] %vm897, %v859
      %923 = vst.msk [vmem:[%s311 + $0xc8] sm:$0xff] %vm897, %v864
      %924 = vst.msk [vmem:[%s311 + $0xd0] sm:$0xff] %vm897, %v869
      %925 = vst.msk [vmem:[%s311 + $0xd8] sm:$0xff] %vm897, %v874
      %926 = vst.msk [vmem:[%s311 + $0xe0] sm:$0xff] %vm897, %v879
      %927 = vst.msk [vmem:[%s311 + $0xe8] sm:$0xff] %vm897, %v884
      %928 = vst.msk [vmem:[%s311 + $0xf0] sm:$0xff] %vm897, %v889
      %929 = vst.msk [vmem:[%s311 + $0xf8] sm:$0xff] %vm897, %v894
      %s930 = smul.u32 16, %s23
      %p931 = scmp.lt.s32.totalorder %s22, 1
      %s932 = scalar_select %p931, %s22, 1
      %p933 = scmp.lt.s32.totalorder %s930, 15
      %s934 = scalar_select %p933, %s930, 15
      %p935 = scmp.lt.s32.totalorder %s24, 0
      %s936 = scalar_select %p935, %s24, 0
      %s937 = smul.addr %s934, 2
      %s938 = sadd.s32 %s936, %s937
      %s939 = smul.addr %s932, 32
      %s940 = sadd.s32 %s938, %s939
      %s941 = smul.addr %s940, 8
      %s942 = scalar_lea.vmem %s3, %s941
      %s943 = sadd.s32 %s22, %s23
      %p944 = scmp.lt.s32.totalorder %s943, 1
      %s945 = scalar_select %p944, %s943, 1
      %s946 = scalar_lea.vmem %s4, %s945
      %s947 = sadd.s32 %s22, %s23
      %p948 = scmp.lt.s32.totalorder %s947, 1
      %s949 = scalar_select %p948, %s947, 1
      %s950 = scalar_lea.vmem %s5, %s949
      // Predicated region
      $region33: #{residual_block_forward.3} parent=31 // pred_check
        %p951 = pneg %p136
      $region34: #{residual_block_forward.3} parent=31 // pred_check_branch
        %953 = sbr.rel (%p951) target = $region36
      $region35: #{residual_block_forward.3} parent=31 // pred_region
        %s954 = smul.u32 16, %s23
      $region36: #{residual_block_forward.3} parent=31 // pred_fallthru
        _
      // Predicated region
      $region37: #{residual_block_forward.3} parent=31 // pred_check
        %p955 = pneg %p164
      $region38: #{residual_block_forward.3} parent=31 // pred_check_branch
        %957 = sbr.rel (%p955) target = $region40
      $region39: #{residual_block_forward.3} parent=31 // pred_region
        %s958 = sadd.s32 %s22, %s23
      $region40: #{residual_block_forward.3} parent=31 // pred_fallthru
        _
      // Predicated region
      $region41: #{residual_block_forward.3} parent=31 // pred_check
        %p959 = pneg %p192
      $region42: #{residual_block_forward.3} parent=31 // pred_check_branch
        %961 = sbr.rel (%p959) target = $region44
      $region43: #{residual_block_forward.3} parent=31 // pred_region
        %s962 = sadd.s32 %s22, %s23
      $region44: #{residual_block_forward.3} parent=31 // pred_fallthru
        _
    $region32: #{residual_block_forward.3} parent=5 // pred_fallthru
      _
    %p963 = scmp.le.s32.totalorder 2, %s12
    // Predicated region
    $region45: #{residual_block_forward.3} parent=5 // pred_check
      %p964 = pneg %p963
    $region46: #{residual_block_forward.3} parent=5 // pred_check_branch
      %966 = sbr.rel (%p964) target = $region48
    $region47: #{residual_block_forward.3} parent=5 // pred_region
      %s967 = ssub.s32 %s12, 2
      // Predicated region
      $region49: #{residual_block_forward.3} parent=47 // pred_check
        %p968 = pneg %p142
      $region50: #{residual_block_forward.3} parent=47 // pred_check_branch
        %970 = sbr.rel (%p968) target = $region52
      $region51: #{residual_block_forward.3} parent=47 // pred_region
        %s971 = smul.u32 16, %s26
        %p972 = scmp.lt.s32.totalorder %s25, 1
        %s973 = scalar_select %p972, %s25, 1
        %p974 = scmp.lt.s32.totalorder %s971, 15
        %s975 = scalar_select %p974, %s971, 15
        %p976 = scmp.lt.s32.totalorder %s27, 0
        %s977 = scalar_select %p976, %s27, 0
        %s978 = smul.addr %s975, 2
        %s979 = sadd.s32 %s977, %s978
        %s980 = smul.addr %s973, 32
        %s981 = sadd.s32 %s979, %s980
        %s982 = smul.addr %s981, 8
        %s983 = scalar_lea.vmem %s3, %s982
      $region52: #{residual_block_forward.3} parent=47 // pred_fallthru
        _
      // Predicated region
      $region53: #{residual_block_forward.3} parent=47 // pred_check
        %p984 = pneg %p170
      $region54: #{residual_block_forward.3} parent=47 // pred_check_branch
        %986 = sbr.rel (%p984) target = $region56
      $region55: #{residual_block_forward.3} parent=47 // pred_region
        %s987 = sadd.s32 %s25, %s26
        %p988 = scmp.lt.s32.totalorder %s987, 1
        %s989 = scalar_select %p988, %s987, 1
        %s990 = scalar_lea.vmem %s4, %s989
      $region56: #{residual_block_forward.3} parent=47 // pred_fallthru
        _
      // Predicated region
      $region57: #{residual_block_forward.3} parent=47 // pred_check
        %p991 = pneg %p198
      $region58: #{residual_block_forward.3} parent=47 // pred_check_branch
        %993 = sbr.rel (%p991) target = $region60
      $region59: #{residual_block_forward.3} parent=47 // pred_region
        %s994 = sadd.s32 %s25, %s26
        %p995 = scmp.lt.s32.totalorder %s994, 1
        %s996 = scalar_select %p995, %s994, 1
        %s997 = scalar_lea.vmem %s5, %s996
      $region60: #{residual_block_forward.3} parent=47 // pred_fallthru
        _
    $region48: #{residual_block_forward.3} parent=5 // pred_fallthru
      _
  $region6: #{residual_block_forward.3} parent=0 // loop_footer
    %s16 = sadd.s32 1, %s12
  $region7: #{residual_block_forward.3} parent=0 // loop_footer_branch
    %11 = sbr.rel target = $region3
  $region8: #{residual_block_forward.3} parent=0 // loop_exit
    _

// kernel: residual_block_forward.5
$region0: #{residual_block_forward.5}
  #allocation0 [shape = 'u32[]', space=smem, size = 0x4, offset = 0x4, fixed_abs, tag = 'smem constant byte address 0x4 - core index']
  #allocation1 [shape = 'u32[144,128]{1,0:T(1,128)}', space=vmem, size = 0x12000, scoped, tag = 'internal scratch']
  %s0 = inlined_call_operand.vmem [shape: f32[2,16,16,8], index: 0, kind: input, shape index: {}]
  %s1 = inlined_call_operand.vmem [shape: f32[72,8], index: 1, kind: input, shape index: {}]
  %s2 = inlined_call_operand.vmem [shape: f32[1,8], index: 2, kind: input, shape index: {}]
  %s3 = inlined_call_operand.vmem [shape: f32[1,8], index: 3, kind: input, shape index: {}]
  %s4 = inlined_call_operand.vmem [shape: f32[1,8], index: 4, kind: input, shape index: {}]
  %s5 = inlined_call_operand.vmem [shape: f32[2,16,16,8], index: 5, kind: input, shape index: {}]
  %s6 = inlined_call_operand.vmem [shape: f32[2,16,16,8], index: 6, kind: output, shape index: {}]
  %s7 = sld [smem:[#allocation0]]
  $region57: #{residual_block_forward.5} parent=0
    _
  %s9 = ssub.s32 1, %s7
  %s10 = scalar_select 0, %s9, %s7
  loop: start=0, step=1, limit=4
  $region2: #{residual_block_forward.5} parent=0 // loop_pre_header
    _
  $region3: #{residual_block_forward.5} parent=0 // loop_header
    %s12 = sphi 0, %s16
    %p13 = scmp.ge.s32.totalorder %s12, 4
    %s19 = sphi 0, %s38
    %s20 = sphi 0, %s34
    %s21 = sphi 0, %s30
    %s22 = sphi 0, %s19
    %s23 = sphi 0, %s20
    %s24 = sphi 0, %s21
    %s25 = sphi 0, %s22
    %s26 = sphi 0, %s23
    %s27 = sphi 0, %s24
    %s41 = sphi 0, %s43
    %s44 = sphi 0, %s41
    %s45 = sphi 0, %s44
    %s61 = sphi 0, %s45
    %s67 = sphi 0, %s69
    %s70 = sphi 0, %s67
    %s71 = sphi 0, %s70
    %s87 = sphi 0, %s71
    %s93 = sphi 0, %s95
    %s96 = sphi 0, %s93
    %s97 = sphi 0, %s96
    %s113 = sphi 0, %s97
    %s117 = sphi 0, %s117
    %s119 = sphi 0, %s117
    %s120 = sphi 0, %s119
    %s134 = sphi 0, %s120
    %s138 = sphi 0, %s138
    %s140 = sphi 0, %s138
    %s141 = sphi 0, %s140
    %s155 = sphi 0, %s141
    %s165 = sphi 0, %s167
    %s168 = sphi 0, %s165
    %s169 = sphi 0, %s168
    %s185 = sphi 0, %s169
    %s195 = sphi 0, %s197
    %s198 = sphi 0, %s195
    %s199 = sphi 0, %s198
    %s215 = sphi 0, %s199
  $region4: #{residual_block_forward.5} parent=0 // loop_header_branch
    %15 = sbr.rel (%p13) target = $region8
  $region5: #{residual_block_forward.5} parent=0 // loop_body
    %s17 = ssub.s32 %s12, 1
    %s18 = ssub.s32 %s12, 2
    %s28 = sadd.s32 1, %s21
    %p29 = scmp.ge.s32.totalorder %s28, 1
    %s30 = scalar_select %p29, 0, %s28
    %s31 = sadd.s32 1, %s20
    %s32 = scalar_select %p29, %s31, %s20
    %p33 = scmp.ge.s32.totalorder %s32, 1
    %s34 = scalar_select %p33, 0, %s32
    %s35 = sadd.s32 1, %s19
    %s36 = scalar_select %p33, %s35, %s19
    %p37 = scmp.ge.s32.totalorder %s36, 2
    %s38 = scalar_select %p37, 0, %s36
    %s39 = ssub.s32 %s19, %s38
    %p40 = scmp.eq.s32.totalorder %s39, 0
    %s42 = sadd.s32 %s41, 1
    %s43 = scalar_select %p40, %s41, %s42
    %p46 = pneg %p40
    %p47 = scmp.eq.s32.totalorder %s12, 1
    %p48 = por %p46, %p47
    %p49 = scmp.ne.s32.totalorder %s41, %s44
    %p50 = scmp.eq.s32.totalorder %s12, 0
    %p51 = por %p49, %p50
    %p52 = scmp.ne.s32.totalorder %s41, %s44
    %p53 = scmp.eq.s32.totalorder %s17, 1
    %p54 = por %p52, %p53
    %p55 = scmp.ne.s32.totalorder %s44, %s45
    %p56 = scmp.eq.s32.totalorder %s17, 0
    %p57 = por %p55, %p56
    %p58 = scmp.ne.s32.totalorder %s44, %s45
    %p59 = scmp.eq.s32.totalorder %s18, 1
    %p60 = por %p58, %p59
    %p62 = scmp.ne.s32.totalorder %s45, %s61
    %p63 = scmp.eq.s32.totalorder %s18, 0
    %p64 = por %p62, %p63
    %s65 = ssub.s32 %s21, %s30
    %p66 = scmp.eq.s32.totalorder %s65, 0
    %s68 = sadd.s32 %s67, 1
    %s69 = scalar_select %p66, %s67, %s68
    %p72 = pneg %p66
    %p73 = scmp.eq.s32.totalorder %s12, 1
    %p74 = por %p72, %p73
    %p75 = scmp.ne.s32.totalorder %s67, %s70
    %p76 = scmp.eq.s32.totalorder %s12, 0
    %p77 = por %p75, %p76
    %p78 = scmp.ne.s32.totalorder %s67, %s70
    %p79 = scmp.eq.s32.totalorder %s17, 1
    %p80 = por %p78, %p79
    %p81 = scmp.ne.s32.totalorder %s70, %s71
    %p82 = scmp.eq.s32.totalorder %s17, 0
    %p83 = por %p81, %p82
    %p84 = scmp.ne.s32.totalorder %s70, %s71
    %p85 = scmp.eq.s32.totalorder %s18, 1
    %p86 = por %p84, %p85
    %p88 = scmp.ne.s32.totalorder %s71, %s87
    %p89 = scmp.eq.s32.totalorder %s18, 0
    %p90 = por %p88, %p89
    %s91 = ssub.s32 %s21, %s30
    %p92 = scmp.eq.s32.totalorder %s91, 0
    %s94 = sadd.s32 %s93, 1
    %s95 = scalar_select %p92, %s93, %s94
    %p98 = pneg %p92
    %p99 = scmp.eq.s32.totalorder %s12, 1
    %p100 = por %p98, %p99
    %p101 = scmp.ne.s32.totalorder %s93, %s96
    %p102 = scmp.eq.s32.totalorder %s12, 0
    %p103 = por %p101, %p102
    %p104 = scmp.ne.s32.totalorder %s93, %s96
    %p105 = scmp.eq.s32.totalorder %s17, 1
    %p106 = por %p104, %p105
    %p107 = scmp.ne.s32.totalorder %s96, %s97
    %p108 = scmp.eq.s32.totalorder %s17, 0
    %p109 = por %p107, %p108
    %p110 = scmp.ne.s32.totalorder %s96, %s97
    %p111 = scmp.eq.s32.totalorder %s18, 1
    %p112 = por %p110, %p111
    %p114 = scmp.ne.s32.totalorder %s97, %s113
    %p115 = scmp.eq.s32.totalorder %s18, 0
    %p116 = por %p114, %p115
    %s118 = sadd.s32 %s117, 1
    %p121 = scmp.eq.s32.totalorder %s12, 1
    %p122 = scmp.ne.s32.totalorder %s117, %s119
    %p123 = scmp.eq.s32.totalorder %s12, 0
    %p124 = por %p122, %p123
    %p125 = scmp.ne.s32.totalorder %s117, %s119
    %p126 = scmp.eq.s32.totalorder %s17, 1
    %p127 = por %p125, %p126
    %p128 = scmp.ne.s32.totalorder %s119, %s120
    %p129 = scmp.eq.s32.totalorder %s17, 0
    %p130 = por %p128, %p129
    %p131 = scmp.ne.s32.totalorder %s119, %s120
    %p132 = scmp.eq.s32.totalorder %s18, 1
    %p133 = por %p131, %p132
    %p135 = scmp.ne.s32.totalorder %s120, %s134
    %p136 = scmp.eq.s32.totalorder %s18, 0
    %p137 = por %p135, %p136
    %s139 = sadd.s32 %s138, 1
    %p142 = scmp.eq.s32.totalorder %s12, 1
    %p143 = scmp.ne.s32.totalorder %s138, %s140
    %p144 = scmp.eq.s32.totalorder %s12, 0
    %p145 = por %p143, %p144
    %p146 = scmp.ne.s32.totalorder %s138, %s140
    %p147 = scmp.eq.s32.totalorder %s17, 1
    %p148 = por %p146, %p147
    %p149 = scmp.ne.s32.totalorder %s140, %s141
    %p150 = scmp.eq.s32.totalorder %s17, 0
    %p151 = por %p149, %p150
    %p152 = scmp.ne.s32.totalorder %s140, %s141
    %p153 = scmp.eq.s32.totalorder %s18, 1
    %p154 = por %p152, %p153
    %p156 = scmp.ne.s32.totalorder %s141, %s155
    %p157 = scmp.eq.s32.totalorder %s18, 0
    %p158 = por %p156, %p157
    %s159 = ssub.s32 %s19, %s38
    %s160 = ssub.s32 %s20, %s34
    %s161 = sor.u32 %s159, %s160
    %s162 = ssub.s32 %s21, %s30
    %s163 = sor.u32 %s161, %s162
    %p164 = scmp.eq.s32.totalorder %s163, 0
    %s166 = sadd.s32 %s165, 1
    %s167 = scalar_select %p164, %s165, %s166
    %p170 = pneg %p164
    %p171 = scmp.eq.s32.totalorder %s12, 1
    %p172 = por %p170, %p171
    %p173 = scmp.ne.s32.totalorder %s165, %s168
    %p174 = scmp.eq.s32.totalorder %s12, 0
    %p175 = por %p173, %p174
    %p176 = scmp.ne.s32.totalorder %s165, %s168
    %p177 = scmp.eq.s32.totalorder %s17, 1
    %p178 = por %p176, %p177
    %p179 = scmp.ne.s32.totalorder %s168, %s169
    %p180 = scmp.eq.s32.totalorder %s17, 0
    %p181 = por %p179, %p180
    %p182 = scmp.ne.s32.totalorder %s168, %s169
    %p183 = scmp.eq.s32.totalorder %s18, 1
    %p184 = por %p182, %p183
    %p186 = scmp.ne.s32.totalorder %s169, %s185
    %p187 = scmp.eq.s32.totalorder %s18, 0
    %p188 = por %p186, %p187
    %s189 = ssub.s32 %s19, %s38
    %s190 = ssub.s32 %s20, %s34
    %s191 = sor.u32 %s189, %s190
    %s192 = ssub.s32 %s21, %s30
    %s193 = sor.u32 %s191, %s192
    %p194 = scmp.eq.s32.totalorder %s193, 0
    %s196 = sadd.s32 %s195, 1
    %s197 = scalar_select %p194, %s195, %s196
    %p200 = pneg %p194
    %p201 = scmp.eq.s32.totalorder %s12, 1
    %p202 = por %p200, %p201
    %p203 = scmp.ne.s32.totalorder %s195, %s198
    %p204 = scmp.eq.s32.totalorder %s12, 0
    %p205 = por %p203, %p204
    %p206 = scmp.ne.s32.totalorder %s195, %s198
    %p207 = scmp.eq.s32.totalorder %s17, 1
    %p208 = por %p206, %p207
    %p209 = scmp.ne.s32.totalorder %s198, %s199
    %p210 = scmp.eq.s32.totalorder %s17, 0
    %p211 = por %p209, %p210
    %p212 = scmp.ne.s32.totalorder %s198, %s199
    %p213 = scmp.eq.s32.totalorder %s18, 1
    %p214 = por %p212, %p213
    %p216 = scmp.ne.s32.totalorder %s199, %s215
    %p217 = scmp.eq.s32.totalorder %s18, 0
    %p218 = por %p216, %p217
    %p219 = scmp.le.s32.totalorder 1, %s12
    %p220 = scmp.lt.s32.totalorder %s12, 3
    %p221 = pnand %p219, %p220
    %p222 = pneg %p221
    // Predicated region
    $region9: #{residual_block_forward.5} parent=5 // pred_check
      _
    $region10: #{residual_block_forward.5} parent=5 // pred_check_branch
      %224 = sbr.rel (%p221) target = $region12
    $region11: #{residual_block_forward.5} parent=5 // pred_region
      %s225 = ssub.s32 %s12, 1
      // Predicated region
      $region13: #{residual_block_forward.5} parent=11 // pred_check
        %p226 = pneg %p83
      $region14: #{residual_block_forward.5} parent=11 // pred_check_branch
        %228 = sbr.rel (%p226) target = $region16
      $region15: #{residual_block_forward.5} parent=11 // pred_region
        %p229 = scmp.lt.s32.totalorder %s24, 0
        %s230 = scalar_select %p229, %s24, 0
        %s231 = smul.addr %s230, 8
        %s232 = scalar_lea.vmem %s1, %s231
      $region16: #{residual_block_forward.5} parent=11 // pred_fallthru
        _
      // Predicated region
      $region17: #{residual_block_forward.5} parent=11 // pred_check
        %p233 = pneg %p109
      $region18: #{residual_block_forward.5} parent=11 // pred_check_branch
        %235 = sbr.rel (%p233) target = $region20
      $region19: #{residual_block_forward.5} parent=11 // pred_region
        %p236 = scmp.lt.s32.totalorder %s24, 0
        %s237 = scalar_select %p236, %s24, 0
        %s238 = scalar_lea.vmem %s2, %s237
      $region20: #{residual_block_forward.5} parent=11 // pred_fallthru
        _
      // Predicated region
      $region21: #{residual_block_forward.5} parent=11 // pred_check
        %p239 = pneg %p130
      $region22: #{residual_block_forward.5} parent=11 // pred_check_branch
        %241 = sbr.rel (%p239) target = $region24
      $region23: #{residual_block_forward.5} parent=11 // pred_region
        _
      $region24: #{residual_block_forward.5} parent=11 // pred_fallthru
        _
      // Predicated region
      $region25: #{residual_block_forward.5} parent=11 // pred_check
        %p242 = pneg %p151
      $region26: #{residual_block_forward.5} parent=11 // pred_check_branch
        %244 = sbr.rel (%p242) target = $region28
      $region27: #{residual_block_forward.5} parent=11 // pred_region
        _
      $region28: #{residual_block_forward.5} parent=11 // pred_fallthru
        _
    $region12: #{residual_block_forward.5} parent=5 // pred_fallthru
      _
    %p245 = scmp.lt.s32.totalorder %s12, 2
    // Predicated region
    $region29: #{residual_block_forward.5} parent=5 // pred_check
      %p246 = pneg %p245
    $region30: #{residual_block_forward.5} parent=5 // pred_check_branch
      %248 = sbr.rel (%p246) target = $region32
    $region31: #{residual_block_forward.5} parent=5 // pred_region
      // Predicated region
      $region33: #{residual_block_forward.5} parent=31 // pred_check
        %p249 = pneg %p51
      $region34: #{residual_block_forward.5} parent=31 // pred_check_branch
        %251 = sbr.rel (%p249) target = $region36
      $region35: #{residual_block_forward.5} parent=31 // pred_region
        %p252 = scmp.lt.s32.totalorder %s19, 1
        %s253 = scalar_select %p252, %s19, 1
        %s254 = smul.addr %s253, 32
        %s255 = smul.addr %s254, 8
        %s256 = scalar_lea.vmem %s0, %s255
      $region36: #{residual_block_forward.5} parent=31 // pred_fallthru
        _
      // Predicated region
      $region37: #{residual_block_forward.5} parent=31 // pred_check
        %p257 = pneg %p175
      $region38: #{residual_block_forward.5} parent=31 // pred_check_branch
        %259 = sbr.rel (%p257) target = $region40
      $region39: #{residual_block_forward.5} parent=31 // pred_region
        %s260 = smul.u32 16, %s20
        %p261 = scmp.lt.s32.totalorder %s19, 1
        %s262 = scalar_select %p261, %s19, 1
        %p263 = scmp.lt.s32.totalorder %s260, 15
        %s264 = scalar_select %p263, %s260, 15
        %p265 = scmp.lt.s32.totalorder %s21, 0
        %s266 = scalar_select %p265, %s21, 0
        %s267 = smul.addr %s264, 2
        %s268 = sadd.s32 %s266, %s267
        %s269 = smul.addr %s262, 32
        %s270 = sadd.s32 %s268, %s269
        %s271 = smul.addr %s270, 8
        %s272 = scalar_lea.vmem %s5, %s271
        %s273 = smul.u32 16, %s20
      $region40: #{residual_block_forward.5} parent=31 // pred_fallthru
        _
    $region32: #{residual_block_forward.5} parent=5 // pred_fallthru
      _
    %p274 = scmp.le.s32.totalorder 1, %s12
    %p275 = scmp.lt.s32.totalorder %s12, 3
    %p276 = pnand %p274, %p275
    %p277 = pneg %p276
    // Predicated region
    $region41: #{residual_block_forward.5} parent=5 // pred_check
      _
    $region42: #{residual_block_forward.5} parent=5 // pred_check_branch
      %279 = sbr.rel (%p276) target = $region44
    $region43: #{residual_block_forward.5} parent=5 // pred_region
      %s280 = ssub.s32 %s12, 1
      %p281 = scmp.lt.s32.totalorder %s22, 1
      %s282 = scalar_select %p281, %s22, 1
      %s283 = smul.addr %s282, 32
      %s284 = smul.addr %s283, 8
      %s285 = scalar_lea.vmem %s0, %s284
      %p286 = pneg %p57
      %p287 = pneg %p54
      %p288 = scmp.lt.s32.totalorder %s24, 0
      %s289 = scalar_select %p288, %s24, 0
      %s290 = smul.addr %s289, 8
      %s291 = scalar_lea.vmem %s1, %s290
      %p292 = pneg %p83
      %p293 = pneg %p80
      %p294 = scmp.lt.s32.totalorder %s24, 0
      %s295 = scalar_select %p294, %s24, 0
      %s296 = scalar_lea.vmem %s2, %s295
      %p297 = pneg %p109
      %p298 = pneg %p106
      %p299 = pneg %p130
      %p300 = pneg %p127
      %p301 = pneg %p151
      %p302 = pneg %p148
      %s303 = smul.u32 16, %s23
      %p304 = scmp.lt.s32.totalorder %s22, 1
      %s305 = scalar_select %p304, %s22, 1
      %p306 = scmp.lt.s32.totalorder %s303, 15
      %s307 = scalar_select %p306, %s303, 15
      %p308 = scmp.lt.s32.totalorder %s24, 0
      %s309 = scalar_select %p308, %s24, 0
      %s310 = smul.addr %s307, 2
      %s311 = sadd.s32 %s309, %s310
      %s312 = smul.addr %s305, 32
      %s313 = sadd.s32 %s311, %s312
      %s314 = smul.addr %s313, 8
      %s315 = scalar_lea.vmem %s5, %s314
      %p316 = pneg %p181
      %p317 = pneg %p178
      %p318 = pneg %p211
      %p319 = pneg %p208
      %s320 = smul.u32 16, %s23
      %p321 = scmp.lt.s32.totalorder %s22, 1
      %s322 = scalar_select %p321, %s22, 1
      %p323 = scmp.lt.s32.totalorder %s320, 15
      %s324 = scalar_select %p323, %s320, 15
      %p325 = scmp.lt.s32.totalorder %s24, 0
      %s326 = scalar_select %p325, %s24, 0
      %s327 = smul.addr %s324, 2
      %s328 = sadd.s32 %s326, %s327
      %s329 = smul.addr %s322, 32
      %s330 = sadd.s32 %s328, %s329
      %s331 = smul.addr %s330, 8
      %s332 = scalar_lea.vmem %s6, %s331
      %p333 = scmp.lt.s32.totalorder %s22, 1
      %s334 = scalar_select %p333, %s22, 1
      %s335 = smul.addr %s334, 32
      %s336 = smul.addr %s335, 8
      %s337 = scalar_lea.vmem %s0, %s336
      %p338 = scmp.lt.s32.totalorder %s24, 0
      %s339 = scalar_select %p338, %s24, 0
      %s340 = smul.addr %s339, 8
      %s341 = scalar_lea.vmem %s1, %s340
      %p342 = scmp.lt.s32.totalorder %s24, 0
      %s343 = scalar_select %p342, %s24, 0
      %s344 = scalar_lea.vmem %s2, %s343
      %s345 = smul.u32 16, %s23
      %p346 = scmp.lt.s32.totalorder %s22, 1
      %s347 = scalar_select %p346, %s22, 1
      %p348 = scmp.lt.s32.totalorder %s345, 15
      %s349 = scalar_select %p348, %s345, 15
      %p350 = scmp.lt.s32.totalorder %s24, 0
      %s351 = scalar_select %p350, %s24, 0
      %s352 = smul.addr %s349, 2
      %s353 = sadd.s32 %s351, %s352
      %s354 = smul.addr %s347, 32
      %s355 = sadd.s32 %s353, %s354
      %s356 = smul.addr %s355, 8
      %s357 = scalar_lea.vmem %s5, %s356
      %s358 = smul.u32 16, %s23
      %s359 = smul.u32 16, %s23
      %p360 = scmp.lt.s32.totalorder %s22, 1
      %s361 = scalar_select %p360, %s22, 1
      %p362 = scmp.lt.s32.totalorder %s359, 15
      %s363 = scalar_select %p362, %s359, 15
      %p364 = scmp.lt.s32.totalorder %s24, 0
      %s365 = scalar_select %p364, %s24, 0
      %s366 = smul.addr %s363, 2
      %s367 = sadd.s32 %s365, %s366
      %s368 = smul.addr %s361, 32
      %s369 = sadd.s32 %s367, %s368
      %s370 = smul.addr %s369, 8
      %s371 = scalar_lea.vmem %s6, %s370
      %s372 = smul.u32 16, %s23
      %s373 = smul.u32 %s23, 16
      %s374 = smul.u32 %s373, 16
      %s375 = scalar_lea.vmem %s337, %s374
      %v376 = vld [vmem:[%s375] sm:$0xff]
      %v377 = vld [vmem:[%s375 + $0x8] sm:$0xff]
      %v378 = vld [vmem:[%s375 + $0x10] sm:$0xff]
      %v379 = vld [vmem:[%s375 + $0x18] sm:$0xff]
      %v380 = vld [vmem:[%s375 + $0x20] sm:$0xff]
      %v381 = vld [vmem:[%s375 + $0x28] sm:$0xff]
      %v382 = vld [vmem:[%s375 + $0x30] sm:$0xff]
      %v383 = vld [vmem:[%s375 + $0x38] sm:$0xff]
      %v384 = vld [vmem:[%s375 + $0x40] sm:$0xff]
      %v385 = vld [vmem:[%s375 + $0x48] sm:$0xff]
      %v386 = vld [vmem:[%s375 + $0x50] sm:$0xff]
      %v387 = vld [vmem:[%s375 + $0x58] sm:$0xff]
      %v388 = vld [vmem:[%s375 + $0x60] sm:$0xff]
      %v389 = vld [vmem:[%s375 + $0x68] sm:$0xff]
      %v390 = vld [vmem:[%s375 + $0x70] sm:$0xff]
      %v391 = vld [vmem:[%s375 + $0x78] sm:$0xff]
      %v392 = vld [vmem:[%s375 + $0x80] sm:$0xff]
      %v393 = vld [vmem:[%s375 + $0x88] sm:$0xff]
      %v394 = vld [vmem:[%s375 + $0x90] sm:$0xff]
      %v395 = vld [vmem:[%s375 + $0x98] sm:$0xff]
      %v396 = vld [vmem:[%s375 + $0xa0] sm:$0xff]
      %v397 = vld [vmem:[%s375 + $0xa8] sm:$0xff]
      %v398 = vld [vmem:[%s375 + $0xb0] sm:$0xff]
      %v399 = vld [vmem:[%s375 + $0xb8] sm:$0xff]
      %v400 = vld [vmem:[%s375 + $0xc0] sm:$0xff]
      %v401 = vld [vmem:[%s375 + $0xc8] sm:$0xff]
      %v402 = vld [vmem:[%s375 + $0xd0] sm:$0xff]
      %v403 = vld [vmem:[%s375 + $0xd8] sm:$0xff]
      %v404 = vld [vmem:[%s375 + $0xe0] sm:$0xff]
      %v405 = vld [vmem:[%s375 + $0xe8] sm:$0xff]
      %v406 = vld [vmem:[%s375 + $0xf0] sm:$0xff]
      %v407 = vld [vmem:[%s375 + $0xf8] sm:$0xff]
      %v408 = vld [vmem:[%s3] sm:$0x1]
      %v410 = vlaneseq
      %v411 = vshrl.u32 %v410, 7
      %v412 = vsub.s32 0, %v411
      %v413 = vrot.slane %v408, %v412
      %v415 = vmul.f32 %v376, %v413
      %v416 = vmul.f32 %v377, %v413
      %v417 = vmul.f32 %v378, %v413
      %v418 = vmul.f32 %v379, %v413
      %v419 = vmul.f32 %v380, %v413
      %v420 = vmul.f32 %v381, %v413
      %v421 = vmul.f32 %v382, %v413
      %v422 = vmul.f32 %v383, %v413
      %v423 = vmul.f32 %v384, %v413
      %v424 = vmul.f32 %v385, %v413
      %v425 = vmul.f32 %v386, %v413
      %v426 = vmul.f32 %v387, %v413
      %v427 = vmul.f32 %v388, %v413
      %v428 = vmul.f32 %v389, %v413
      %v429 = vmul.f32 %v390, %v413
      %v430 = vmul.f32 %v391, %v413
      %v431 = vmul.f32 %v392, %v413
      %v432 = vmul.f32 %v393, %v413
      %v433 = vmul.f32 %v394, %v413
      %v434 = vmul.f32 %v395, %v413
      %v435 = vmul.f32 %v396, %v413
      %v436 = vmul.f32 %v397, %v413
      %v437 = vmul.f32 %v398, %v413
      %v438 = vmul.f32 %v399, %v413
      %v439 = vmul.f32 %v400, %v413
      %v440 = vmul.f32 %v401, %v413
      %v441 = vmul.f32 %v402, %v413
      %v442 = vmul.f32 %v403, %v413
      %v443 = vmul.f32 %v404, %v413
      %v444 = vmul.f32 %v405, %v413
      %v445 = vmul.f32 %v406, %v413
      %v446 = vmul.f32 %v407, %v413
      %v447 = vld [vmem:[%s4] sm:$0x1]
      %v449 = vlaneseq
      %v450 = vshrl.u32 %v449, 7
      %v451 = vsub.s32 0, %v450
      %v452 = vrot.slane %v447, %v451
      %v454 = vadd.f32 %v415, %v452
      %v455 = vadd.f32 %v416, %v452
      %v456 = vadd.f32 %v417, %v452
      %v457 = vadd.f32 %v418, %v452
      %v458 = vadd.f32 %v419, %v452
      %v459 = vadd.f32 %v420, %v452
      %v460 = vadd.f32 %v421, %v452
      %v461 = vadd.f32 %v422, %v452
      %v462 = vadd.f32 %v423, %v452
      %v463 = vadd.f32 %v424, %v452
      %v464 = vadd.f32 %v425, %v452
      %v465 = vadd.f32 %v426, %v452
      %v466 = vadd.f32 %v427, %v452
      %v467 = vadd.f32 %v428, %v452
      %v468 = vadd.f32 %v429, %v452
      %v469 = vadd.f32 %v430, %v452
      %v470 = vadd.f32 %v431, %v452
      %v471 = vadd.f32 %v432, %v452
      %v472 = vadd.f32 %v433, %v452
      %v473 = vadd.f32 %v434, %v452
      %v474 = vadd.f32 %v435, %v452
      %v475 = vadd.f32 %v436, %v452
      %v476 = vadd.f32 %v437, %v452
      %v477 = vadd.f32 %v438, %v452
      %v478 = vadd.f32 %v439, %v452
      %v479 = vadd.f32 %v440, %v452
      %v480 = vadd.f32 %v441, %v452
      %v481 = vadd.f32 %v442, %v452
      %v482 = vadd.f32 %v443, %v452
      %v483 = vadd.f32 %v444, %v452
      %v484 = vadd.f32 %v445, %v452
      %v485 = vadd.f32 %v446, %v452
      %v486 = vmax.f32 %v454, 0.0
      %v487 = vmax.f32 %v455, 0.0
      %v488 = vmax.f32 %v456, 0.0
      %v489 = vmax.f32 %v457, 0.0
      %v490 = vmax.f32 %v458, 0.0
      %v491 = vmax.f32 %v459, 0.0
      %v492 = vmax.f32 %v460, 0.0
      %v493 = vmax.f32 %v461, 0.0
      %v494 = vmax.f32 %v462, 0.0
      %v495 = vmax.f32 %v463, 0.0
      %v496 = vmax.f32 %v464, 0.0
      %v497 = vmax.f32 %v465, 0.0
      %v498 = vmax.f32 %v466, 0.0
      %v499 = vmax.f32 %v467, 0.0
      %v500 = vmax.f32 %v468, 0.0
      %v501 = vmax.f32 %v469, 0.0
      %v502 = vmax.f32 %v470, 0.0
      %v503 = vmax.f32 %v471, 0.0
      %v504 = vmax.f32 %v472, 0.0
      %v505 = vmax.f32 %v473, 0.0
      %v506 = vmax.f32 %v474, 0.0
      %v507 = vmax.f32 %v475, 0.0
      %v508 = vmax.f32 %v476, 0.0
      %v509 = vmax.f32 %v477, 0.0
      %v510 = vmax.f32 %v478, 0.0
      %v511 = vmax.f32 %v479, 0.0
      %v512 = vmax.f32 %v480, 0.0
      %v513 = vmax.f32 %v481, 0.0
      %v514 = vmax.f32 %v482, 0.0
      %v515 = vmax.f32 %v483, 0.0
      %v516 = vmax.f32 %v484, 0.0
      %v517 = vmax.f32 %v485, 0.0
      %s518 = ssub.s32 %s373, 1
      %p519 = scmp.gt.s32.totalorder %s518, 0
      %s520 = scalar_select %p519, %s518, 0
      %s521 = smul.u32 %s520, 16
      %s522 = scalar_lea.vmem %s337, %s521
      %v523 = vld [vmem:[%s522] sm:$0xff]
      %v524 = vld [vmem:[%s522 + $0x8] sm:$0xff]
      %v525 = vmul.f32 %v523, %v413
      %v526 = vmul.f32 %v524, %v413
      %v527 = vadd.f32 %v525, %v452
      %v528 = vadd.f32 %v526, %v452
      %v529 = vmax.f32 %v527, 0.0
      %v530 = vmax.f32 %v528, 0.0
      %p531 = scmp.gt.s32.totalorder %s23, 0
      %s532 = scalar_select %p531, 1, 0
      %v533 = vstv %s532
      %vm534 = vcmp.eq.s32.totalorder %v533, 1
      %v535 = vsel %vm534, %v529, 0.0
      %v536 = vsel %vm534, %v530, 0.0
      %s537 = sadd.s32 %s373, 16
      %p538 = scmp.lt.s32.totalorder %s537, 15
      %s539 = scalar_select %p538, %s537, 15
      %s540 = smul.u32 %s539, 16
      %s541 = scalar_lea.vmem %s337, %s540
      %v542 = vld [vmem:[%s541] sm:$0xff]
      %v543 = vld [vmem:[%s541 + $0x8] sm:$0xff]
      %v544 = vmul.f32 %v542, %v413
      %v545 = vmul.f32 %v543, %v413
      %v546 = vadd.f32 %v544, %v452
      %v547 = vadd.f32 %v545, %v452
      %v548 = vmax.f32 %v546, 0.0
      %v549 = vmax.f32 %v547, 0.0
      %p550 = scmp.eq.s32.totalorder %s23, 0
      %s551 = scalar_select %p550, 1, 0
      %v552 = vstv %s551
      %vm553 = vcmp.eq.s32.totalorder %v552, 1
      %v554 = vsel %vm553, 0.0, %v548
      %v555 = vsel %vm553, 0.0, %v549
      %vm592 = vcmask 1040384
      %v593 = vrot.slane %v535, 7
      %v594 = vrot.slane %v536, 7
      %v595 = vsel %vm592, %v593, %v594
      %v596 = vrot.slane %v486, 7
      %v597 = vrot.slane %v487, 7
      %v598 = vsel %vm592, %v596, %v597
      %v599 = vrot.slane %v488, 7
      %v600 = vrot.slane %v489, 7
      %v601 = vsel %vm592, %v599, %v600
      %v602 = vrot.slane %v490, 7
      %v603 = vrot.slane %v491, 7
      %v604 = vsel %vm592, %v602, %v603
      %v605 = vrot.slane %v492, 7
      %v606 = vrot.slane %v493, 7
      %v607 = vsel %vm592, %v605, %v606
      %v608 = vrot.slane %v494, 7
      %v609 = vrot.slane %v495, 7
      %v610 = vsel %vm592, %v608, %v609
      %v611 = vrot.slane %v496, 7
      %v612 = vrot.slane %v497, 7
      %v613 = vsel %vm592, %v611, %v612
      %v614 = vrot.slane %v498, 7
      %v615 = vrot.slane %v499, 7
      %v616 = vsel %vm592, %v614, %v615
      %v617 = vrot.slane %v500, 7
      %v618 = vrot.slane %v501, 7
      %v619 = vsel %vm592, %v617, %v618
      %v620 = vrot.slane %v502, 7
      %v621 = vrot.slane %v503, 7
      %v622 = vsel %vm592, %v620, %v621
      %v623 = vrot.slane %v504, 7
      %v624 = vrot.slane %v505, 7
      %v625 = vsel %vm592, %v623, %v624
      %v626 = vrot.slane %v506, 7
      %v627 = vrot.slane %v507, 7
      %v628 = vsel %vm592, %v626, %v627
      %v629 = vrot.slane %v508, 7
      %v630 = vrot.slane %v509, 7
      %v631 = vsel %vm592, %v629, %v630
      %v632 = vrot.slane %v510, 7
      %v633 = vrot.slane %v511, 7
      %v634 = vsel %vm592, %v632, %v633
      %v635 = vrot.slane %v512, 7
      %v636 = vrot.slane %v513, 7
      %v637 = vsel %vm592, %v635, %v636
      %v638 = vrot.slane %v514, 7
      %v639 = vrot.slane %v515, 7
      %v640 = vsel %vm592, %v638, %v639
      %v641 = vrot.slane %v516, 7
      %v642 = vrot.slane %v517, 7
      %v643 = vsel %vm592, %v641, %v642
      %v644 = vrot.slane %v554, 7
      %v645 = vrot.slane %v555, 7
      %v646 = vsel %vm592, %v644, %v645
      %v699 = vsel %vm592, 0.0, %v593
      %v700 = vsel %vm592, 0.0, %v596
      %v701 = vsel %vm592, 0.0, %v599
      %v702 = vsel %vm592, 0.0, %v602
      %v703 = vsel %vm592, 0.0, %v605
      %v704 = vsel %vm592, 0.0, %v608
      %v705 = vsel %vm592, 0.0, %v611
      %v706 = vsel %vm592, 0.0, %v614
      %v707 = vsel %vm592, 0.0, %v617
      %v708 = vsel %vm592, 0.0, %v620
      %v709 = vsel %vm592, 0.0, %v623
      %v710 = vsel %vm592, 0.0, %v626
      %v711 = vsel %vm592, 0.0, %v629
      %v712 = vsel %vm592, 0.0, %v632
      %v713 = vsel %vm592, 0.0, %v635
      %v714 = vsel %vm592, 0.0, %v638
      %v715 = vsel %vm592, 0.0, %v641
      %v716 = vsel %vm592, 0.0, %v644
      %v717 = vsel %vm592, %v594, 0.0
      %v718 = vsel %vm592, %v597, 0.0
      %v719 = vsel %vm592, %v600, 0.0
      %v720 = vsel %vm592, %v603, 0.0
      %v721 = vsel %vm592, %v606, 0.0
      %v722 = vsel %vm592, %v609, 0.0
      %v723 = vsel %vm592, %v612, 0.0
      %v724 = vsel %vm592, %v615, 0.0
      %v725 = vsel %vm592, %v618, 0.0
      %v726 = vsel %vm592, %v621, 0.0
      %v727 = vsel %vm592, %v624, 0.0
      %v728 = vsel %vm592, %v627, 0.0
      %v729 = vsel %vm592, %v630, 0.0
      %v730 = vsel %vm592, %v633, 0.0
      %v731 = vsel %vm592, %v636, 0.0
      %v732 = vsel %vm592, %v639, 0.0
      %v733 = vsel %vm592, %v642, 0.0
      %v734 = vsel %vm592, %v645, 0.0
      %vm767 = vcmask 1046528
      %v768 = vrot.slane %v699, 1
      %v769 = vrot.slane %v595, 1
      %v770 = vsel %vm767, %v768, %v769
      %v771 = vrot.slane %v717, 1
      %v772 = vsel %vm767, %v769, %v771
      %v773 = vrot.slane %v700, 1
      %v774 = vrot.slane %v598, 1
      %v775 = vsel %vm767, %v773, %v774
      %v776 = vrot.slane %v718, 1
      %v777 = vsel %vm767, %v774, %v776
      %v778 = vrot.slane %v701, 1
      %v779 = vrot.slane %v601, 1
      %v780 = vsel %vm767, %v778, %v779
      %v781 = vrot.slane %v719, 1
      %v782 = vsel %vm767, %v779, %v781
      %v783 = vrot.slane %v702, 1
      %v784 = vrot.slane %v604, 1
      %v785 = vsel %vm767, %v783, %v784
      %v786 = vrot.slane %v720, 1
      %v787 = vsel %vm767, %v784, %v786
      %v788 = vrot.slane %v703, 1
      %v789 = vrot.slane %v607, 1
      %v790 = vsel %vm767, %v788, %v789
      %v791 = vrot.slane %v721, 1
      %v792 = vsel %vm767, %v789, %v791
      %v793 = vrot.slane %v704, 1
      %v794 = vrot.slane %v610, 1
      %v795 = vsel %vm767, %v793, %v794
      %v796 = vrot.slane %v722, 1
      %v797 = vsel %vm767, %v794, %v796
      %v798 = vrot.slane %v705, 1
      %v799 = vrot.slane %v613, 1
      %v800 = vsel %vm767, %v798, %v799
      %v801 = vrot.slane %v723, 1
      %v802 = vsel %vm767, %v799, %v801
      %v803 = vrot.slane %v706, 1
      %v804 = vrot.slane %v616, 1
      %v805 = vsel %vm767, %v803, %v804
      %v806 = vrot.slane %v724, 1
      %v807 = vsel %vm767, %v804, %v806
      %v808 = vrot.slane %v707, 1
      %v809 = vrot.slane %v619, 1
      %v810 = vsel %vm767, %v808, %v809
      %v811 = vrot.slane %v725, 1
      %v812 = vsel %vm767, %v809, %v811
      %v813 = vrot.slane %v708, 1
      %v814 = vrot.slane %v622, 1
      %v815 = vsel %vm767, %v813, %v814
      %v816 = vrot.slane %v726, 1
      %v817 = vsel %vm767, %v814, %v816
      %v818 = vrot.slane %v709, 1
      %v819 = vrot.slane %v625, 1
      %v820 = vsel %vm767, %v818, %v819
      %v821 = vrot.slane %v727, 1
      %v822 = vsel %vm767, %v819, %v821
      %v823 = vrot.slane %v710, 1
      %v824 = vrot.slane %v628, 1
      %v825 = vsel %vm767, %v823, %v824
      %v826 = vrot.slane %v728, 1
      %v827 = vsel %vm767, %v824, %v826
      %v828 = vrot.slane %v711, 1
      %v829 = vrot.slane %v631, 1
      %v830 = vsel %vm767, %v828, %v829
      %v831 = vrot.slane %v729, 1
      %v832 = vsel %vm767, %v829, %v831
      %v833 = vrot.slane %v712, 1
      %v834 = vrot.slane %v634, 1
      %v835 = vsel %vm767, %v833, %v834
      %v836 = vrot.slane %v730, 1
      %v837 = vsel %vm767, %v834, %v836
      %v838 = vrot.slane %v713, 1
      %v839 = vrot.slane %v637, 1
      %v840 = vsel %vm767, %v838, %v839
      %v841 = vrot.slane %v731, 1
      %v842 = vsel %vm767, %v839, %v841
      %v843 = vrot.slane %v714, 1
      %v844 = vrot.slane %v640, 1
      %v845 = vsel %vm767, %v843, %v844
      %v846 = vrot.slane %v732, 1
      %v847 = vsel %vm767, %v844, %v846
      %848 = vrot.lane.b32.xlu0 %v770, 8
      %v849 = vpop.permute.xlu0 %848
      %850 = vrot.lane.b32.xlu0 %v772, 8
      %v851 = vpop.permute.xlu0 %850
      %852 = vrot.lane.b32.xlu0 %v775, 8
      %v853 = vpop.permute.xlu0 %852
      %854 = vrot.lane.b32.xlu0 %v777, 8
      %v855 = vpop.permute.xlu0 %854
      %856 = vrot.lane.b32.xlu0 %v780, 8
      %v857 = vpop.permute.xlu0 %856
      %858 = vrot.lane.b32.xlu0 %v782, 8
      %v859 = vpop.permute.xlu0 %858
      %860 = vrot.lane.b32.xlu0 %v785, 8
      %v861 = vpop.permute.xlu0 %860
      %862 = vrot.lane.b32.xlu0 %v787, 8
      %v863 = vpop.permute.xlu0 %862
      %864 = vrot.lane.b32.xlu0 %v790, 8
      %v865 = vpop.permute.xlu0 %864
      %866 = vrot.lane.b32.xlu0 %v792, 8
      %v867 = vpop.permute.xlu0 %866
      %868 = vrot.lane.b32.xlu0 %v795, 8
      %v869 = vpop.permute.xlu0 %868
      %870 = vrot.lane.b32.xlu0 %v797, 8
      %v871 = vpop.permute.xlu0 %870
      %872 = vrot.lane.b32.xlu0 %v800, 8
      %v873 = vpop.permute.xlu0 %872
      %874 = vrot.lane.b32.xlu0 %v802, 8
      %v875 = vpop.permute.xlu0 %874
      %876 = vrot.lane.b32.xlu0 %v805, 8
      %v877 = vpop.permute.xlu0 %876
      %878 = vrot.lane.b32.xlu0 %v807, 8
      %v879 = vpop.permute.xlu0 %878
      %880 = vrot.lane.b32.xlu0 %v810, 8
      %v881 = vpop.permute.xlu0 %880
      %882 = vrot.lane.b32.xlu0 %v812, 8
      %v883 = vpop.permute.xlu0 %882
      %884 = vrot.lane.b32.xlu0 %v815, 8
      %v885 = vpop.permute.xlu0 %884
      %886 = vrot.lane.b32.xlu0 %v817, 8
      %v887 = vpop.permute.xlu0 %886
      %888 = vrot.lane.b32.xlu0 %v820, 8
      %v889 = vpop.permute.xlu0 %888
      %890 = vrot.lane.b32.xlu0 %v822, 8
      %v891 = vpop.permute.xlu0 %890
      %892 = vrot.lane.b32.xlu0 %v825, 8
      %v893 = vpop.permute.xlu0 %892
      %894 = vrot.lane.b32.xlu0 %v827, 8
      %v895 = vpop.permute.xlu0 %894
      %896 = vrot.lane.b32.xlu0 %v830, 8
      %v897 = vpop.permute.xlu0 %896
      %898 = vrot.lane.b32.xlu0 %v832, 8
      %v899 = vpop.permute.xlu0 %898
      %900 = vrot.lane.b32.xlu0 %v835, 8
      %v901 = vpop.permute.xlu0 %900
      %902 = vrot.lane.b32.xlu0 %v837, 8
      %v903 = vpop.permute.xlu0 %902
      %904 = vrot.lane.b32.xlu0 %v840, 8
      %v905 = vpop.permute.xlu0 %904
      %906 = vrot.lane.b32.xlu0 %v842, 8
      %v907 = vpop.permute.xlu0 %906
      %908 = vrot.lane.b32.xlu0 %v845, 8
      %v909 = vpop.permute.xlu0 %908
      %910 = vrot.lane.b32.xlu0 %v847, 8
      %v911 = vpop.permute.xlu0 %910
      %vm944 = vcmask 1045504
      %v945 = vrot.slane %v699, 2
      %v946 = vrot.slane %v595, 2
      %v947 = vsel %vm944, %v945, %v946
      %v948 = vrot.slane %v717, 2
      %v949 = vsel %vm944, %v946, %v948
      %v950 = vrot.slane %v700, 2
      %v951 = vrot.slane %v598, 2
      %v952 = vsel %vm944, %v950, %v951
      %v953 = vrot.slane %v718, 2
      %v954 = vsel %vm944, %v951, %v953
      %v955 = vrot.slane %v701, 2
      %v956 = vrot.slane %v601, 2
      %v957 = vsel %vm944, %v955, %v956
      %v958 = vrot.slane %v719, 2
      %v959 = vsel %vm944, %v956, %v958
      %v960 = vrot.slane %v702, 2
      %v961 = vrot.slane %v604, 2
      %v962 = vsel %vm944, %v960, %v961
      %v963 = vrot.slane %v720, 2
      %v964 = vsel %vm944, %v961, %v963
      %v965 = vrot.slane %v703, 2
      %v966 = vrot.slane %v607, 2
      %v967 = vsel %vm944, %v965, %v966
      %v968 = vrot.slane %v721, 2
      %v969 = vsel %vm944, %v966, %v968
      %v970 = vrot.slane %v704, 2
      %v971 = vrot.slane %v610, 2
      %v972 = vsel %vm944, %v970, %v971
      %v973 = vrot.slane %v722, 2
      %v974 = vsel %vm944, %v971, %v973
      %v975 = vrot.slane %v705, 2
      %v976 = vrot.slane %v613, 2
      %v977 = vsel %vm944, %v975, %v976
      %v978 = vrot.slane %v723, 2
      %v979 = vsel %vm944, %v976, %v978
      %v980 = vrot.slane %v706, 2
      %v981 = vrot.slane %v616, 2
      %v982 = vsel %vm944, %v980, %v981
      %v983 = vrot.slane %v724, 2
      %v984 = vsel %vm944, %v981, %v983
      %v985 = vrot.slane %v707, 2
      %v986 = vrot.slane %v619, 2
      %v987 = vsel %vm944, %v985, %v986
      %v988 = vrot.slane %v725, 2
      %v989 = vsel %vm944, %v986, %v988
      %v990 = vrot.slane %v708, 2
      %v991 = vrot.slane %v622, 2
      %v992 = vsel %vm944, %v990, %v991
      %v993 = vrot.slane %v726, 2
      %v994 = vsel %vm944, %v991, %v993
      %v995 = vrot.slane %v709, 2
      %v996 = vrot.slane %v625, 2
      %v997 = vsel %vm944, %v995, %v996
      %v998 = vrot.slane %v727, 2
      %v999 = vsel %vm944, %v996, %v998
      %v1000 = vrot.slane %v710, 2
      %v1001 = vrot.slane %v628, 2
      %v1002 = vsel %vm944, %v1000, %v1001
      %v1003 = vrot.slane %v728, 2
      %v1004 = vsel %vm944, %v1001, %v1003
      %v1005 = vrot.slane %v711, 2
      %v1006 = vrot.slane %v631, 2
      %v1007 = vsel %vm944, %v1005, %v1006
      %v1008 = vrot.slane %v729, 2
      %v1009 = vsel %vm944, %v1006, %v1008
      %v1010 = vrot.slane %v712, 2
      %v1011 = vrot.slane %v634, 2
      %v1012 = vsel %vm944, %v1010, %v1011
      %v1013 = vrot.slane %v730, 2
      %v1014 = vsel %vm944, %v1011, %v1013
      %v1015 = vrot.slane %v713, 2
      %v1016 = vrot.slane %v637, 2
      %v1017 = vsel %vm944, %v1015, %v1016
      %v1018 = vrot.slane %v731, 2
      %v1019 = vsel %vm944, %v1016, %v1018
      %v1020 = vrot.slane %v714, 2
      %v1021 = vrot.slane %v640, 2
      %v1022 = vsel %vm944, %v1020, %v1021
      %v1023 = vrot.slane %v732, 2
      %v1024 = vsel %vm944, %v1021, %v1023
      %1025 = vrot.lane.b32.xlu0 %v947, 16
      %v1026 = vpop.permute.xlu0 %1025
      %1027 = vrot.lane.b32.xlu0 %v949, 16
      %v1028 = vpop.permute.xlu0 %1027
      %1029 = vrot.lane.b32.xlu0 %v952, 16
      %v1030 = vpop.permute.xlu0 %1029
      %1031 = vrot.lane.b32.xlu0 %v954, 16
      %v1032 = vpop.permute.xlu0 %1031
      %1033 = vrot.lane.b32.xlu0 %v957, 16
      %v1034 = vpop.permute.xlu0 %1033
      %1035 = vrot.lane.b32.xlu0 %v959, 16
      %v1036 = vpop.permute.xlu0 %1035
      %1037 = vrot.lane.b32.xlu0 %v962, 16
      %v1038 = vpop.permute.xlu0 %1037
      %1039 = vrot.lane.b32.xlu0 %v964, 16
      %v1040 = vpop.permute.xlu0 %1039
      %1041 = vrot.lane.b32.xlu0 %v967, 16
      %v1042 = vpop.permute.xlu0 %1041
      %1043 = vrot.lane.b32.xlu0 %v969, 16
      %v1044 = vpop.permute.xlu0 %1043
      %1045 = vrot.lane.b32.xlu0 %v972, 16
      %v1046 = vpop.permute.xlu0 %1045
      %1047 = vrot.lane.b32.xlu0 %v974, 16
      %v1048 = vpop.permute.xlu0 %1047
      %1049 = vrot.lane.b32.xlu0 %v977, 16
      %v1050 = vpop.permute.xlu0 %1049
      %1051 = vrot.lane.b32.xlu0 %v979, 16
      %v1052 = vpop.permute.xlu0 %1051
      %1053 = vrot.lane.b32.xlu0 %v982, 16
      %v1054 = vpop.permute.xlu0 %1053
      %1055 = vrot.lane.b32.xlu0 %v984, 16
      %v1056 = vpop.permute.xlu0 %1055
      %1057 = vrot.lane.b32.xlu0 %v987, 16
      %v1058 = vpop.permute.xlu0 %1057
      %1059 = vrot.lane.b32.xlu0 %v989, 16
      %v1060 = vpop.permute.xlu0 %1059
      %1061 = vrot.lane.b32.xlu0 %v992, 16
      %v1062 = vpop.permute.xlu0 %1061
      %1063 = vrot.lane.b32.xlu0 %v994, 16
      %v1064 = vpop.permute.xlu0 %1063
      %1065 = vrot.lane.b32.xlu0 %v997, 16
      %v1066 = vpop.permute.xlu0 %1065
      %1067 = vrot.lane.b32.xlu0 %v999, 16
      %v1068 = vpop.permute.xlu0 %1067
      %1069 = vrot.lane.b32.xlu0 %v1002, 16
      %v1070 = vpop.permute.xlu0 %1069
      %1071 = vrot.lane.b32.xlu0 %v1004, 16
      %v1072 = vpop.permute.xlu0 %1071
      %1073 = vrot.lane.b32.xlu0 %v1007, 16
      %v1074 = vpop.permute.xlu0 %1073
      %1075 = vrot.lane.b32.xlu0 %v1009, 16
      %v1076 = vpop.permute.xlu0 %1075
      %1077 = vrot.lane.b32.xlu0 %v1012, 16
      %v1078 = vpop.permute.xlu0 %1077
      %1079 = vrot.lane.b32.xlu0 %v1014, 16
      %v1080 = vpop.permute.xlu0 %1079
      %1081 = vrot.lane.b32.xlu0 %v1017, 16
      %v1082 = vpop.permute.xlu0 %1081
      %1083 = vrot.lane.b32.xlu0 %v1019, 16
      %v1084 = vpop.permute.xlu0 %1083
      %1085 = vrot.lane.b32.xlu0 %v1022, 16
      %v1086 = vpop.permute.xlu0 %1085
      %1087 = vrot.lane.b32.xlu0 %v1024, 16
      %v1088 = vpop.permute.xlu0 %1087
      %1122 = vrot.lane.b32.xlu0 %v700, 24
      %v1123 = vpop.permute.xlu0 %1122
      %1124 = vrot.lane.b32.xlu0 %v598, 24
      %v1125 = vpop.permute.xlu0 %1124
      %1126 = vrot.lane.b32.xlu0 %v701, 24
      %v1127 = vpop.permute.xlu0 %1126
      %1128 = vrot.lane.b32.xlu0 %v601, 24
      %v1129 = vpop.permute.xlu0 %1128
      %1130 = vrot.lane.b32.xlu0 %v702, 24
      %v1131 = vpop.permute.xlu0 %1130
      %1132 = vrot.lane.b32.xlu0 %v604, 24
      %v1133 = vpop.permute.xlu0 %1132
      %1134 = vrot.lane.b32.xlu0 %v703, 24
      %v1135 = vpop.permute.xlu0 %1134
      %1136 = vrot.lane.b32.xlu0 %v607, 24
      %v1137 = vpop.permute.xlu0 %1136
      %1138 = vrot.lane.b32.xlu0 %v704, 24
      %v1139 = vpop.permute.xlu0 %1138
      %1140 = vrot.lane.b32.xlu0 %v610, 24
      %v1141 = vpop.permute.xlu0 %1140
      %1142 = vrot.lane.b32.xlu0 %v705, 24
      %v1143 = vpop.permute.xlu0 %1142
      %1144 = vrot.lane.b32.xlu0 %v613, 24
      %v1145 = vpop.permute.xlu0 %1144
      %1146 = vrot.lane.b32.xlu0 %v706, 24
      %v1147 = vpop.permute.xlu0 %1146
      %1148 = vrot.lane.b32.xlu0 %v616, 24
      %v1149 = vpop.permute.xlu0 %1148
      %1150 = vrot.lane.b32.xlu0 %v707, 24
      %v1151 = vpop.permute.xlu0 %1150
      %1152 = vrot.lane.b32.xlu0 %v619, 24
      %v1153 = vpop.permute.xlu0 %1152
      %1154 = vrot.lane.b32.xlu0 %v708, 24
      %v1155 = vpop.permute.xlu0 %1154
      %1156 = vrot.lane.b32.xlu0 %v622, 24
      %v1157 = vpop.permute.xlu0 %1156
      %1158 = vrot.lane.b32.xlu0 %v709, 24
      %v1159 = vpop.permute.xlu0 %1158
      %1160 = vrot.lane.b32.xlu0 %v625, 24
      %v1161 = vpop.permute.xlu0 %1160
      %1162 = vrot.lane.b32.xlu0 %v710, 24
      %v1163 = vpop.permute.xlu0 %1162
      %1164 = vrot.lane.b32.xlu0 %v628, 24
      %v1165 = vpop.permute.xlu0 %1164
      %1166 = vrot.lane.b32.xlu0 %v711, 24
      %v1167 = vpop.permute.xlu0 %1166
      %1168 = vrot.lane.b32.xlu0 %v631, 24
      %v1169 = vpop.permute.xlu0 %1168
      %1170 = vrot.lane.b32.xlu0 %v712, 24
      %v1171 = vpop.permute.xlu0 %1170
      %1172 = vrot.lane.b32.xlu0 %v634, 24
      %v1173 = vpop.permute.xlu0 %1172
      %1174 = vrot.lane.b32.xlu0 %v713, 24
      %v1175 = vpop.permute.xlu0 %1174
      %1176 = vrot.lane.b32.xlu0 %v637, 24
      %v1177 = vpop.permute.xlu0 %1176
      %1178 = vrot.lane.b32.xlu0 %v714, 24
      %v1179 = vpop.permute.xlu0 %1178
      %1180 = vrot.lane.b32.xlu0 %v640, 24
      %v1181 = vpop.permute.xlu0 %1180
      %1182 = vrot.lane.b32.xlu0 %v715, 24
      %v1183 = vpop.permute.xlu0 %1182
      %1184 = vrot.lane.b32.xlu0 %v643, 24
      %v1185 = vpop.permute.xlu0 %1184
      %v1219 = vrot.slane %v715, 1
      %v1220 = vrot.slane %v643, 1
      %v1221 = vsel %vm767, %v1219, %v1220
      %v1222 = vrot.slane %v733, 1
      %v1223 = vsel %vm767, %v1220, %v1222
      %1224 = vrot.lane.b32.xlu0 %v775, 32
      %v1225 = vpop.permute.xlu0 %1224
      %1226 = vrot.lane.b32.xlu0 %v777, 32
      %v1227 = vpop.permute.xlu0 %1226
      %1228 = vrot.lane.b32.xlu0 %v780, 32
      %v1229 = vpop.permute.xlu0 %1228
      %1230 = vrot.lane.b32.xlu0 %v782, 32
      %v1231 = vpop.permute.xlu0 %1230
      %1232 = vrot.lane.b32.xlu0 %v785, 32
      %v1233 = vpop.permute.xlu0 %1232
      %1234 = vrot.lane.b32.xlu0 %v787, 32
      %v1235 = vpop.permute.xlu0 %1234
      %1236 = vrot.lane.b32.xlu0 %v790, 32
      %v1237 = vpop.permute.xlu0 %1236
      %1238 = vrot.lane.b32.xlu0 %v792, 32
      %v1239 = vpop.permute.xlu0 %1238
      %1240 = vrot.lane.b32.xlu0 %v795, 32
      %v1241 = vpop.permute.xlu0 %1240
      %1242 = vrot.lane.b32.xlu0 %v797, 32
      %v1243 = vpop.permute.xlu0 %1242
      %1244 = vrot.lane.b32.xlu0 %v800, 32
      %v1245 = vpop.permute.xlu0 %1244
      %1246 = vrot.lane.b32.xlu0 %v802, 32
      %v1247 = vpop.permute.xlu0 %1246
      %1248 = vrot.lane.b32.xlu0 %v805, 32
      %v1249 = vpop.permute.xlu0 %1248
      %1250 = vrot.lane.b32.xlu0 %v807, 32
      %v1251 = vpop.permute.xlu0 %1250
      %1252 = vrot.lane.b32.xlu0 %v810, 32
      %v1253 = vpop.permute.xlu0 %1252
      %1254 = vrot.lane.b32.xlu0 %v812, 32
      %v1255 = vpop.permute.xlu0 %1254
      %1256 = vrot.lane.b32.xlu0 %v815, 32
      %v1257 = vpop.permute.xlu0 %1256
      %1258 = vrot.lane.b32.xlu0 %v817, 32
      %v1259 = vpop.permute.xlu0 %1258
      %1260 = vrot.lane.b32.xlu0 %v820, 32
      %v1261 = vpop.permute.xlu0 %1260
      %1262 = vrot.lane.b32.xlu0 %v822, 32
      %v1263 = vpop.permute.xlu0 %1262
      %1264 = vrot.lane.b32.xlu0 %v825, 32
      %v1265 = vpop.permute.xlu0 %1264
      %1266 = vrot.lane.b32.xlu0 %v827, 32
      %v1267 = vpop.permute.xlu0 %1266
      %1268 = vrot.lane.b32.xlu0 %v830, 32
      %v1269 = vpop.permute.xlu0 %1268
      %1270 = vrot.lane.b32.xlu0 %v832, 32
      %v1271 = vpop.permute.xlu0 %1270
      %1272 = vrot.lane.b32.xlu0 %v835, 32
      %v1273 = vpop.permute.xlu0 %1272
      %1274 = vrot.lane.b32.xlu0 %v837, 32
      %v1275 = vpop.permute.xlu0 %1274
      %1276 = vrot.lane.b32.xlu0 %v840, 32
      %v1277 = vpop.permute.xlu0 %1276
      %1278 = vrot.lane.b32.xlu0 %v842, 32
      %v1279 = vpop.permute.xlu0 %1278
      %1280 = vrot.lane.b32.xlu0 %v845, 32
      %v1281 = vpop.permute.xlu0 %1280
      %1282 = vrot.lane.b32.xlu0 %v847, 32
      %v1283 = vpop.permute.xlu0 %1282
      %1284 = vrot.lane.b32.xlu0 %v1221, 32
      %v1285 = vpop.permute.xlu0 %1284
      %1286 = vrot.lane.b32.xlu0 %v1223, 32
      %v1287 = vpop.permute.xlu0 %1286
      %v1320 = vrot.slane %v715, 2
      %v1321 = vrot.slane %v643, 2
      %v1322 = vsel %vm944, %v1320, %v1321
      %v1323 = vrot.slane %v733, 2
      %v1324 = vsel %vm944, %v1321, %v1323
      %1325 = vrot.lane.b32.xlu0 %v952, 40
      %v1326 = vpop.permute.xlu0 %1325
      %1327 = vrot.lane.b32.xlu0 %v954, 40
      %v1328 = vpop.permute.xlu0 %1327
      %1329 = vrot.lane.b32.xlu0 %v957, 40
      %v1330 = vpop.permute.xlu0 %1329
      %1331 = vrot.lane.b32.xlu0 %v959, 40
      %v1332 = vpop.permute.xlu0 %1331
      %1333 = vrot.lane.b32.xlu0 %v962, 40
      %v1334 = vpop.permute.xlu0 %1333
      %1335 = vrot.lane.b32.xlu0 %v964, 40
      %v1336 = vpop.permute.xlu0 %1335
      %1337 = vrot.lane.b32.xlu0 %v967, 40
      %v1338 = vpop.permute.xlu0 %1337
      %1339 = vrot.lane.b32.xlu0 %v969, 40
      %v1340 = vpop.permute.xlu0 %1339
      %1341 = vrot.lane.b32.xlu0 %v972, 40
      %v1342 = vpop.permute.xlu0 %1341
      %1343 = vrot.lane.b32.xlu0 %v974, 40
      %v1344 = vpop.permute.xlu0 %1343
      %1345 = vrot.lane.b32.xlu0 %v977, 40
      %v1346 = vpop.permute.xlu0 %1345
      %1347 = vrot.lane.b32.xlu0 %v979, 40
      %v1348 = vpop.permute.xlu0 %1347
      %1349 = vrot.lane.b32.xlu0 %v982, 40
      %v1350 = vpop.permute.xlu0 %1349
      %1351 = vrot.lane.b32.xlu0 %v984, 40
      %v1352 = vpop.permute.xlu0 %1351
      %1353 = vrot.lane.b32.xlu0 %v987, 40
      %v1354 = vpop.permute.xlu0 %1353
      %1355 = vrot.lane.b32.xlu0 %v989, 40
      %v1356 = vpop.permute.xlu0 %1355
      %1357 = vrot.lane.b32.xlu0 %v992, 40
      %v1358 = vpop.permute.xlu0 %1357
      %1359 = vrot.lane.b32.xlu0 %v994, 40
      %v1360 = vpop.permute.xlu0 %1359
      %1361 = vrot.lane.b32.xlu0 %v997, 40
      %v1362 = vpop.permute.xlu0 %1361
      %1363 = vrot.lane.b32.xlu0 %v999, 40
      %v1364 = vpop.permute.xlu0 %1363
      %1365 = vrot.lane.b32.xlu0 %v1002, 40
      %v1366 = vpop.permute.xlu0 %1365
      %1367 = vrot.lane.b32.xlu0 %v1004, 40
      %v1368 = vpop.permute.xlu0 %1367
      %1369 = vrot.lane.b32.xlu0 %v1007, 40
      %v1370 = vpop.permute.xlu0 %1369
      %1371 = vrot.lane.b32.xlu0 %v1009, 40
      %v1372 = vpop.permute.xlu0 %1371
      %1373 = vrot.lane.b32.xlu0 %v1012, 40
      %v1374 = vpop.permute.xlu0 %1373
      %1375 = vrot.lane.b32.xlu0 %v1014, 40
      %v1376 = vpop.permute.xlu0 %1375
      %1377 = vrot.lane.b32.xlu0 %v1017, 40
      %v1378 = vpop.permute.xlu0 %1377
      %1379 = vrot.lane.b32.xlu0 %v1019, 40
      %v1380 = vpop.permute.xlu0 %1379
      %1381 = vrot.lane.b32.xlu0 %v1022, 40
      %v1382 = vpop.permute.xlu0 %1381
      %1383 = vrot.lane.b32.xlu0 %v1024, 40
      %v1384 = vpop.permute.xlu0 %1383
      %1385 = vrot.lane.b32.xlu0 %v1322, 40
      %v1386 = vpop.permute.xlu0 %1385
      %1387 = vrot.lane.b32.xlu0 %v1324, 40
      %v1388 = vpop.permute.xlu0 %1387
      %1422 = vrot.lane.b32.xlu0 %v701, 48
      %v1423 = vpop.permute.xlu0 %1422
      %1424 = vrot.lane.b32.xlu0 %v601, 48
      %v1425 = vpop.permute.xlu0 %1424
      %1426 = vrot.lane.b32.xlu0 %v702, 48
      %v1427 = vpop.permute.xlu0 %1426
      %1428 = vrot.lane.b32.xlu0 %v604, 48
      %v1429 = vpop.permute.xlu0 %1428
      %1430 = vrot.lane.b32.xlu0 %v703, 48
      %v1431 = vpop.permute.xlu0 %1430
      %1432 = vrot.lane.b32.xlu0 %v607, 48
      %v1433 = vpop.permute.xlu0 %1432
      %1434 = vrot.lane.b32.xlu0 %v704, 48
      %v1435 = vpop.permute.xlu0 %1434
      %1436 = vrot.lane.b32.xlu0 %v610, 48
      %v1437 = vpop.permute.xlu0 %1436
      %1438 = vrot.lane.b32.xlu0 %v705, 48
      %v1439 = vpop.permute.xlu0 %1438
      %1440 = vrot.lane.b32.xlu0 %v613, 48
      %v1441 = vpop.permute.xlu0 %1440
      %1442 = vrot.lane.b32.xlu0 %v706, 48
      %v1443 = vpop.permute.xlu0 %1442
      %1444 = vrot.lane.b32.xlu0 %v616, 48
      %v1445 = vpop.permute.xlu0 %1444
      %1446 = vrot.lane.b32.xlu0 %v707, 48
      %v1447 = vpop.permute.xlu0 %1446
      %1448 = vrot.lane.b32.xlu0 %v619, 48
      %v1449 = vpop.permute.xlu0 %1448
      %1450 = vrot.lane.b32.xlu0 %v708, 48
      %v1451 = vpop.permute.xlu0 %1450
      %1452 = vrot.lane.b32.xlu0 %v622, 48
      %v1453 = vpop.permute.xlu0 %1452
      %1454 = vrot.lane.b32.xlu0 %v709, 48
      %v1455 = vpop.permute.xlu0 %1454
      %1456 = vrot.lane.b32.xlu0 %v625, 48
      %v1457 = vpop.permute.xlu0 %1456
      %1458 = vrot.lane.b32.xlu0 %v710, 48
      %v1459 = vpop.permute.xlu0 %1458
      %1460 = vrot.lane.b32.xlu0 %v628, 48
      %v1461 = vpop.permute.xlu0 %1460
      %1462 = vrot.lane.b32.xlu0 %v711, 48
      %v1463 = vpop.permute.xlu0 %1462
      %1464 = vrot.lane.b32.xlu0 %v631, 48
      %v1465 = vpop.permute.xlu0 %1464
      %1466 = vrot.lane.b32.xlu0 %v712, 48
      %v1467 = vpop.permute.xlu0 %1466
      %1468 = vrot.lane.b32.xlu0 %v634, 48
      %v1469 = vpop.permute.xlu0 %1468
      %1470 = vrot.lane.b32.xlu0 %v713, 48
      %v1471 = vpop.permute.xlu0 %1470
      %1472 = vrot.lane.b32.xlu0 %v637, 48
      %v1473 = vpop.permute.xlu0 %1472
      %1474 = vrot.lane.b32.xlu0 %v714, 48
      %v1475 = vpop.permute.xlu0 %1474
      %1476 = vrot.lane.b32.xlu0 %v640, 48
      %v1477 = vpop.permute.xlu0 %1476
      %1478 = vrot.lane.b32.xlu0 %v715, 48
      %v1479 = vpop.permute.xlu0 %1478
      %1480 = vrot.lane.b32.xlu0 %v643, 48
      %v1481 = vpop.permute.xlu0 %1480
      %1482 = vrot.lane.b32.xlu0 %v716, 48
      %v1483 = vpop.permute.xlu0 %1482
      %1484 = vrot.lane.b32.xlu0 %v646, 48
      %v1485 = vpop.permute.xlu0 %1484
      %v1519 = vrot.slane %v716, 1
      %v1520 = vrot.slane %v646, 1
      %v1521 = vsel %vm767, %v1519, %v1520
      %v1522 = vrot.slane %v734, 1
      %v1523 = vsel %vm767, %v1520, %v1522
      %1524 = vrot.lane.b32.xlu0 %v780, 56
      %v1525 = vpop.permute.xlu0 %1524
      %1526 = vrot.lane.b32.xlu0 %v782, 56
      %v1527 = vpop.permute.xlu0 %1526
      %1528 = vrot.lane.b32.xlu0 %v785, 56
      %v1529 = vpop.permute.xlu0 %1528
      %1530 = vrot.lane.b32.xlu0 %v787, 56
      %v1531 = vpop.permute.xlu0 %1530
      %1532 = vrot.lane.b32.xlu0 %v790, 56
      %v1533 = vpop.permute.xlu0 %1532
      %1534 = vrot.lane.b32.xlu0 %v792, 56
      %v1535 = vpop.permute.xlu0 %1534
      %1536 = vrot.lane.b32.xlu0 %v795, 56
      %v1537 = vpop.permute.xlu0 %1536
      %1538 = vrot.lane.b32.xlu0 %v797, 56
      %v1539 = vpop.permute.xlu0 %1538
      %1540 = vrot.lane.b32.xlu0 %v800, 56
      %v1541 = vpop.permute.xlu0 %1540
      %1542 = vrot.lane.b32.xlu0 %v802, 56
      %v1543 = vpop.permute.xlu0 %1542
      %1544 = vrot.lane.b32.xlu0 %v805, 56
      %v1545 = vpop.permute.xlu0 %1544
      %1546 = vrot.lane.b32.xlu0 %v807, 56
      %v1547 = vpop.permute.xlu0 %1546
      %1548 = vrot.lane.b32.xlu0 %v810, 56
      %v1549 = vpop.permute.xlu0 %1548
      %1550 = vrot.lane.b32.xlu0 %v812, 56
      %v1551 = vpop.permute.xlu0 %1550
      %1552 = vrot.lane.b32.xlu0 %v815, 56
      %v1553 = vpop.permute.xlu0 %1552
      %1554 = vrot.lane.b32.xlu0 %v817, 56
      %v1555 = vpop.permute.xlu0 %1554
      %1556 = vrot.lane.b32.xlu0 %v820, 56
      %v1557 = vpop.permute.xlu0 %1556
      %1558 = vrot.lane.b32.xlu0 %v822, 56
      %v1559 = vpop.permute.xlu0 %1558
      %1560 = vrot.lane.b32.xlu0 %v825, 56
      %v1561 = vpop.permute.xlu0 %1560
      %1562 = vrot.lane.b32.xlu0 %v827, 56
      %v1563 = vpop.permute.xlu0 %1562
      %1564 = vrot.lane.b32.xlu0 %v830, 56
      %v1565 = vpop.permute.xlu0 %1564
      %1566 = vrot.lane.b32.xlu0 %v832, 56
      %v1567 = vpop.permute.xlu0 %1566
      %1568 = vrot.lane.b32.xlu0 %v835, 56
      %v1569 = vpop.permute.xlu0 %1568
      %1570 = vrot.lane.b32.xlu0 %v837, 56
      %v1571 = vpop.permute.xlu0 %1570
      %1572 = vrot.lane.b32.xlu0 %v840, 56
      %v1573 = vpop.permute.xlu0 %1572
      %1574 = vrot.lane.b32.xlu0 %v842, 56
      %v1575 = vpop.permute.xlu0 %1574
      %1576 = vrot.lane.b32.xlu0 %v845, 56
      %v1577 = vpop.permute.xlu0 %1576
      %1578 = vrot.lane.b32.xlu0 %v847, 56
      %v1579 = vpop.permute.xlu0 %1578
      %1580 = vrot.lane.b32.xlu0 %v1221, 56
      %v1581 = vpop.permute.xlu0 %1580
      %1582 = vrot.lane.b32.xlu0 %v1223, 56
      %v1583 = vpop.permute.xlu0 %1582
      %1584 = vrot.lane.b32.xlu0 %v1521, 56
      %v1585 = vpop.permute.xlu0 %1584
      %1586 = vrot.lane.b32.xlu0 %v1523, 56
      %v1587 = vpop.permute.xlu0 %1586
      %v1620 = vrot.slane %v716, 2
      %v1621 = vrot.slane %v646, 2
      %v1622 = vsel %vm944, %v1620, %v1621
      %v1623 = vrot.slane %v734, 2
      %v1624 = vsel %vm944, %v1621, %v1623
      %1625 = vrot.lane.b32.xlu0 %v957, 64
      %v1626 = vpop.permute.xlu0 %1625
      %1627 = vrot.lane.b32.xlu0 %v959, 64
      %v1628 = vpop.permute.xlu0 %1627
      %1629 = vrot.lane.b32.xlu0 %v962, 64
      %v1630 = vpop.permute.xlu0 %1629
      %1631 = vrot.lane.b32.xlu0 %v964, 64
      %v1632 = vpop.permute.xlu0 %1631
      %1633 = vrot.lane.b32.xlu0 %v967, 64
      %v1634 = vpop.permute.xlu0 %1633
      %1635 = vrot.lane.b32.xlu0 %v969, 64
      %v1636 = vpop.permute.xlu0 %1635
      %1637 = vrot.lane.b32.xlu0 %v972, 64
      %v1638 = vpop.permute.xlu0 %1637
      %1639 = vrot.lane.b32.xlu0 %v974, 64
      %v1640 = vpop.permute.xlu0 %1639
      %1641 = vrot.lane.b32.xlu0 %v977, 64
      %v1642 = vpop.permute.xlu0 %1641
      %1643 = vrot.lane.b32.xlu0 %v979, 64
      %v1644 = vpop.permute.xlu0 %1643
      %1645 = vrot.lane.b32.xlu0 %v982, 64
      %v1646 = vpop.permute.xlu0 %1645
      %1647 = vrot.lane.b32.xlu0 %v984, 64
      %v1648 = vpop.permute.xlu0 %1647
      %1649 = vrot.lane.b32.xlu0 %v987, 64
      %v1650 = vpop.permute.xlu0 %1649
      %1651 = vrot.lane.b32.xlu0 %v989, 64
      %v1652 = vpop.permute.xlu0 %1651
      %1653 = vrot.lane.b32.xlu0 %v992, 64
      %v1654 = vpop.permute.xlu0 %1653
      %1655 = vrot.lane.b32.xlu0 %v994, 64
      %v1656 = vpop.permute.xlu0 %1655
      %1657 = vrot.lane.b32.xlu0 %v997, 64
      %v1658 = vpop.permute.xlu0 %1657
      %1659 = vrot.lane.b32.xlu0 %v999, 64
      %v1660 = vpop.permute.xlu0 %1659
      %1661 = vrot.lane.b32.xlu0 %v1002, 64
      %v1662 = vpop.permute.xlu0 %1661
      %1663 = vrot.lane.b32.xlu0 %v1004, 64
      %v1664 = vpop.permute.xlu0 %1663
      %1665 = vrot.lane.b32.xlu0 %v1007, 64
      %v1666 = vpop.permute.xlu0 %1665
      %1667 = vrot.lane.b32.xlu0 %v1009, 64
      %v1668 = vpop.permute.xlu0 %1667
      %1669 = vrot.lane.b32.xlu0 %v1012, 64
      %v1670 = vpop.permute.xlu0 %1669
      %1671 = vrot.lane.b32.xlu0 %v1014, 64
      %v1672 = vpop.permute.xlu0 %1671
      %1673 = vrot.lane.b32.xlu0 %v1017, 64
      %v1674 = vpop.permute.xlu0 %1673
      %1675 = vrot.lane.b32.xlu0 %v1019, 64
      %v1676 = vpop.permute.xlu0 %1675
      %1677 = vrot.lane.b32.xlu0 %v1022, 64
      %v1678 = vpop.permute.xlu0 %1677
      %1679 = vrot.lane.b32.xlu0 %v1024, 64
      %v1680 = vpop.permute.xlu0 %1679
      %1681 = vrot.lane.b32.xlu0 %v1322, 64
      %v1682 = vpop.permute.xlu0 %1681
      %1683 = vrot.lane.b32.xlu0 %v1324, 64
      %v1684 = vpop.permute.xlu0 %1683
      %1685 = vrot.lane.b32.xlu0 %v1622, 64
      %v1686 = vpop.permute.xlu0 %1685
      %1687 = vrot.lane.b32.xlu0 %v1624, 64
      %v1688 = vpop.permute.xlu0 %1687
      %vm1721 = vcmask 64512
      %v1722 = vsel %vm1721, %v699, %v849
      %v1723 = vsel %vm1721, %v595, %v851
      %v1724 = vsel %vm1721, %v700, %v853
      %v1725 = vsel %vm1721, %v598, %v855
      %v1726 = vsel %vm1721, %v701, %v857
      %v1727 = vsel %vm1721, %v601, %v859
      %v1728 = vsel %vm1721, %v702, %v861
      %v1729 = vsel %vm1721, %v604, %v863
      %v1730 = vsel %vm1721, %v703, %v865
      %v1731 = vsel %vm1721, %v607, %v867
      %v1732 = vsel %vm1721, %v704, %v869
      %v1733 = vsel %vm1721, %v610, %v871
      %v1734 = vsel %vm1721, %v705, %v873
      %v1735 = vsel %vm1721, %v613, %v875
      %v1736 = vsel %vm1721, %v706, %v877
      %v1737 = vsel %vm1721, %v616, %v879
      %v1738 = vsel %vm1721, %v707, %v881
      %v1739 = vsel %vm1721, %v619, %v883
      %v1740 = vsel %vm1721, %v708, %v885
      %v1741 = vsel %vm1721, %v622, %v887
      %v1742 = vsel %vm1721, %v709, %v889
      %v1743 = vsel %vm1721, %v625, %v891
      %v1744 = vsel %vm1721, %v710, %v893
      %v1745 = vsel %vm1721, %v628, %v895
      %v1746 = vsel %vm1721, %v711, %v897
      %v1747 = vsel %vm1721, %v631, %v899
      %v1748 = vsel %vm1721, %v712, %v901
      %v1749 = vsel %vm1721, %v634, %v903
      %v1750 = vsel %vm1721, %v713, %v905
      %v1751 = vsel %vm1721, %v637, %v907
      %v1752 = vsel %vm1721, %v714, %v909
      %v1753 = vsel %vm1721, %v640, %v911
      %vm1754 = vcmask 130048
      %v1755 = vsel %vm1754, %v1722, %v1026
      %v1756 = vsel %vm1754, %v1723, %v1028
      %v1757 = vsel %vm1754, %v1724, %v1030
      %v1758 = vsel %vm1754, %v1725, %v1032
      %v1759 = vsel %vm1754, %v1726, %v1034
      %v1760 = vsel %vm1754, %v1727, %v1036
      %v1761 = vsel %vm1754, %v1728, %v1038
      %v1762 = vsel %vm1754, %v1729, %v1040
      %v1763 = vsel %vm1754, %v1730, %v1042
      %v1764 = vsel %vm1754, %v1731, %v1044
      %v1765 = vsel %vm1754, %v1732, %v1046
      %v1766 = vsel %vm1754, %v1733, %v1048
      %v1767 = vsel %vm1754, %v1734, %v1050
      %v1768 = vsel %vm1754, %v1735, %v1052
      %v1769 = vsel %vm1754, %v1736, %v1054
      %v1770 = vsel %vm1754, %v1737, %v1056
      %v1771 = vsel %vm1754, %v1738, %v1058
      %v1772 = vsel %vm1754, %v1739, %v1060
      %v1773 = vsel %vm1754, %v1740, %v1062
      %v1774 = vsel %vm1754, %v1741, %v1064
      %v1775 = vsel %vm1754, %v1742, %v1066
      %v1776 = vsel %vm1754, %v1743, %v1068
      %v1777 = vsel %vm1754, %v1744, %v1070
      %v1778 = vsel %vm1754, %v1745, %v1072
      %v1779 = vsel %vm1754, %v1746, %v1074
      %v1780 = vsel %vm1754, %v1747, %v1076
      %v1781 = vsel %vm1754, %v1748, %v1078
      %v1782 = vsel %vm1754, %v1749, %v1080
      %v1783 = vsel %vm1754, %v1750, %v1082
      %v1784 = vsel %vm1754, %v1751, %v1084
      %v1785 = vsel %vm1754, %v1752, %v1086
      %v1786 = vsel %vm1754, %v1753, %v1088
      %vm1787 = vcmask 195584
      %v1788 = vsel %vm1787, %v1755, %v1123
      %v1789 = vsel %vm1787, %v1756, %v1125
      %v1790 = vsel %vm1787, %v1757, %v1127
      %v1791 = vsel %vm1787, %v1758, %v1129
      %v1792 = vsel %vm1787, %v1759, %v1131
      %v1793 = vsel %vm1787, %v1760, %v1133
      %v1794 = vsel %vm1787, %v1761, %v1135
      %v1795 = vsel %vm1787, %v1762, %v1137
      %v1796 = vsel %vm1787, %v1763, %v1139
      %v1797 = vsel %vm1787, %v1764, %v1141
      %v1798 = vsel %vm1787, %v1765, %v1143
      %v1799 = vsel %vm1787, %v1766, %v1145
      %v1800 = vsel %vm1787, %v1767, %v1147
      %v1801 = vsel %vm1787, %v1768, %v1149
      %v1802 = vsel %vm1787, %v1769, %v1151
      %v1803 = vsel %vm1787, %v1770, %v1153
      %v1804 = vsel %vm1787, %v1771, %v1155
      %v1805 = vsel %vm1787, %v1772, %v1157
      %v1806 = vsel %vm1787, %v1773, %v1159
      %v1807 = vsel %vm1787, %v1774, %v1161
      %v1808 = vsel %vm1787, %v1775, %v1163
      %v1809 = vsel %vm1787, %v1776, %v1165
      %v1810 = vsel %vm1787, %v1777, %v1167
      %v1811 = vsel %vm1787, %v1778, %v1169
      %v1812 = vsel %vm1787, %v1779, %v1171
      %v1813 = vsel %vm1787, %v1780, %v1173
      %v1814 = vsel %vm1787, %v1781, %v1175
      %v1815 = vsel %vm1787, %v1782, %v1177
      %v1816 = vsel %vm1787, %v1783, %v1179
      %v1817 = vsel %vm1787, %v1784, %v1181
      %v1818 = vsel %vm1787, %v1785, %v1183
      %v1819 = vsel %vm1787, %v1786, %v1185
      %vm1820 = vcmask 261120
      %v1821 = vsel %vm1820, %v1788, %v1225
      %v1822 = vsel %vm1820, %v1789, %v1227
      %v1823 = vsel %vm1820, %v1790, %v1229
      %v1824 = vsel %vm1820, %v1791, %v1231
      %v1825 = vsel %vm1820, %v1792, %v1233
      %v1826 = vsel %vm1820, %v1793, %v1235
      %v1827 = vsel %vm1820, %v1794, %v1237
      %v1828 = vsel %vm1820, %v1795, %v1239
      %v1829 = vsel %vm1820, %v1796, %v1241
      %v1830 = vsel %vm1820, %v1797, %v1243
      %v1831 = vsel %vm1820, %v1798, %v1245
      %v1832 = vsel %vm1820, %v1799, %v1247
      %v1833 = vsel %vm1820, %v1800, %v1249
      %v1834 = vsel %vm1820, %v1801, %v1251
      %v1835 = vsel %vm1820, %v1802, %v1253
      %v1836 = vsel %vm1820, %v1803, %v1255
      %v1837 = vsel %vm1820, %v1804, %v1257
      %v1838 = vsel %vm1820, %v1805, %v1259
      %v1839 = vsel %vm1820, %v1806, %v1261
      %v1840 = vsel %vm1820, %v1807, %v1263
      %v1841 = vsel %vm1820, %v1808, %v1265
      %v1842 = vsel %vm1820, %v1809, %v1267
      %v1843 = vsel %vm1820, %v1810, %v1269
      %v1844 = vsel %vm1820, %v1811, %v1271
      %v1845 = vsel %vm1820, %v1812, %v1273
      %v1846 = vsel %vm1820, %v1813, %v1275
      %v1847 = vsel %vm1820, %v1814, %v1277
      %v1848 = vsel %vm1820, %v1815, %v1279
      %v1849 = vsel %vm1820, %v1816, %v1281
      %v1850 = vsel %vm1820, %v1817, %v1283
      %v1851 = vsel %vm1820, %v1818, %v1285
      %v1852 = vsel %vm1820, %v1819, %v1287
      %vm1853 = vcmask 326656
      %v1854 = vsel %vm1853, %v1821, %v1326
      %v1855 = vsel %vm1853, %v1822, %v1328
      %v1856 = vsel %vm1853, %v1823, %v1330
      %v1857 = vsel %vm1853, %v1824, %v1332
      %v1858 = vsel %vm1853, %v1825, %v1334
      %v1859 = vsel %vm1853, %v1826, %v1336
      %v1860 = vsel %vm1853, %v1827, %v1338
      %v1861 = vsel %vm1853, %v1828, %v1340
      %v1862 = vsel %vm1853, %v1829, %v1342
      %v1863 = vsel %vm1853, %v1830, %v1344
      %v1864 = vsel %vm1853, %v1831, %v1346
      %v1865 = vsel %vm1853, %v1832, %v1348
      %v1866 = vsel %vm1853, %v1833, %v1350
      %v1867 = vsel %vm1853, %v1834, %v1352
      %v1868 = vsel %vm1853, %v1835, %v1354
      %v1869 = vsel %vm1853, %v1836, %v1356
      %v1870 = vsel %vm1853, %v1837, %v1358
      %v1871 = vsel %vm1853, %v1838, %v1360
      %v1872 = vsel %vm1853, %v1839, %v1362
      %v1873 = vsel %vm1853, %v1840, %v1364
      %v1874 = vsel %vm1853, %v1841, %v1366
      %v1875 = vsel %vm1853, %v1842, %v1368
      %v1876 = vsel %vm1853, %v1843, %v1370
      %v1877 = vsel %vm1853, %v1844, %v1372
      %v1878 = vsel %vm1853, %v1845, %v1374
      %v1879 = vsel %vm1853, %v1846, %v1376
      %v1880 = vsel %vm1853, %v1847, %v1378
      %v1881 = vsel %vm1853, %v1848, %v1380
      %v1882 = vsel %vm1853, %v1849, %v1382
      %v1883 = vsel %vm1853, %v1850, %v1384
      %v1884 = vsel %vm1853, %v1851, %v1386
      %v1885 = vsel %vm1853, %v1852, %v1388
      %vm1886 = vcmask 392192
      %v1887 = vsel %vm1886, %v1854, %v1423
      %v1888 = vsel %vm1886, %v1855, %v1425
      %v1889 = vsel %vm1886, %v1856, %v1427
      %v1890 = vsel %vm1886, %v1857, %v1429
      %v1891 = vsel %vm1886, %v1858, %v1431
      %v1892 = vsel %vm1886, %v1859, %v1433
      %v1893 = vsel %vm1886, %v1860, %v1435
      %v1894 = vsel %vm1886, %v1861, %v1437
      %v1895 = vsel %vm1886, %v1862, %v1439
      %v1896 = vsel %vm1886, %v1863, %v1441
      %v1897 = vsel %vm1886, %v1864, %v1443
      %v1898 = vsel %vm1886, %v1865, %v1445
      %v1899 = vsel %vm1886, %v1866, %v1447
      %v1900 = vsel %vm1886, %v1867, %v1449
      %v1901 = vsel %vm1886, %v1868, %v1451
      %v1902 = vsel %vm1886, %v1869, %v1453
      %v1903 = vsel %vm1886, %v1870, %v1455
      %v1904 = vsel %vm1886, %v1871, %v1457
      %v1905 = vsel %vm1886, %v1872, %v1459
      %v1906 = vsel %vm1886, %v1873, %v1461
      %v1907 = vsel %vm1886, %v1874, %v1463
      %v1908 = vsel %vm1886, %v1875, %v1465
      %v1909 = vsel %vm1886, %v1876, %v1467
      %v1910 = vsel %vm1886, %v1877, %v1469
      %v1911 = vsel %vm1886, %v1878, %v1471
      %v1912 = vsel %vm1886, %v1879, %v1473
      %v1913 = vsel %vm1886, %v1880, %v1475
      %v1914 = vsel %vm1886, %v1881, %v1477
      %v1915 = vsel %vm1886, %v1882, %v1479
      %v1916 = vsel %vm1886, %v1883, %v1481
      %v1917 = vsel %vm1886, %v1884, %v1483
      %v1918 = vsel %vm1886, %v1885, %v1485
      %vm1919 = vcmask 457728
      %v1920 = vsel %vm1919, %v1887, %v1525
      %v1921 = vsel %vm1919, %v1888, %v1527
      %v1922 = vsel %vm1919, %v1889, %v1529
      %v1923 = vsel %vm1919, %v1890, %v1531
      %v1924 = vsel %vm1919, %v1891, %v1533
      %v1925 = vsel %vm1919, %v1892, %v1535
      %v1926 = vsel %vm1919, %v1893, %v1537
      %v1927 = vsel %vm1919, %v1894, %v1539
      %v1928 = vsel %vm1919, %v1895, %v1541
      %v1929 = vsel %vm1919, %v1896, %v1543
      %v1930 = vsel %vm1919, %v1897, %v1545
      %v1931 = vsel %vm1919, %v1898, %v1547
      %v1932 = vsel %vm1919, %v1899, %v1549
      %v1933 = vsel %vm1919, %v1900, %v1551
      %v1934 = vsel %vm1919, %v1901, %v1553
      %v1935 = vsel %vm1919, %v1902, %v1555
      %v1936 = vsel %vm1919, %v1903, %v1557
      %v1937 = vsel %vm1919, %v1904, %v1559
      %v1938 = vsel %vm1919, %v1905, %v1561
      %v1939 = vsel %vm1919, %v1906, %v1563
      %v1940 = vsel %vm1919, %v1907, %v1565
      %v1941 = vsel %vm1919, %v1908, %v1567
      %v1942 = vsel %vm1919, %v1909, %v1569
      %v1943 = vsel %vm1919, %v1910, %v1571
      %v1944 = vsel %vm1919, %v1911, %v1573
      %v1945 = vsel %vm1919, %v1912, %v1575
      %v1946 = vsel %vm1919, %v1913, %v1577
      %v1947 = vsel %vm1919, %v1914, %v1579
      %v1948 = vsel %vm1919, %v1915, %v1581
      %v1949 = vsel %vm1919, %v1916, %v1583
      %v1950 = vsel %vm1919, %v1917, %v1585
      %v1951 = vsel %vm1919, %v1918, %v1587
      %vm1952 = vcmask 523264
      %v1953 = vsel %vm1952, %v1920, %v1626
      %v1954 = vsel %vm1952, %v1921, %v1628
      %v1955 = vsel %vm1952, %v1922, %v1630
      %v1956 = vsel %vm1952, %v1923, %v1632
      %v1957 = vsel %vm1952, %v1924, %v1634
      %v1958 = vsel %vm1952, %v1925, %v1636
      %v1959 = vsel %vm1952, %v1926, %v1638
      %v1960 = vsel %vm1952, %v1927, %v1640
      %v1961 = vsel %vm1952, %v1928, %v1642
      %v1962 = vsel %vm1952, %v1929, %v1644
      %v1963 = vsel %vm1952, %v1930, %v1646
      %v1964 = vsel %vm1952, %v1931, %v1648
      %v1965 = vsel %vm1952, %v1932, %v1650
      %v1966 = vsel %vm1952, %v1933, %v1652
      %v1967 = vsel %vm1952, %v1934, %v1654
      %v1968 = vsel %vm1952, %v1935, %v1656
      %v1969 = vsel %vm1952, %v1936, %v1658
      %v1970 = vsel %vm1952, %v1937, %v1660
      %v1971 = vsel %vm1952, %v1938, %v1662
      %v1972 = vsel %vm1952, %v1939, %v1664
      %v1973 = vsel %vm1952, %v1940, %v1666
      %v1974 = vsel %vm1952, %v1941, %v1668
      %v1975 = vsel %vm1952, %v1942, %v1670
      %v1976 = vsel %vm1952, %v1943, %v1672
      %v1977 = vsel %vm1952, %v1944, %v1674
      %v1978 = vsel %vm1952, %v1945, %v1676
      %v1979 = vsel %vm1952, %v1946, %v1678
      %v1980 = vsel %vm1952, %v1947, %v1680
      %v1981 = vsel %vm1952, %v1948, %v1682
      %v1982 = vsel %vm1952, %v1949, %v1684
      %v1983 = vsel %vm1952, %v1950, %v1686
      %v1984 = vsel %vm1952, %v1951, %v1688
      %v1985 = vld [vmem:[%s341] sm:$0xff]
      %v1986 = vld [vmem:[%s341 + $0x8] sm:$0xff]
      %v1987 = vld [vmem:[%s341 + $0x10] sm:$0xff]
      %v1988 = vld [vmem:[%s341 + $0x18] sm:$0xff]
      %v1989 = vld [vmem:[%s341 + $0x20] sm:$0xff]
      %v1990 = vld [vmem:[%s341 + $0x28] sm:$0xff]
      %v1991 = vld [vmem:[%s341 + $0x30] sm:$0xff]
      %v1992 = vld [vmem:[%s341 + $0x38] sm:$0xff]
      %v1993 = vld [vmem:[%s341 + $0x40] sm:$0xff]
      %v1994 = vld [vmem:[%s344] sm:$0x1]
      %v1996 = vlaneseq
      %v1997 = vshrl.u32 %v1996, 7
      %v1998 = vsub.s32 0, %v1997
      %v1999 = vrot.slane %v1994, %v1998
      %vm2001 = vcmask 588800
      %v2003 = vsel %vm2001, %v1953, 0
      %v2006 = vsel %vm2001, %v1954, 0
      %v2009 = vsel %vm2001, %v1955, 0
      %v2012 = vsel %vm2001, %v1956, 0
      %v2015 = vsel %vm2001, %v1957, 0
      %v2018 = vsel %vm2001, %v1958, 0
      %v2021 = vsel %vm2001, %v1959, 0
      %v2024 = vsel %vm2001, %v1960, 0
      %v2027 = vsel %vm2001, %v1961, 0
      %v2030 = vsel %vm2001, %v1962, 0
      %v2033 = vsel %vm2001, %v1963, 0
      %v2036 = vsel %vm2001, %v1964, 0
      %v2039 = vsel %vm2001, %v1965, 0
      %v2042 = vsel %vm2001, %v1966, 0
      %v2045 = vsel %vm2001, %v1967, 0
      %v2048 = vsel %vm2001, %v1968, 0
      %v2051 = vsel %vm2001, %v1969, 0
      %v2054 = vsel %vm2001, %v1970, 0
      %v2057 = vsel %vm2001, %v1971, 0
      %v2060 = vsel %vm2001, %v1972, 0
      %v2063 = vsel %vm2001, %v1973, 0
      %v2066 = vsel %vm2001, %v1974, 0
      %v2069 = vsel %vm2001, %v1975, 0
      %v2072 = vsel %vm2001, %v1976, 0
      %v2075 = vsel %vm2001, %v1977, 0
      %v2078 = vsel %vm2001, %v1978, 0
      %v2081 = vsel %vm2001, %v1979, 0
      %v2084 = vsel %vm2001, %v1980, 0
      %v2087 = vsel %vm2001, %v1981, 0
      %v2090 = vsel %vm2001, %v1982, 0
      %v2093 = vsel %vm2001, %v1983, 0
      %v2096 = vsel %vm2001, %v1984, 0
      %2098 = vmatprep.subr.mxu0 0.0
      %2099 = vmatpush1.msra.mxu0 0.0
      %2100 = vmatprep.subr.mxu0 0.0
      %2101 = vmatpush1.msra.mxu0 0.0
      %2102 = vmatprep.subr.mxu0 0.0
      %2103 = vmatpush1.msra.mxu0 0.0
      %2104 = vmatprep.subr.mxu0 0.0
      %2105 = vmatpush1.msra.mxu0 0.0
      %2106 = vmatprep.subr.mxu0 0.0
      %2107 = vmatpush1.msra.mxu0 0.0
      %2108 = vmatprep.subr.mxu0 0.0
      %2109 = vmatpush1.msra.mxu0 0.0
      %2110 = vmatprep.subr.mxu0 0.0
      %2111 = vmatpush1.msra.mxu0 0.0
      %2112 = vmatprep.subr.mxu0 0.0
      %2113 = vmatpush1.msra.mxu0 %v1993
      %2114 = vmatprep.subr.mxu0 0.0
      %2115 = vmatpush1.msra.mxu0 %v1992
      %2116 = vmatprep.subr.mxu0 0.0
      %2117 = vmatpush1.msra.mxu0 %v1991
      %2118 = vmatprep.subr.mxu0 0.0
      %2119 = vmatpush1.msra.mxu0 %v1990
      %2120 = vmatprep.subr.mxu0 0.0
      %2121 = vmatpush1.msra.mxu0 %v1989
      %2122 = vmatprep.subr.mxu0 0.0
      %2123 = vmatpush1.msra.mxu0 %v1988
      %2124 = vmatprep.subr.mxu0 0.0
      %2125 = vmatpush1.msra.mxu0 %v1987
      %2126 = vmatprep.subr.mxu0 0.0
      %2127 = vmatpush1.msra.mxu0 %v1986
      %2128 = vmatprep.subr.mxu0 0.0
      %2129 = vmatpush1.msra.mxu0 %v1985
      %2130 = vmatprep.subr.mxu0 0.0
      %2131 = vmatpush2.msra.mxu0 0.0
      %2132 = vmatprep.subr.mxu0 0.0
      %2133 = vmatpush2.msra.mxu0 0.0
      %2134 = vmatprep.subr.mxu0 0.0
      %2135 = vmatpush2.msra.mxu0 0.0
      %2136 = vmatprep.subr.mxu0 0.0
      %2137 = vmatpush2.msra.mxu0 0.0
      %2138 = vmatprep.subr.mxu0 0.0
      %2139 = vmatpush2.msra.mxu0 0.0
      %2140 = vmatprep.subr.mxu0 0.0
      %2141 = vmatpush2.msra.mxu0 0.0
      %2142 = vmatprep.subr.mxu0 0.0
      %2143 = vmatpush2.msra.mxu0 0.0
      %2144 = vmatprep.subr.mxu0 0.0
      %2145 = vmatpush2.msra.mxu0 0.0
      %2146 = vmatprep.subr.mxu0 0.0
      %2147 = vmatpush2.msra.mxu0 0.0
      %2148 = vmatprep.subr.mxu0 0.0
      %2149 = vmatpush2.msra.mxu0 0.0
      %2150 = vmatprep.subr.mxu0 0.0
      %2151 = vmatpush2.msra.mxu0 0.0
      %2152 = vmatprep.subr.mxu0 0.0
      %2153 = vmatpush2.msra.mxu0 0.0
      %2154 = vmatprep.subr.mxu0 0.0
      %2155 = vmatpush2.msra.mxu0 0.0
      %2156 = vmatprep.subr.mxu0 0.0
      %2157 = vmatpush2.msra.mxu0 0.0
      %2158 = vmatprep.subr.mxu0 0.0
      %2159 = vmatpush2.msra.mxu0 0.0
      %2160 = vmatprep.subr.mxu0 0.0
      %2161 = vmatpush2.msra.mxu0 0.0
      %2162 = vmatprep.mubr.f32.mxu0 0.0
      %2163 = vmatmul.mubr.f32.gmra.mxu0 %v2003
      %v2164 = vpop.f32.mrf.mxu0
      %v2165 = vadd.f32 %v1999, %v2164
      %v2166 = vpop.f32.mrf.mxu0
      %2167 = vmatprep.mubr.f32.mxu0 0.0
      %2168 = vmatmul.mubr.f32.gmra.mxu0 %v2006
      %v2169 = vpop.f32.mrf.mxu0
      %v2170 = vadd.f32 %v1999, %v2169
      %v2171 = vpop.f32.mrf.mxu0
      %2172 = vmatprep.mubr.f32.mxu0 0.0
      %2173 = vmatmul.mubr.f32.gmra.mxu0 %v2009
      %v2174 = vpop.f32.mrf.mxu0
      %v2175 = vadd.f32 %v1999, %v2174
      %v2176 = vpop.f32.mrf.mxu0
      %2177 = vmatprep.mubr.f32.mxu0 0.0
      %2178 = vmatmul.mubr.f32.gmra.mxu0 %v2012
      %v2179 = vpop.f32.mrf.mxu0
      %v2180 = vadd.f32 %v1999, %v2179
      %v2181 = vpop.f32.mrf.mxu0
      %2182 = vmatprep.mubr.f32.mxu0 0.0
      %2183 = vmatmul.mubr.f32.gmra.mxu0 %v2015
      %v2184 = vpop.f32.mrf.mxu0
      %v2185 = vadd.f32 %v1999, %v2184
      %v2186 = vpop.f32.mrf.mxu0
      %2187 = vmatprep.mubr.f32.mxu0 0.0
      %2188 = vmatmul.mubr.f32.gmra.mxu0 %v2018
      %v2189 = vpop.f32.mrf.mxu0
      %v2190 = vadd.f32 %v1999, %v2189
      %v2191 = vpop.f32.mrf.mxu0
      %2192 = vmatprep.mubr.f32.mxu0 0.0
      %2193 = vmatmul.mubr.f32.gmra.mxu0 %v2021
      %v2194 = vpop.f32.mrf.mxu0
      %v2195 = vadd.f32 %v1999, %v2194
      %v2196 = vpop.f32.mrf.mxu0
      %2197 = vmatprep.mubr.f32.mxu0 0.0
      %2198 = vmatmul.mubr.f32.gmra.mxu0 %v2024
      %v2199 = vpop.f32.mrf.mxu0
      %v2200 = vadd.f32 %v1999, %v2199
      %v2201 = vpop.f32.mrf.mxu0
      %2202 = vmatprep.mubr.f32.mxu0 0.0
      %2203 = vmatmul.mubr.f32.gmra.mxu0 %v2027
      %v2204 = vpop.f32.mrf.mxu0
      %v2205 = vadd.f32 %v1999, %v2204
      %v2206 = vpop.f32.mrf.mxu0
      %2207 = vmatprep.mubr.f32.mxu0 0.0
      %2208 = vmatmul.mubr.f32.gmra.mxu0 %v2030
      %v2209 = vpop.f32.mrf.mxu0
      %v2210 = vadd.f32 %v1999, %v2209
      %v2211 = vpop.f32.mrf.mxu0
      %2212 = vmatprep.mubr.f32.mxu0 0.0
      %2213 = vmatmul.mubr.f32.gmra.mxu0 %v2033
      %v2214 = vpop.f32.mrf.mxu0
      %v2215 = vadd.f32 %v1999, %v2214
      %v2216 = vpop.f32.mrf.mxu0
      %2217 = vmatprep.mubr.f32.mxu0 0.0
      %2218 = vmatmul.mubr.f32.gmra.mxu0 %v2036
      %v2219 = vpop.f32.mrf.mxu0
      %v2220 = vadd.f32 %v1999, %v2219
      %v2221 = vpop.f32.mrf.mxu0
      %2222 = vmatprep.mubr.f32.mxu0 0.0
      %2223 = vmatmul.mubr.f32.gmra.mxu0 %v2039
      %v2224 = vpop.f32.mrf.mxu0
      %v2225 = vadd.f32 %v1999, %v2224
      %v2226 = vpop.f32.mrf.mxu0
      %2227 = vmatprep.mubr.f32.mxu0 0.0
      %2228 = vmatmul.mubr.f32.gmra.mxu0 %v2042
      %v2229 = vpop.f32.mrf.mxu0
      %v2230 = vadd.f32 %v1999, %v2229
      %v2231 = vpop.f32.mrf.mxu0
      %2232 = vmatprep.mubr.f32.mxu0 0.0
      %2233 = vmatmul.mubr.f32.gmra.mxu0 %v2045
      %v2234 = vpop.f32.mrf.mxu0
      %v2235 = vadd.f32 %v1999, %v2234
      %v2236 = vpop.f32.mrf.mxu0
      %2237 = vmatprep.mubr.f32.mxu0 0.0
      %2238 = vmatmul.mubr.f32.gmra.mxu0 %v2048
      %v2239 = vpop.f32.mrf.mxu0
      %v2240 = vadd.f32 %v1999, %v2239
      %v2241 = vpop.f32.mrf.mxu0
      %2242 = vmatprep.mubr.f32.mxu0 0.0
      %2243 = vmatmul.mubr.f32.gmra.mxu0 %v2051
      %v2244 = vpop.f32.mrf.mxu0
      %v2245 = vadd.f32 %v1999, %v2244
      %v2246 = vpop.f32.mrf.mxu0
      %2247 = vmatprep.mubr.f32.mxu0 0.0
      %2248 = vmatmul.mubr.f32.gmra.mxu0 %v2054
      %v2249 = vpop.f32.mrf.mxu0
      %v2250 = vadd.f32 %v1999, %v2249
      %v2251 = vpop.f32.mrf.mxu0
      %2252 = vmatprep.mubr.f32.mxu0 0.0
      %2253 = vmatmul.mubr.f32.gmra.mxu0 %v2057
      %v2254 = vpop.f32.mrf.mxu0
      %v2255 = vadd.f32 %v1999, %v2254
      %v2256 = vpop.f32.mrf.mxu0
      %2257 = vmatprep.mubr.f32.mxu0 0.0
      %2258 = vmatmul.mubr.f32.gmra.mxu0 %v2060
      %v2259 = vpop.f32.mrf.mxu0
      %v2260 = vadd.f32 %v1999, %v2259
      %v2261 = vpop.f32.mrf.mxu0
      %2262 = vmatprep.mubr.f32.mxu0 0.0
      %2263 = vmatmul.mubr.f32.gmra.mxu0 %v2063
      %v2264 = vpop.f32.mrf.mxu0
      %v2265 = vadd.f32 %v1999, %v2264
      %v2266 = vpop.f32.mrf.mxu0
      %2267 = vmatprep.mubr.f32.mxu0 0.0
      %2268 = vmatmul.mubr.f32.gmra.mxu0 %v2066
      %v2269 = vpop.f32.mrf.mxu0
      %v2270 = vadd.f32 %v1999, %v2269
      %v2271 = vpop.f32.mrf.mxu0
      %2272 = vmatprep.mubr.f32.mxu0 0.0
      %2273 = vmatmul.mubr.f32.gmra.mxu0 %v2069
      %v2274 = vpop.f32.mrf.mxu0
      %v2275 = vadd.f32 %v1999, %v2274
      %v2276 = vpop.f32.mrf.mxu0
      %2277 = vmatprep.mubr.f32.mxu0 0.0
      %2278 = vmatmul.mubr.f32.gmra.mxu0 %v2072
      %v2279 = vpop.f32.mrf.mxu0
      %v2280 = vadd.f32 %v1999, %v2279
      %v2281 = vpop.f32.mrf.mxu0
      %2282 = vmatprep.mubr.f32.mxu0 0.0
      %2283 = vmatmul.mubr.f32.gmra.mxu0 %v2075
      %v2284 = vpop.f32.mrf.mxu0
      %v2285 = vadd.f32 %v1999, %v2284
      %v2286 = vpop.f32.mrf.mxu0
      %2287 = vmatprep.mubr.f32.mxu0 0.0
      %2288 = vmatmul.mubr.f32.gmra.mxu0 %v2078
      %v2289 = vpop.f32.mrf.mxu0
      %v2290 = vadd.f32 %v1999, %v2289
      %v2291 = vpop.f32.mrf.mxu0
      %2292 = vmatprep.mubr.f32.mxu0 0.0
      %2293 = vmatmul.mubr.f32.gmra.mxu0 %v2081
      %v2294 = vpop.f32.mrf.mxu0
      %v2295 = vadd.f32 %v1999, %v2294
      %v2296 = vpop.f32.mrf.mxu0
      %2297 = vmatprep.mubr.f32.mxu0 0.0
      %2298 = vmatmul.mubr.f32.gmra.mxu0 %v2084
      %v2299 = vpop.f32.mrf.mxu0
      %v2300 = vadd.f32 %v1999, %v2299
      %v2301 = vpop.f32.mrf.mxu0
      %2302 = vmatprep.mubr.f32.mxu0 0.0
      %2303 = vmatmul.mubr.f32.gmra.mxu0 %v2087
      %v2304 = vpop.f32.mrf.mxu0
      %v2305 = vadd.f32 %v1999, %v2304
      %v2306 = vpop.f32.mrf.mxu0
      %2307 = vmatprep.mubr.f32.mxu0 0.0
      %2308 = vmatmul.mubr.f32.gmra.mxu0 %v2090
      %v2309 = vpop.f32.mrf.mxu0
      %v2310 = vadd.f32 %v1999, %v2309
      %v2311 = vpop.f32.mrf.mxu0
      %2312 = vmatprep.mubr.f32.mxu0 0.0
      %2313 = vmatmul.mubr.f32.gmra.mxu0 %v2093
      %v2314 = vpop.f32.mrf.mxu0
      %v2315 = vadd.f32 %v1999, %v2314
      %v2316 = vpop.f32.mrf.mxu0
      %2317 = vmatprep.mubr.f32.mxu0 0.0
      %2318 = vmatmul.mubr.f32.gmra.mxu0 %v2096
      %v2319 = vpop.f32.mrf.mxu0
      %v2320 = vadd.f32 %v1999, %v2319
      %v2321 = vpop.f32.mrf.mxu0
      %2322 = vdwg.mxu0
      %v2323 = vld [vmem:[%s357] sm:$0xff]
      %v2324 = vld [vmem:[%s357 + $0x8] sm:$0xff]
      %v2325 = vld [vmem:[%s357 + $0x10] sm:$0xff]
      %v2326 = vld [vmem:[%s357 + $0x18] sm:$0xff]
      %v2327 = vld [vmem:[%s357 + $0x20] sm:$0xff]
      %v2328 = vld [vmem:[%s357 + $0x28] sm:$0xff]
      %v2329 = vld [vmem:[%s357 + $0x30] sm:$0xff]
      %v2330 = vld [vmem:[%s357 + $0x38] sm:$0xff]
      %v2331 = vld [vmem:[%s357 + $0x40] sm:$0xff]
      %v2332 = vld [vmem:[%s357 + $0x48] sm:$0xff]
      %v2333 = vld [vmem:[%s357 + $0x50] sm:$0xff]
      %v2334 = vld [vmem:[%s357 + $0x58] sm:$0xff]
      %v2335 = vld [vmem:[%s357 + $0x60] sm:$0xff]
      %v2336 = vld [vmem:[%s357 + $0x68] sm:$0xff]
      %v2337 = vld [vmem:[%s357 + $0x70] sm:$0xff]
      %v2338 = vld [vmem:[%s357 + $0x78] sm:$0xff]
      %v2339 = vld [vmem:[%s357 + $0x80] sm:$0xff]
      %v2340 = vld [vmem:[%s357 + $0x88] sm:$0xff]
      %v2341 = vld [vmem:[%s357 + $0x90] sm:$0xff]
      %v2342 = vld [vmem:[%s357 + $0x98] sm:$0xff]
      %v2343 = vld [vmem:[%s357 + $0xa0] sm:$0xff]
      %v2344 = vld [vmem:[%s357 + $0xa8] sm:$0xff]
      %v2345 = vld [vmem:[%s357 + $0xb0] sm:$0xff]
      %v2346 = vld [vmem:[%s357 + $0xb8] sm:$0xff]
      %v2347 = vld [vmem:[%s357 + $0xc0] sm:$0xff]
      %v2348 = vld [vmem:[%s357 + $0xc8] sm:$0xff]
      %v2349 = vld [vmem:[%s357 + $0xd0] sm:$0xff]
      %v2350 = vld [vmem:[%s357 + $0xd8] sm:$0xff]
      %v2351 = vld [vmem:[%s357 + $0xe0] sm:$0xff]
      %v2352 = vld [vmem:[%s357 + $0xe8] sm:$0xff]
      %v2353 = vld [vmem:[%s357 + $0xf0] sm:$0xff]
      %v2354 = vld [vmem:[%s357 + $0xf8] sm:$0xff]
      %v2355 = vadd.f32 %v2165, %v2323
      %v2356 = vadd.f32 %v2170, %v2324
      %v2357 = vadd.f32 %v2175, %v2325
      %v2358 = vadd.f32 %v2180, %v2326
      %v2359 = vadd.f32 %v2185, %v2327
      %v2360 = vadd.f32 %v2190, %v2328
      %v2361 = vadd.f32 %v2195, %v2329
      %v2362 = vadd.f32 %v2200, %v2330
      %v2363 = vadd.f32 %v2205, %v2331
      %v2364 = vadd.f32 %v2210, %v2332
      %v2365 = vadd.f32 %v2215, %v2333
      %v2366 = vadd.f32 %v2220, %v2334
      %v2367 = vadd.f32 %v2225, %v2335
      %v2368 = vadd.f32 %v2230, %v2336
      %v2369 = vadd.f32 %v2235, %v2337
      %v2370 = vadd.f32 %v2240, %v2338
      %v2371 = vadd.f32 %v2245, %v2339
      %v2372 = vadd.f32 %v2250, %v2340
      %v2373 = vadd.f32 %v2255, %v2341
      %v2374 = vadd.f32 %v2260, %v2342
      %v2375 = vadd.f32 %v2265, %v2343
      %v2376 = vadd.f32 %v2270, %v2344
      %v2377 = vadd.f32 %v2275, %v2345
      %v2378 = vadd.f32 %v2280, %v2346
      %v2379 = vadd.f32 %v2285, %v2347
      %v2380 = vadd.f32 %v2290, %v2348
      %v2381 = vadd.f32 %v2295, %v2349
      %v2382 = vadd.f32 %v2300, %v2350
      %v2383 = vadd.f32 %v2305, %v2351
      %v2384 = vadd.f32 %v2310, %v2352
      %v2385 = vadd.f32 %v2315, %v2353
      %v2386 = vadd.f32 %v2320, %v2354
      %2387 = vst.msk [vmem:[%s371] sm:$0xff] %vm1721, %v2355
      %2388 = vst.msk [vmem:[%s371 + $0x8] sm:$0xff] %vm1721, %v2356
      %2389 = vst.msk [vmem:[%s371 + $0x10] sm:$0xff] %vm1721, %v2357
      %2390 = vst.msk [vmem:[%s371 + $0x18] sm:$0xff] %vm1721, %v2358
      %2391 = vst.msk [vmem:[%s371 + $0x20] sm:$0xff] %vm1721, %v2359
      %2392 = vst.msk [vmem:[%s371 + $0x28] sm:$0xff] %vm1721, %v2360
      %2393 = vst.msk [vmem:[%s371 + $0x30] sm:$0xff] %vm1721, %v2361
      %2394 = vst.msk [vmem:[%s371 + $0x38] sm:$0xff] %vm1721, %v2362
      %2395 = vst.msk [vmem:[%s371 + $0x40] sm:$0xff] %vm1721, %v2363
      %2396 = vst.msk [vmem:[%s371 + $0x48] sm:$0xff] %vm1721, %v2364
      %2397 = vst.msk [vmem:[%s371 + $0x50] sm:$0xff] %vm1721, %v2365
      %2398 = vst.msk [vmem:[%s371 + $0x58] sm:$0xff] %vm1721, %v2366
      %2399 = vst.msk [vmem:[%s371 + $0x60] sm:$0xff] %vm1721, %v2367
      %2400 = vst.msk [vmem:[%s371 + $0x68] sm:$0xff] %vm1721, %v2368
      %2401 = vst.msk [vmem:[%s371 + $0x70] sm:$0xff] %vm1721, %v2369
      %2402 = vst.msk [vmem:[%s371 + $0x78] sm:$0xff] %vm1721, %v2370
      %2403 = vst.msk [vmem:[%s371 + $0x80] sm:$0xff] %vm1721, %v2371
      %2404 = vst.msk [vmem:[%s371 + $0x88] sm:$0xff] %vm1721, %v2372
      %2405 = vst.msk [vmem:[%s371 + $0x90] sm:$0xff] %vm1721, %v2373
      %2406 = vst.msk [vmem:[%s371 + $0x98] sm:$0xff] %vm1721, %v2374
      %2407 = vst.msk [vmem:[%s371 + $0xa0] sm:$0xff] %vm1721, %v2375
      %2408 = vst.msk [vmem:[%s371 + $0xa8] sm:$0xff] %vm1721, %v2376
      %2409 = vst.msk [vmem:[%s371 + $0xb0] sm:$0xff] %vm1721, %v2377
      %2410 = vst.msk [vmem:[%s371 + $0xb8] sm:$0xff] %vm1721, %v2378
      %2411 = vst.msk [vmem:[%s371 + $0xc0] sm:$0xff] %vm1721, %v2379
      %2412 = vst.msk [vmem:[%s371 + $0xc8] sm:$0xff] %vm1721, %v2380
      %2413 = vst.msk [vmem:[%s371 + $0xd0] sm:$0xff] %vm1721, %v2381
      %2414 = vst.msk [vmem:[%s371 + $0xd8] sm:$0xff] %vm1721, %v2382
      %2415 = vst.msk [vmem:[%s371 + $0xe0] sm:$0xff] %vm1721, %v2383
      %2416 = vst.msk [vmem:[%s371 + $0xe8] sm:$0xff] %vm1721, %v2384
      %2417 = vst.msk [vmem:[%s371 + $0xf0] sm:$0xff] %vm1721, %v2385
      %2418 = vst.msk [vmem:[%s371 + $0xf8] sm:$0xff] %vm1721, %v2386
      %s2419 = smul.u32 16, %s23
      %p2420 = scmp.lt.s32.totalorder %s22, 1
      %s2421 = scalar_select %p2420, %s22, 1
      %p2422 = scmp.lt.s32.totalorder %s2419, 15
      %s2423 = scalar_select %p2422, %s2419, 15
      %p2424 = scmp.lt.s32.totalorder %s24, 0
      %s2425 = scalar_select %p2424, %s24, 0
      %s2426 = smul.addr %s2423, 2
      %s2427 = sadd.s32 %s2425, %s2426
      %s2428 = smul.addr %s2421, 32
      %s2429 = sadd.s32 %s2427, %s2428
      %s2430 = smul.addr %s2429, 8
      %s2431 = scalar_lea.vmem %s6, %s2430
      // Predicated region
      $region45: #{residual_block_forward.5} parent=43 // pred_check
        %p2432 = pneg %p208
      $region46: #{residual_block_forward.5} parent=43 // pred_check_branch
        %2434 = sbr.rel (%p2432) target = $region48
      $region47: #{residual_block_forward.5} parent=43 // pred_region
        %s2435 = smul.u32 16, %s23
      $region48: #{residual_block_forward.5} parent=43 // pred_fallthru
        _
    $region44: #{residual_block_forward.5} parent=5 // pred_fallthru
      _
    %p2436 = scmp.le.s32.totalorder 2, %s12
    // Predicated region
    $region49: #{residual_block_forward.5} parent=5 // pred_check
      %p2437 = pneg %p2436
    $region50: #{residual_block_forward.5} parent=5 // pred_check_branch
      %2439 = sbr.rel (%p2437) target = $region52
    $region51: #{residual_block_forward.5} parent=5 // pred_region
      %s2440 = ssub.s32 %s12, 2
      // Predicated region
      $region53: #{residual_block_forward.5} parent=51 // pred_check
        %p2441 = pneg %p214
      $region54: #{residual_block_forward.5} parent=51 // pred_check_branch
        %2443 = sbr.rel (%p2441) target = $region56
      $region55: #{residual_block_forward.5} parent=51 // pred_region
        %s2444 = smul.u32 16, %s26
        %p2445 = scmp.lt.s32.totalorder %s25, 1
        %s2446 = scalar_select %p2445, %s25, 1
        %p2447 = scmp.lt.s32.totalorder %s2444, 15
        %s2448 = scalar_select %p2447, %s2444, 15
        %p2449 = scmp.lt.s32.totalorder %s27, 0
        %s2450 = scalar_select %p2449, %s27, 0
        %s2451 = smul.addr %s2448, 2
        %s2452 = sadd.s32 %s2450, %s2451
        %s2453 = smul.addr %s2446, 32
        %s2454 = sadd.s32 %s2452, %s2453
        %s2455 = smul.addr %s2454, 8
        %s2456 = scalar_lea.vmem %s6, %s2455
      $region56: #{residual_block_forward.5} parent=51 // pred_fallthru
        _
    $region52: #{residual_block_forward.5} parent=5 // pred_fallthru
      _
  $region6: #{residual_block_forward.5} parent=0 // loop_footer
    %s16 = sadd.s32 1, %s12
  $region7: #{residual_block_forward.5} parent=0 // loop_footer_branch
    %11 = sbr.rel target = $region3
  $region8: #{residual_block_forward.5} parent=0 // loop_exit
    _

// kernel: residual_block_forward.4
$region0: #{residual_block_forward.4}
  #allocation0 [shape = 'u32[]', space=smem, size = 0x4, offset = 0x4, fixed_abs, tag = 'smem constant byte address 0x4 - core index']
  #allocation1 [shape = 'u32[144,128]{1,0:T(1,128)}', space=vmem, size = 0x12000, scoped, tag = 'internal scratch']
  %s0 = inlined_call_operand.vmem [shape: f32[2,16,16,4], index: 0, kind: input, shape index: {}]
  %s1 = inlined_call_operand.vmem [shape: f32[36,8], index: 1, kind: input, shape index: {}]
  %s2 = inlined_call_operand.vmem [shape: f32[1,8], index: 2, kind: input, shape index: {}]
  %s3 = inlined_call_operand.vmem [shape: f32[1,4], index: 3, kind: input, shape index: {}]
  %s4 = inlined_call_operand.vmem [shape: f32[1,4], index: 4, kind: input, shape index: {}]
  %s5 = inlined_call_operand.vmem [shape: f32[2,16,16,8], index: 5, kind: output, shape index: {0}]
  %s6 = inlined_call_operand.vmem [shape: f32[2,1,8], index: 6, kind: output, shape index: {1}]
  %s7 = inlined_call_operand.vmem [shape: f32[2,1,8], index: 7, kind: output, shape index: {2}]
  %8 = xla_tuple %s5, %s6, %s7
  %s9 = sld [smem:[#allocation0]]
  $region69: #{residual_block_forward.4} parent=0
    _
  %s11 = ssub.s32 1, %s9
  %s12 = scalar_select 0, %s11, %s9
  loop: start=0, step=1, limit=4
  $region2: #{residual_block_forward.4} parent=0 // loop_pre_header
    _
  $region3: #{residual_block_forward.4} parent=0 // loop_header
    %s14 = sphi 0, %s18
    %p15 = scmp.ge.s32.totalorder %s14, 4
    %s21 = sphi 0, %s40
    %s22 = sphi 0, %s36
    %s23 = sphi 0, %s32
    %s24 = sphi 0, %s21
    %s25 = sphi 0, %s22
    %s26 = sphi 0, %s23
    %s27 = sphi 0, %s24
    %s28 = sphi 0, %s25
    %s29 = sphi 0, %s26
    %s43 = sphi 0, %s45
    %s46 = sphi 0, %s43
    %s47 = sphi 0, %s46
    %s63 = sphi 0, %s47
    %s69 = sphi 0, %s71
    %s72 = sphi 0, %s69
    %s73 = sphi 0, %s72
    %s89 = sphi 0, %s73
    %s95 = sphi 0, %s97
    %s98 = sphi 0, %s95
    %s99 = sphi 0, %s98
    %s115 = sphi 0, %s99
    %s119 = sphi 0, %s119
    %s121 = sphi 0, %s119
    %s122 = sphi 0, %s121
    %s136 = sphi 0, %s122
    %s140 = sphi 0, %s140
    %s142 = sphi 0, %s140
    %s143 = sphi 0, %s142
    %s157 = sphi 0, %s143
    %s167 = sphi 0, %s169
    %s170 = sphi 0, %s167
    %s171 = sphi 0, %s170
    %s187 = sphi 0, %s171
    %s197 = sphi 0, %s199
    %s200 = sphi 0, %s197
    %s201 = sphi 0, %s200
    %s217 = sphi 0, %s201
    %s227 = sphi 0, %s229
    %s230 = sphi 0, %s227
    %s231 = sphi 0, %s230
    %s247 = sphi 0, %s231
  $region4: #{residual_block_forward.4} parent=0 // loop_header_branch
    %17 = sbr.rel (%p15) target = $region8
  $region5: #{residual_block_forward.4} parent=0 // loop_body
    %s19 = ssub.s32 %s14, 1
    %s20 = ssub.s32 %s14, 2
    %s30 = sadd.s32 1, %s23
    %p31 = scmp.ge.s32.totalorder %s30, 1
    %s32 = scalar_select %p31, 0, %s30
    %s33 = sadd.s32 1, %s22
    %s34 = scalar_select %p31, %s33, %s22
    %p35 = scmp.ge.s32.totalorder %s34, 1
    %s36 = scalar_select %p35, 0, %s34
    %s37 = sadd.s32 1, %s21
    %s38 = scalar_select %p35, %s37, %s21
    %p39 = scmp.ge.s32.totalorder %s38, 2
    %s40 = scalar_select %p39, 0, %s38
    %s41 = ssub.s32 %s21, %s40
    %p42 = scmp.eq.s32.totalorder %s41, 0
    %s44 = sadd.s32 %s43, 1
    %s45 = scalar_select %p42, %s43, %s44
    %p48 = pneg %p42
    %p49 = scmp.eq.s32.totalorder %s14, 1
    %p50 = por %p48, %p49
    %p51 = scmp.ne.s32.totalorder %s43, %s46
    %p52 = scmp.eq.s32.totalorder %s14, 0
    %p53 = por %p51, %p52
    %p54 = scmp.ne.s32.totalorder %s43, %s46
    %p55 = scmp.eq.s32.totalorder %s19, 1
    %p56 = por %p54, %p55
    %p57 = scmp.ne.s32.totalorder %s46, %s47
    %p58 = scmp.eq.s32.totalorder %s19, 0
    %p59 = por %p57, %p58
    %p60 = scmp.ne.s32.totalorder %s46, %s47
    %p61 = scmp.eq.s32.totalorder %s20, 1
    %p62 = por %p60, %p61
    %p64 = scmp.ne.s32.totalorder %s47, %s63
    %p65 = scmp.eq.s32.totalorder %s20, 0
    %p66 = por %p64, %p65
    %s67 = ssub.s32 %s23, %s32
    %p68 = scmp.eq.s32.totalorder %s67, 0
    %s70 = sadd.s32 %s69, 1
    %s71 = scalar_select %p68, %s69, %s70
    %p74 = pneg %p68
    %p75 = scmp.eq.s32.totalorder %s14, 1
    %p76 = por %p74, %p75
    %p77 = scmp.ne.s32.totalorder %s69, %s72
    %p78 = scmp.eq.s32.totalorder %s14, 0
    %p79 = por %p77, %p78
    %p80 = scmp.ne.s32.totalorder %s69, %s72
    %p81 = scmp.eq.s32.totalorder %s19, 1
    %p82 = por %p80, %p81
    %p83 = scmp.ne.s32.totalorder %s72, %s73
    %p84 = scmp.eq.s32.totalorder %s19, 0
    %p85 = por %p83, %p84
    %p86 = scmp.ne.s32.totalorder %s72, %s73
    %p87 = scmp.eq.s32.totalorder %s20, 1
    %p88 = por %p86, %p87
    %p90 = scmp.ne.s32.totalorder %s73, %s89
    %p91 = scmp.eq.s32.totalorder %s20, 0
    %p92 = por %p90, %p91
    %s93 = ssub.s32 %s23, %s32
    %p94 = scmp.eq.s32.totalorder %s93, 0
    %s96 = sadd.s32 %s95, 1
    %s97 = scalar_select %p94, %s95, %s96
    %p100 = pneg %p94
    %p101 = scmp.eq.s32.totalorder %s14, 1
    %p102 = por %p100, %p101
    %p103 = scmp.ne.s32.totalorder %s95, %s98
    %p104 = scmp.eq.s32.totalorder %s14, 0
    %p105 = por %p103, %p104
    %p106 = scmp.ne.s32.totalorder %s95, %s98
    %p107 = scmp.eq.s32.totalorder %s19, 1
    %p108 = por %p106, %p107
    %p109 = scmp.ne.s32.totalorder %s98, %s99
    %p110 = scmp.eq.s32.totalorder %s19, 0
    %p111 = por %p109, %p110
    %p112 = scmp.ne.s32.totalorder %s98, %s99
    %p113 = scmp.eq.s32.totalorder %s20, 1
    %p114 = por %p112, %p113
    %p116 = scmp.ne.s32.totalorder %s99, %s115
    %p117 = scmp.eq.s32.totalorder %s20, 0
    %p118 = por %p116, %p117
    %s120 = sadd.s32 %s119, 1
    %p123 = scmp.eq.s32.totalorder %s14, 1
    %p124 = scmp.ne.s32.totalorder %s119, %s121
    %p125 = scmp.eq.s32.totalorder %s14, 0
    %p126 = por %p124, %p125
    %p127 = scmp.ne.s32.totalorder %s119, %s121
    %p128 = scmp.eq.s32.totalorder %s19, 1
    %p129 = por %p127, %p128
    %p130 = scmp.ne.s32.totalorder %s121, %s122
    %p131 = scmp.eq.s32.totalorder %s19, 0
    %p132 = por %p130, %p131
    %p133 = scmp.ne.s32.totalorder %s121, %s122
    %p134 = scmp.eq.s32.totalorder %s20, 1
    %p135 = por %p133, %p134
    %p137 = scmp.ne.s32.totalorder %s122, %s136
    %p138 = scmp.eq.s32.totalorder %s20, 0
    %p139 = por %p137, %p138
    %s141 = sadd.s32 %s140, 1
    %p144 = scmp.eq.s32.totalorder %s14, 1
    %p145 = scmp.ne.s32.totalorder %s140, %s142
    %p146 = scmp.eq.s32.totalorder %s14, 0
    %p147 = por %p145, %p146
    %p148 = scmp.ne.s32.totalorder %s140, %s142
    %p149 = scmp.eq.s32.totalorder %s19, 1
    %p150 = por %p148, %p149
    %p151 = scmp.ne.s32.totalorder %s142, %s143
    %p152 = scmp.eq.s32.totalorder %s19, 0
    %p153 = por %p151, %p152
    %p154 = scmp.ne.s32.totalorder %s142, %s143
    %p155 = scmp.eq.s32.totalorder %s20, 1
    %p156 = por %p154, %p155
    %p158 = scmp.ne.s32.totalorder %s143, %s157
    %p159 = scmp.eq.s32.totalorder %s20, 0
    %p160 = por %p158, %p159
    %s161 = ssub.s32 %s21, %s40
    %s162 = ssub.s32 %s22, %s36
    %s163 = sor.u32 %s161, %s162
    %s164 = ssub.s32 %s23, %s32
    %s165 = sor.u32 %s163, %s164
    %p166 = scmp.eq.s32.totalorder %s165, 0
    %s168 = sadd.s32 %s167, 1
    %s169 = scalar_select %p166, %s167, %s168
    %p172 = pneg %p166
    %p173 = scmp.eq.s32.totalorder %s14, 1
    %p174 = por %p172, %p173
    %p175 = scmp.ne.s32.totalorder %s167, %s170
    %p176 = scmp.eq.s32.totalorder %s14, 0
    %p177 = por %p175, %p176
    %p178 = scmp.ne.s32.totalorder %s167, %s170
    %p179 = scmp.eq.s32.totalorder %s19, 1
    %p180 = por %p178, %p179
    %p181 = scmp.ne.s32.totalorder %s170, %s171
    %p182 = scmp.eq.s32.totalorder %s19, 0
    %p183 = por %p181, %p182
    %p184 = scmp.ne.s32.totalorder %s170, %s171
    %p185 = scmp.eq.s32.totalorder %s20, 1
    %p186 = por %p184, %p185
    %p188 = scmp.ne.s32.totalorder %s171, %s187
    %p189 = scmp.eq.s32.totalorder %s20, 0
    %p190 = por %p188, %p189
    %s191 = sadd.s32 %s21, %s22
    %s192 = sadd.s32 %s40, %s36
    %s193 = ssub.s32 %s191, %s192
    %s194 = ssub.s32 %s23, %s32
    %s195 = sor.u32 %s193, %s194
    %p196 = scmp.eq.s32.totalorder %s195, 0
    %s198 = sadd.s32 %s197, 1
    %s199 = scalar_select %p196, %s197, %s198
    %p202 = pneg %p196
    %p203 = scmp.eq.s32.totalorder %s14, 1
    %p204 = por %p202, %p203
    %p205 = scmp.ne.s32.totalorder %s197, %s200
    %p206 = scmp.eq.s32.totalorder %s14, 0
    %p207 = por %p205, %p206
    %p208 = scmp.ne.s32.totalorder %s197, %s200
    %p209 = scmp.eq.s32.totalorder %s19, 1
    %p210 = por %p208, %p209
    %p211 = scmp.ne.s32.totalorder %s200, %s201
    %p212 = scmp.eq.s32.totalorder %s19, 0
    %p213 = por %p211, %p212
    %p214 = scmp.ne.s32.totalorder %s200, %s201
    %p215 = scmp.eq.s32.totalorder %s20, 1
    %p216 = por %p214, %p215
    %p218 = scmp.ne.s32.totalorder %s201, %s217
    %p219 = scmp.eq.s32.totalorder %s20, 0
    %p220 = por %p218, %p219
    %s221 = sadd.s32 %s21, %s22
    %s222 = sadd.s32 %s40, %s36
    %s223 = ssub.s32 %s221, %s222
    %s224 = ssub.s32 %s23, %s32
    %s225 = sor.u32 %s223, %s224
    %p226 = scmp.eq.s32.totalorder %s225, 0
    %s228 = sadd.s32 %s227, 1
    %s229 = scalar_select %p226, %s227, %s228
    %p232 = pneg %p226
    %p233 = scmp.eq.s32.totalorder %s14, 1
    %p234 = por %p232, %p233
    %p235 = scmp.ne.s32.totalorder %s227, %s230
    %p236 = scmp.eq.s32.totalorder %s14, 0
    %p237 = por %p235, %p236
    %p238 = scmp.ne.s32.totalorder %s227, %s230
    %p239 = scmp.eq.s32.totalorder %s19, 1
    %p240 = por %p238, %p239
    %p241 = scmp.ne.s32.totalorder %s230, %s231
    %p242 = scmp.eq.s32.totalorder %s19, 0
    %p243 = por %p241, %p242
    %p244 = scmp.ne.s32.totalorder %s230, %s231
    %p245 = scmp.eq.s32.totalorder %s20, 1
    %p246 = por %p244, %p245
    %p248 = scmp.ne.s32.totalorder %s231, %s247
    %p249 = scmp.eq.s32.totalorder %s20, 0
    %p250 = por %p248, %p249
    %p251 = scmp.le.s32.totalorder 1, %s14
    %p252 = scmp.lt.s32.totalorder %s14, 3
    %p253 = pnand %p251, %p252
    %p254 = pneg %p253
    // Predicated region
    $region9: #{residual_block_forward.4} parent=5 // pred_check
      _
    $region10: #{residual_block_forward.4} parent=5 // pred_check_branch
      %256 = sbr.rel (%p253) target = $region12
    $region11: #{residual_block_forward.4} parent=5 // pred_region
      %s257 = ssub.s32 %s14, 1
      // Predicated region
      $region13: #{residual_block_forward.4} parent=11 // pred_check
        %p258 = pneg %p85
      $region14: #{residual_block_forward.4} parent=11 // pred_check_branch
        %260 = sbr.rel (%p258) target = $region16
      $region15: #{residual_block_forward.4} parent=11 // pred_region
        %p261 = scmp.lt.s32.totalorder %s26, 0
        %s262 = scalar_select %p261, %s26, 0
        %s263 = smul.addr %s262, 8
        %s264 = scalar_lea.vmem %s1, %s263
      $region16: #{residual_block_forward.4} parent=11 // pred_fallthru
        _
      // Predicated region
      $region17: #{residual_block_forward.4} parent=11 // pred_check
        %p265 = pneg %p111
      $region18: #{residual_block_forward.4} parent=11 // pred_check_branch
        %267 = sbr.rel (%p265) target = $region20
      $region19: #{residual_block_forward.4} parent=11 // pred_region
        %p268 = scmp.lt.s32.totalorder %s26, 0
        %s269 = scalar_select %p268, %s26, 0
        %s270 = scalar_lea.vmem %s2, %s269
      $region20: #{residual_block_forward.4} parent=11 // pred_fallthru
        _
      // Predicated region
      $region21: #{residual_block_forward.4} parent=11 // pred_check
        %p271 = pneg %p132
      $region22: #{residual_block_forward.4} parent=11 // pred_check_branch
        %273 = sbr.rel (%p271) target = $region24
      $region23: #{residual_block_forward.4} parent=11 // pred_region
        _
      $region24: #{residual_block_forward.4} parent=11 // pred_fallthru
        _
      // Predicated region
      $region25: #{residual_block_forward.4} parent=11 // pred_check
        %p274 = pneg %p153
      $region26: #{residual_block_forward.4} parent=11 // pred_check_branch
        %276 = sbr.rel (%p274) target = $region28
      $region27: #{residual_block_forward.4} parent=11 // pred_region
        _
      $region28: #{residual_block_forward.4} parent=11 // pred_fallthru
        _
    $region12: #{residual_block_forward.4} parent=5 // pred_fallthru
      _
    %p277 = scmp.lt.s32.totalorder %s14, 2
    // Predicated region
    $region29: #{residual_block_forward.4} parent=5 // pred_check
      %p278 = pneg %p277
    $region30: #{residual_block_forward.4} parent=5 // pred_check_branch
      %280 = sbr.rel (%p278) target = $region32
    $region31: #{residual_block_forward.4} parent=5 // pred_region
      // Predicated region
      $region33: #{residual_block_forward.4} parent=31 // pred_check
        %p281 = pneg %p53
      $region34: #{residual_block_forward.4} parent=31 // pred_check_branch
        %283 = sbr.rel (%p281) target = $region36
      $region35: #{residual_block_forward.4} parent=31 // pred_region
        %p284 = scmp.lt.s32.totalorder %s21, 1
        %s285 = scalar_select %p284, %s21, 1
        %s286 = smul.addr %s285, 32
        %s287 = smul.addr %s286, 8
        %s288 = scalar_lea.vmem %s0, %s287
      $region36: #{residual_block_forward.4} parent=31 // pred_fallthru
        _
    $region32: #{residual_block_forward.4} parent=5 // pred_fallthru
      _
    %p289 = scmp.le.s32.totalorder 1, %s14
    %p290 = scmp.lt.s32.totalorder %s14, 3
    %p291 = pnand %p289, %p290
    %p292 = pneg %p291
    // Predicated region
    $region37: #{residual_block_forward.4} parent=5 // pred_check
      _
    $region38: #{residual_block_forward.4} parent=5 // pred_check_branch
      %294 = sbr.rel (%p291) target = $region40
    $region39: #{residual_block_forward.4} parent=5 // pred_region
      %s295 = ssub.s32 %s14, 1
      %p296 = scmp.lt.s32.totalorder %s24, 1
      %s297 = scalar_select %p296, %s24, 1
      %s298 = smul.addr %s297, 32
      %s299 = smul.addr %s298, 8
      %s300 = scalar_lea.vmem %s0, %s299
      %p301 = pneg %p59
      %p302 = pneg %p56
      %p303 = scmp.lt.s32.totalorder %s26, 0
      %s304 = scalar_select %p303, %s26, 0
      %s305 = smul.addr %s304, 8
      %s306 = scalar_lea.vmem %s1, %s305
      %p307 = pneg %p85
      %p308 = pneg %p82
      %p309 = scmp.lt.s32.totalorder %s26, 0
      %s310 = scalar_select %p309, %s26, 0
      %s311 = scalar_lea.vmem %s2, %s310
      %p312 = pneg %p111
      %p313 = pneg %p108
      %p314 = pneg %p132
      %p315 = pneg %p129
      %p316 = pneg %p153
      %p317 = pneg %p150
      %p318 = pneg %p183
      %p319 = pneg %p180
      %s320 = smul.u32 16, %s25
      %p321 = scmp.lt.s32.totalorder %s24, 1
      %s322 = scalar_select %p321, %s24, 1
      %p323 = scmp.lt.s32.totalorder %s320, 15
      %s324 = scalar_select %p323, %s320, 15
      %p325 = scmp.lt.s32.totalorder %s26, 0
      %s326 = scalar_select %p325, %s26, 0
      %s327 = smul.addr %s324, 2
      %s328 = sadd.s32 %s326, %s327
      %s329 = smul.addr %s322, 32
      %s330 = sadd.s32 %s328, %s329
      %s331 = smul.addr %s330, 8
      %s332 = scalar_lea.vmem %s5, %s331
      %p333 = pneg %p213
      %p334 = pneg %p210
      %s335 = sadd.s32 %s24, %s25
      %p336 = scmp.lt.s32.totalorder %s335, 1
      %s337 = scalar_select %p336, %s335, 1
      %p338 = scmp.lt.s32.totalorder %s26, 0
      %s339 = scalar_select %p338, %s26, 0
      %s340 = sadd.s32 %s339, %s337
      %s341 = scalar_lea.vmem %s6, %s340
      %p342 = pneg %p243
      %p343 = pneg %p240
      %s344 = sadd.s32 %s24, %s25
      %p345 = scmp.lt.s32.totalorder %s344, 1
      %s346 = scalar_select %p345, %s344, 1
      %p347 = scmp.lt.s32.totalorder %s26, 0
      %s348 = scalar_select %p347, %s26, 0
      %s349 = sadd.s32 %s348, %s346
      %s350 = scalar_lea.vmem %s7, %s349
      %p351 = scmp.lt.s32.totalorder %s24, 1
      %s352 = scalar_select %p351, %s24, 1
      %s353 = smul.addr %s352, 32
      %s354 = smul.addr %s353, 8
      %s355 = scalar_lea.vmem %s0, %s354
      %p356 = scmp.lt.s32.totalorder %s26, 0
      %s357 = scalar_select %p356, %s26, 0
      %s358 = smul.addr %s357, 8
      %s359 = scalar_lea.vmem %s1, %s358
      %p360 = scmp.lt.s32.totalorder %s26, 0
      %s361 = scalar_select %p360, %s26, 0
      %s362 = scalar_lea.vmem %s2, %s361
      %s363 = smul.u32 16, %s25
      %p364 = scmp.lt.s32.totalorder %s24, 1
      %s365 = scalar_select %p364, %s24, 1
      %p366 = scmp.lt.s32.totalorder %s363, 15
      %s367 = scalar_select %p366, %s363, 15
      %p368 = scmp.lt.s32.totalorder %s26, 0
      %s369 = scalar_select %p368, %s26, 0
      %s370 = smul.addr %s367, 2
      %s371 = sadd.s32 %s369, %s370
      %s372 = smul.addr %s365, 32
      %s373 = sadd.s32 %s371, %s372
      %s374 = smul.addr %s373, 8
      %s375 = scalar_lea.vmem %s5, %s374
      %s376 = smul.u32 16, %s25
      %s377 = sadd.s32 %s24, %s25
      %p378 = scmp.lt.s32.totalorder %s377, 1
      %s379 = scalar_select %p378, %s377, 1
      %p380 = scmp.lt.s32.totalorder %s26, 0
      %s381 = scalar_select %p380, %s26, 0
      %s382 = sadd.s32 %s381, %s379
      %s383 = scalar_lea.vmem %s6, %s382
      %s384 = sadd.s32 %s24, %s25
      %s385 = sadd.s32 %s24, %s25
      %p386 = scmp.lt.s32.totalorder %s385, 1
      %s387 = scalar_select %p386, %s385, 1
      %p388 = scmp.lt.s32.totalorder %s26, 0
      %s389 = scalar_select %p388, %s26, 0
      %s390 = sadd.s32 %s389, %s387
      %s391 = scalar_lea.vmem %s7, %s390
      %s392 = sadd.s32 %s24, %s25
      %s393 = smul.u32 %s25, 16
      %s394 = smul.u32 %s393, 16
      %s395 = scalar_lea.vmem %s355, %s394
      %v396 = vld [vmem:[%s395] sm:$0xff]
      %v397 = vld [vmem:[%s395 + $0x8] sm:$0xff]
      %v398 = vld [vmem:[%s395 + $0x10] sm:$0xff]
      %v399 = vld [vmem:[%s395 + $0x18] sm:$0xff]
      %v400 = vld [vmem:[%s395 + $0x20] sm:$0xff]
      %v401 = vld [vmem:[%s395 + $0x28] sm:$0xff]
      %v402 = vld [vmem:[%s395 + $0x30] sm:$0xff]
      %v403 = vld [vmem:[%s395 + $0x38] sm:$0xff]
      %v404 = vld [vmem:[%s395 + $0x40] sm:$0xff]
      %v405 = vld [vmem:[%s395 + $0x48] sm:$0xff]
      %v406 = vld [vmem:[%s395 + $0x50] sm:$0xff]
      %v407 = vld [vmem:[%s395 + $0x58] sm:$0xff]
      %v408 = vld [vmem:[%s395 + $0x60] sm:$0xff]
      %v409 = vld [vmem:[%s395 + $0x68] sm:$0xff]
      %v410 = vld [vmem:[%s395 + $0x70] sm:$0xff]
      %v411 = vld [vmem:[%s395 + $0x78] sm:$0xff]
      %v412 = vld [vmem:[%s395 + $0x80] sm:$0xff]
      %v413 = vld [vmem:[%s395 + $0x88] sm:$0xff]
      %v414 = vld [vmem:[%s395 + $0x90] sm:$0xff]
      %v415 = vld [vmem:[%s395 + $0x98] sm:$0xff]
      %v416 = vld [vmem:[%s395 + $0xa0] sm:$0xff]
      %v417 = vld [vmem:[%s395 + $0xa8] sm:$0xff]
      %v418 = vld [vmem:[%s395 + $0xb0] sm:$0xff]
      %v419 = vld [vmem:[%s395 + $0xb8] sm:$0xff]
      %v420 = vld [vmem:[%s395 + $0xc0] sm:$0xff]
      %v421 = vld [vmem:[%s395 + $0xc8] sm:$0xff]
      %v422 = vld [vmem:[%s395 + $0xd0] sm:$0xff]
      %v423 = vld [vmem:[%s395 + $0xd8] sm:$0xff]
      %v424 = vld [vmem:[%s395 + $0xe0] sm:$0xff]
      %v425 = vld [vmem:[%s395 + $0xe8] sm:$0xff]
      %v426 = vld [vmem:[%s395 + $0xf0] sm:$0xff]
      %v427 = vld [vmem:[%s395 + $0xf8] sm:$0xff]
      %v428 = vld [vmem:[%s3] sm:$0x1]
      %v430 = vlaneseq
      %v431 = vshrl.u32 %v430, 7
      %v432 = vsub.s32 0, %v431
      %v433 = vrot.slane %v428, %v432
      %v435 = vmul.f32 %v396, %v433
      %v436 = vmul.f32 %v397, %v433
      %v437 = vmul.f32 %v398, %v433
      %v438 = vmul.f32 %v399, %v433
      %v439 = vmul.f32 %v400, %v433
      %v440 = vmul.f32 %v401, %v433
      %v441 = vmul.f32 %v402, %v433
      %v442 = vmul.f32 %v403, %v433
      %v443 = vmul.f32 %v404, %v433
      %v444 = vmul.f32 %v405, %v433
      %v445 = vmul.f32 %v406, %v433
      %v446 = vmul.f32 %v407, %v433
      %v447 = vmul.f32 %v408, %v433
      %v448 = vmul.f32 %v409, %v433
      %v449 = vmul.f32 %v410, %v433
      %v450 = vmul.f32 %v411, %v433
      %v451 = vmul.f32 %v412, %v433
      %v452 = vmul.f32 %v413, %v433
      %v453 = vmul.f32 %v414, %v433
      %v454 = vmul.f32 %v415, %v433
      %v455 = vmul.f32 %v416, %v433
      %v456 = vmul.f32 %v417, %v433
      %v457 = vmul.f32 %v418, %v433
      %v458 = vmul.f32 %v419, %v433
      %v459 = vmul.f32 %v420, %v433
      %v460 = vmul.f32 %v421, %v433
      %v461 = vmul.f32 %v422, %v433
      %v462 = vmul.f32 %v423, %v433
      %v463 = vmul.f32 %v424, %v433
      %v464 = vmul.f32 %v425, %v433
      %v465 = vmul.f32 %v426, %v433
      %v466 = vmul.f32 %v427, %v433
      %v467 = vld [vmem:[%s4] sm:$0x1]
      %v469 = vlaneseq
      %v470 = vshrl.u32 %v469, 7
      %v471 = vsub.s32 0, %v470
      %v472 = vrot.slane %v467, %v471
      %v474 = vadd.f32 %v435, %v472
      %v475 = vadd.f32 %v436, %v472
      %v476 = vadd.f32 %v437, %v472
      %v477 = vadd.f32 %v438, %v472
      %v478 = vadd.f32 %v439, %v472
      %v479 = vadd.f32 %v440, %v472
      %v480 = vadd.f32 %v441, %v472
      %v481 = vadd.f32 %v442, %v472
      %v482 = vadd.f32 %v443, %v472
      %v483 = vadd.f32 %v444, %v472
      %v484 = vadd.f32 %v445, %v472
      %v485 = vadd.f32 %v446, %v472
      %v486 = vadd.f32 %v447, %v472
      %v487 = vadd.f32 %v448, %v472
      %v488 = vadd.f32 %v449, %v472
      %v489 = vadd.f32 %v450, %v472
      %v490 = vadd.f32 %v451, %v472
      %v491 = vadd.f32 %v452, %v472
      %v492 = vadd.f32 %v453, %v472
      %v493 = vadd.f32 %v454, %v472
      %v494 = vadd.f32 %v455, %v472
      %v495 = vadd.f32 %v456, %v472
      %v496 = vadd.f32 %v457, %v472
      %v497 = vadd.f32 %v458, %v472
      %v498 = vadd.f32 %v459, %v472
      %v499 = vadd.f32 %v460, %v472
      %v500 = vadd.f32 %v461, %v472
      %v501 = vadd.f32 %v462, %v472
      %v502 = vadd.f32 %v463, %v472
      %v503 = vadd.f32 %v464, %v472
      %v504 = vadd.f32 %v465, %v472
      %v505 = vadd.f32 %v466, %v472
      %v506 = vmax.f32 %v474, 0.0
      %v507 = vmax.f32 %v475, 0.0
      %v508 = vmax.f32 %v476, 0.0
      %v509 = vmax.f32 %v477, 0.0
      %v510 = vmax.f32 %v478, 0.0
      %v511 = vmax.f32 %v479, 0.0
      %v512 = vmax.f32 %v480, 0.0
      %v513 = vmax.f32 %v481, 0.0
      %v514 = vmax.f32 %v482, 0.0
      %v515 = vmax.f32 %v483, 0.0
      %v516 = vmax.f32 %v484, 0.0
      %v517 = vmax.f32 %v485, 0.0
      %v518 = vmax.f32 %v486, 0.0
      %v519 = vmax.f32 %v487, 0.0
      %v520 = vmax.f32 %v488, 0.0
      %v521 = vmax.f32 %v489, 0.0
      %v522 = vmax.f32 %v490, 0.0
      %v523 = vmax.f32 %v491, 0.0
      %v524 = vmax.f32 %v492, 0.0
      %v525 = vmax.f32 %v493, 0.0
      %v526 = vmax.f32 %v494, 0.0
      %v527 = vmax.f32 %v495, 0.0
      %v528 = vmax.f32 %v496, 0.0
      %v529 = vmax.f32 %v497, 0.0
      %v530 = vmax.f32 %v498, 0.0
      %v531 = vmax.f32 %v499, 0.0
      %v532 = vmax.f32 %v500, 0.0
      %v533 = vmax.f32 %v501, 0.0
      %v534 = vmax.f32 %v502, 0.0
      %v535 = vmax.f32 %v503, 0.0
      %v536 = vmax.f32 %v504, 0.0
      %v537 = vmax.f32 %v505, 0.0
      %s538 = ssub.s32 %s393, 1
      %p539 = scmp.gt.s32.totalorder %s538, 0
      %s540 = scalar_select %p539, %s538, 0
      %s541 = smul.u32 %s540, 16
      %s542 = scalar_lea.vmem %s355, %s541
      %v543 = vld [vmem:[%s542] sm:$0xff]
      %v544 = vld [vmem:[%s542 + $0x8] sm:$0xff]
      %v545 = vmul.f32 %v543, %v433
      %v546 = vmul.f32 %v544, %v433
      %v547 = vadd.f32 %v545, %v472
      %v548 = vadd.f32 %v546, %v472
      %v549 = vmax.f32 %v547, 0.0
      %v550 = vmax.f32 %v548, 0.0
      %p551 = scmp.gt.s32.totalorder %s25, 0
      %s552 = scalar_select %p551, 1, 0
      %v553 = vstv %s552
      %vm554 = vcmp.eq.s32.totalorder %v553, 1
      %v555 = vsel %vm554, %v549, 0.0
      %v556 = vsel %vm554, %v550, 0.0
      %s557 = sadd.s32 %s393, 16
      %p558 = scmp.lt.s32.totalorder %s557, 15
      %s559 = scalar_select %p558, %s557, 15
      %s560 = smul.u32 %s559, 16
      %s561 = scalar_lea.vmem %s355, %s560
      %v562 = vld [vmem:[%s561] sm:$0xff]
      %v563 = vld [vmem:[%s561 + $0x8] sm:$0xff]
      %v564 = vmul.f32 %v562, %v433
      %v565 = vmul.f32 %v563, %v433
      %v566 = vadd.f32 %v564, %v472
      %v567 = vadd.f32 %v565, %v472
      %v568 = vmax.f32 %v566, 0.0
      %v569 = vmax.f32 %v567, 0.0
      %p570 = scmp.eq.s32.totalorder %s25, 0
      %s571 = scalar_select %p570, 1, 0
      %v572 = vstv %s571
      %vm573 = vcmp.eq.s32.totalorder %v572, 1
      %v574 = vsel %vm573, 0.0, %v568
      %v575 = vsel %vm573, 0.0, %v569
      %vm612 = vcmask 1040384
      %v613 = vrot.slane %v555, 7
      %v614 = vrot.slane %v556, 7
      %v615 = vsel %vm612, %v613, %v614
      %v616 = vrot.slane %v506, 7
      %v617 = vrot.slane %v507, 7
      %v618 = vsel %vm612, %v616, %v617
      %v619 = vrot.slane %v508, 7
      %v620 = vrot.slane %v509, 7
      %v621 = vsel %vm612, %v619, %v620
      %v622 = vrot.slane %v510, 7
      %v623 = vrot.slane %v511, 7
      %v624 = vsel %vm612, %v622, %v623
      %v625 = vrot.slane %v512, 7
      %v626 = vrot.slane %v513, 7
      %v627 = vsel %vm612, %v625, %v626
      %v628 = vrot.slane %v514, 7
      %v629 = vrot.slane %v515, 7
      %v630 = vsel %vm612, %v628, %v629
      %v631 = vrot.slane %v516, 7
      %v632 = vrot.slane %v517, 7
      %v633 = vsel %vm612, %v631, %v632
      %v634 = vrot.slane %v518, 7
      %v635 = vrot.slane %v519, 7
      %v636 = vsel %vm612, %v634, %v635
      %v637 = vrot.slane %v520, 7
      %v638 = vrot.slane %v521, 7
      %v639 = vsel %vm612, %v637, %v638
      %v640 = vrot.slane %v522, 7
      %v641 = vrot.slane %v523, 7
      %v642 = vsel %vm612, %v640, %v641
      %v643 = vrot.slane %v524, 7
      %v644 = vrot.slane %v525, 7
      %v645 = vsel %vm612, %v643, %v644
      %v646 = vrot.slane %v526, 7
      %v647 = vrot.slane %v527, 7
      %v648 = vsel %vm612, %v646, %v647
      %v649 = vrot.slane %v528, 7
      %v650 = vrot.slane %v529, 7
      %v651 = vsel %vm612, %v649, %v650
      %v652 = vrot.slane %v530, 7
      %v653 = vrot.slane %v531, 7
      %v654 = vsel %vm612, %v652, %v653
      %v655 = vrot.slane %v532, 7
      %v656 = vrot.slane %v533, 7
      %v657 = vsel %vm612, %v655, %v656
      %v658 = vrot.slane %v534, 7
      %v659 = vrot.slane %v535, 7
      %v660 = vsel %vm612, %v658, %v659
      %v661 = vrot.slane %v536, 7
      %v662 = vrot.slane %v537, 7
      %v663 = vsel %vm612, %v661, %v662
      %v664 = vrot.slane %v574, 7
      %v665 = vrot.slane %v575, 7
      %v666 = vsel %vm612, %v664, %v665
      %v719 = vsel %vm612, 0.0, %v613
      %v720 = vsel %vm612, 0.0, %v616
      %v721 = vsel %vm612, 0.0, %v619
      %v722 = vsel %vm612, 0.0, %v622
      %v723 = vsel %vm612, 0.0, %v625
      %v724 = vsel %vm612, 0.0, %v628
      %v725 = vsel %vm612, 0.0, %v631
      %v726 = vsel %vm612, 0.0, %v634
      %v727 = vsel %vm612, 0.0, %v637
      %v728 = vsel %vm612, 0.0, %v640
      %v729 = vsel %vm612, 0.0, %v643
      %v730 = vsel %vm612, 0.0, %v646
      %v731 = vsel %vm612, 0.0, %v649
      %v732 = vsel %vm612, 0.0, %v652
      %v733 = vsel %vm612, 0.0, %v655
      %v734 = vsel %vm612, 0.0, %v658
      %v735 = vsel %vm612, 0.0, %v661
      %v736 = vsel %vm612, 0.0, %v664
      %v737 = vsel %vm612, %v614, 0.0
      %v738 = vsel %vm612, %v617, 0.0
      %v739 = vsel %vm612, %v620, 0.0
      %v740 = vsel %vm612, %v623, 0.0
      %v741 = vsel %vm612, %v626, 0.0
      %v742 = vsel %vm612, %v629, 0.0
      %v743 = vsel %vm612, %v632, 0.0
      %v744 = vsel %vm612, %v635, 0.0
      %v745 = vsel %vm612, %v638, 0.0
      %v746 = vsel %vm612, %v641, 0.0
      %v747 = vsel %vm612, %v644, 0.0
      %v748 = vsel %vm612, %v647, 0.0
      %v749 = vsel %vm612, %v650, 0.0
      %v750 = vsel %vm612, %v653, 0.0
      %v751 = vsel %vm612, %v656, 0.0
      %v752 = vsel %vm612, %v659, 0.0
      %v753 = vsel %vm612, %v662, 0.0
      %v754 = vsel %vm612, %v665, 0.0
      %vm787 = vcmask 1046528
      %v788 = vrot.slane %v719, 1
      %v789 = vrot.slane %v615, 1
      %v790 = vsel %vm787, %v788, %v789
      %v791 = vrot.slane %v737, 1
      %v792 = vsel %vm787, %v789, %v791
      %v793 = vrot.slane %v720, 1
      %v794 = vrot.slane %v618, 1
      %v795 = vsel %vm787, %v793, %v794
      %v796 = vrot.slane %v738, 1
      %v797 = vsel %vm787, %v794, %v796
      %v798 = vrot.slane %v721, 1
      %v799 = vrot.slane %v621, 1
      %v800 = vsel %vm787, %v798, %v799
      %v801 = vrot.slane %v739, 1
      %v802 = vsel %vm787, %v799, %v801
      %v803 = vrot.slane %v722, 1
      %v804 = vrot.slane %v624, 1
      %v805 = vsel %vm787, %v803, %v804
      %v806 = vrot.slane %v740, 1
      %v807 = vsel %vm787, %v804, %v806
      %v808 = vrot.slane %v723, 1
      %v809 = vrot.slane %v627, 1
      %v810 = vsel %vm787, %v808, %v809
      %v811 = vrot.slane %v741, 1
      %v812 = vsel %vm787, %v809, %v811
      %v813 = vrot.slane %v724, 1
      %v814 = vrot.slane %v630, 1
      %v815 = vsel %vm787, %v813, %v814
      %v816 = vrot.slane %v742, 1
      %v817 = vsel %vm787, %v814, %v816
      %v818 = vrot.slane %v725, 1
      %v819 = vrot.slane %v633, 1
      %v820 = vsel %vm787, %v818, %v819
      %v821 = vrot.slane %v743, 1
      %v822 = vsel %vm787, %v819, %v821
      %v823 = vrot.slane %v726, 1
      %v824 = vrot.slane %v636, 1
      %v825 = vsel %vm787, %v823, %v824
      %v826 = vrot.slane %v744, 1
      %v827 = vsel %vm787, %v824, %v826
      %v828 = vrot.slane %v727, 1
      %v829 = vrot.slane %v639, 1
      %v830 = vsel %vm787, %v828, %v829
      %v831 = vrot.slane %v745, 1
      %v832 = vsel %vm787, %v829, %v831
      %v833 = vrot.slane %v728, 1
      %v834 = vrot.slane %v642, 1
      %v835 = vsel %vm787, %v833, %v834
      %v836 = vrot.slane %v746, 1
      %v837 = vsel %vm787, %v834, %v836
      %v838 = vrot.slane %v729, 1
      %v839 = vrot.slane %v645, 1
      %v840 = vsel %vm787, %v838, %v839
      %v841 = vrot.slane %v747, 1
      %v842 = vsel %vm787, %v839, %v841
      %v843 = vrot.slane %v730, 1
      %v844 = vrot.slane %v648, 1
      %v845 = vsel %vm787, %v843, %v844
      %v846 = vrot.slane %v748, 1
      %v847 = vsel %vm787, %v844, %v846
      %v848 = vrot.slane %v731, 1
      %v849 = vrot.slane %v651, 1
      %v850 = vsel %vm787, %v848, %v849
      %v851 = vrot.slane %v749, 1
      %v852 = vsel %vm787, %v849, %v851
      %v853 = vrot.slane %v732, 1
      %v854 = vrot.slane %v654, 1
      %v855 = vsel %vm787, %v853, %v854
      %v856 = vrot.slane %v750, 1
      %v857 = vsel %vm787, %v854, %v856
      %v858 = vrot.slane %v733, 1
      %v859 = vrot.slane %v657, 1
      %v860 = vsel %vm787, %v858, %v859
      %v861 = vrot.slane %v751, 1
      %v862 = vsel %vm787, %v859, %v861
      %v863 = vrot.slane %v734, 1
      %v864 = vrot.slane %v660, 1
      %v865 = vsel %vm787, %v863, %v864
      %v866 = vrot.slane %v752, 1
      %v867 = vsel %vm787, %v864, %v866
      %868 = vrot.lane.b32.xlu0 %v790, 4
      %v869 = vpop.permute.xlu0 %868
      %870 = vrot.lane.b32.xlu0 %v792, 4
      %v871 = vpop.permute.xlu0 %870
      %872 = vrot.lane.b32.xlu0 %v795, 4
      %v873 = vpop.permute.xlu0 %872
      %874 = vrot.lane.b32.xlu0 %v797, 4
      %v875 = vpop.permute.xlu0 %874
      %876 = vrot.lane.b32.xlu0 %v800, 4
      %v877 = vpop.permute.xlu0 %876
      %878 = vrot.lane.b32.xlu0 %v802, 4
      %v879 = vpop.permute.xlu0 %878
      %880 = vrot.lane.b32.xlu0 %v805, 4
      %v881 = vpop.permute.xlu0 %880
      %882 = vrot.lane.b32.xlu0 %v807, 4
      %v883 = vpop.permute.xlu0 %882
      %884 = vrot.lane.b32.xlu0 %v810, 4
      %v885 = vpop.permute.xlu0 %884
      %886 = vrot.lane.b32.xlu0 %v812, 4
      %v887 = vpop.permute.xlu0 %886
      %888 = vrot.lane.b32.xlu0 %v815, 4
      %v889 = vpop.permute.xlu0 %888
      %890 = vrot.lane.b32.xlu0 %v817, 4
      %v891 = vpop.permute.xlu0 %890
      %892 = vrot.lane.b32.xlu0 %v820, 4
      %v893 = vpop.permute.xlu0 %892
      %894 = vrot.lane.b32.xlu0 %v822, 4
      %v895 = vpop.permute.xlu0 %894
      %896 = vrot.lane.b32.xlu0 %v825, 4
      %v897 = vpop.permute.xlu0 %896
      %898 = vrot.lane.b32.xlu0 %v827, 4
      %v899 = vpop.permute.xlu0 %898
      %900 = vrot.lane.b32.xlu0 %v830, 4
      %v901 = vpop.permute.xlu0 %900
      %902 = vrot.lane.b32.xlu0 %v832, 4
      %v903 = vpop.permute.xlu0 %902
      %904 = vrot.lane.b32.xlu0 %v835, 4
      %v905 = vpop.permute.xlu0 %904
      %906 = vrot.lane.b32.xlu0 %v837, 4
      %v907 = vpop.permute.xlu0 %906
      %908 = vrot.lane.b32.xlu0 %v840, 4
      %v909 = vpop.permute.xlu0 %908
      %910 = vrot.lane.b32.xlu0 %v842, 4
      %v911 = vpop.permute.xlu0 %910
      %912 = vrot.lane.b32.xlu0 %v845, 4
      %v913 = vpop.permute.xlu0 %912
      %914 = vrot.lane.b32.xlu0 %v847, 4
      %v915 = vpop.permute.xlu0 %914
      %916 = vrot.lane.b32.xlu0 %v850, 4
      %v917 = vpop.permute.xlu0 %916
      %918 = vrot.lane.b32.xlu0 %v852, 4
      %v919 = vpop.permute.xlu0 %918
      %920 = vrot.lane.b32.xlu0 %v855, 4
      %v921 = vpop.permute.xlu0 %920
      %922 = vrot.lane.b32.xlu0 %v857, 4
      %v923 = vpop.permute.xlu0 %922
      %924 = vrot.lane.b32.xlu0 %v860, 4
      %v925 = vpop.permute.xlu0 %924
      %926 = vrot.lane.b32.xlu0 %v862, 4
      %v927 = vpop.permute.xlu0 %926
      %928 = vrot.lane.b32.xlu0 %v865, 4
      %v929 = vpop.permute.xlu0 %928
      %930 = vrot.lane.b32.xlu0 %v867, 4
      %v931 = vpop.permute.xlu0 %930
      %vm964 = vcmask 1045504
      %v965 = vrot.slane %v719, 2
      %v966 = vrot.slane %v615, 2
      %v967 = vsel %vm964, %v965, %v966
      %v968 = vrot.slane %v737, 2
      %v969 = vsel %vm964, %v966, %v968
      %v970 = vrot.slane %v720, 2
      %v971 = vrot.slane %v618, 2
      %v972 = vsel %vm964, %v970, %v971
      %v973 = vrot.slane %v738, 2
      %v974 = vsel %vm964, %v971, %v973
      %v975 = vrot.slane %v721, 2
      %v976 = vrot.slane %v621, 2
      %v977 = vsel %vm964, %v975, %v976
      %v978 = vrot.slane %v739, 2
      %v979 = vsel %vm964, %v976, %v978
      %v980 = vrot.slane %v722, 2
      %v981 = vrot.slane %v624, 2
      %v982 = vsel %vm964, %v980, %v981
      %v983 = vrot.slane %v740, 2
      %v984 = vsel %vm964, %v981, %v983
      %v985 = vrot.slane %v723, 2
      %v986 = vrot.slane %v627, 2
      %v987 = vsel %vm964, %v985, %v986
      %v988 = vrot.slane %v741, 2
      %v989 = vsel %vm964, %v986, %v988
      %v990 = vrot.slane %v724, 2
      %v991 = vrot.slane %v630, 2
      %v992 = vsel %vm964, %v990, %v991
      %v993 = vrot.slane %v742, 2
      %v994 = vsel %vm964, %v991, %v993
      %v995 = vrot.slane %v725, 2
      %v996 = vrot.slane %v633, 2
      %v997 = vsel %vm964, %v995, %v996
      %v998 = vrot.slane %v743, 2
      %v999 = vsel %vm964, %v996, %v998
      %v1000 = vrot.slane %v726, 2
      %v1001 = vrot.slane %v636, 2
      %v1002 = vsel %vm964, %v1000, %v1001
      %v1003 = vrot.slane %v744, 2
      %v1004 = vsel %vm964, %v1001, %v1003
      %v1005 = vrot.slane %v727, 2
      %v1006 = vrot.slane %v639, 2
      %v1007 = vsel %vm964, %v1005, %v1006
      %v1008 = vrot.slane %v745, 2
      %v1009 = vsel %vm964, %v1006, %v1008
      %v1010 = vrot.slane %v728, 2
      %v1011 = vrot.slane %v642, 2
      %v1012 = vsel %vm964, %v1010, %v1011
      %v1013 = vrot.slane %v746, 2
      %v1014 = vsel %vm964, %v1011, %v1013
      %v1015 = vrot.slane %v729, 2
      %v1016 = vrot.slane %v645, 2
      %v1017 = vsel %vm964, %v1015, %v1016
      %v1018 = vrot.slane %v747, 2
      %v1019 = vsel %vm964, %v1016, %v1018
      %v1020 = vrot.slane %v730, 2
      %v1021 = vrot.slane %v648, 2
      %v1022 = vsel %vm964, %v1020, %v1021
      %v1023 = vrot.slane %v748, 2
      %v1024 = vsel %vm964, %v1021, %v1023
      %v1025 = vrot.slane %v731, 2
      %v1026 = vrot.slane %v651, 2
      %v1027 = vsel %vm964, %v1025, %v1026
      %v1028 = vrot.slane %v749, 2
      %v1029 = vsel %vm964, %v1026, %v1028
      %v1030 = vrot.slane %v732, 2
      %v1031 = vrot.slane %v654, 2
      %v1032 = vsel %vm964, %v1030, %v1031
      %v1033 = vrot.slane %v750, 2
      %v1034 = vsel %vm964, %v1031, %v1033
      %v1035 = vrot.slane %v733, 2
      %v1036 = vrot.slane %v657, 2
      %v1037 = vsel %vm964, %v1035, %v1036
      %v1038 = vrot.slane %v751, 2
      %v1039 = vsel %vm964, %v1036, %v1038
      %v1040 = vrot.slane %v734, 2
      %v1041 = vrot.slane %v660, 2
      %v1042 = vsel %vm964, %v1040, %v1041
      %v1043 = vrot.slane %v752, 2
      %v1044 = vsel %vm964, %v1041, %v1043
      %1045 = vrot.lane.b32.xlu0 %v967, 8
      %v1046 = vpop.permute.xlu0 %1045
      %1047 = vrot.lane.b32.xlu0 %v969, 8
      %v1048 = vpop.permute.xlu0 %1047
      %1049 = vrot.lane.b32.xlu0 %v972, 8
      %v1050 = vpop.permute.xlu0 %1049
      %1051 = vrot.lane.b32.xlu0 %v974, 8
      %v1052 = vpop.permute.xlu0 %1051
      %1053 = vrot.lane.b32.xlu0 %v977, 8
      %v1054 = vpop.permute.xlu0 %1053
      %1055 = vrot.lane.b32.xlu0 %v979, 8
      %v1056 = vpop.permute.xlu0 %1055
      %1057 = vrot.lane.b32.xlu0 %v982, 8
      %v1058 = vpop.permute.xlu0 %1057
      %1059 = vrot.lane.b32.xlu0 %v984, 8
      %v1060 = vpop.permute.xlu0 %1059
      %1061 = vrot.lane.b32.xlu0 %v987, 8
      %v1062 = vpop.permute.xlu0 %1061
      %1063 = vrot.lane.b32.xlu0 %v989, 8
      %v1064 = vpop.permute.xlu0 %1063
      %1065 = vrot.lane.b32.xlu0 %v992, 8
      %v1066 = vpop.permute.xlu0 %1065
      %1067 = vrot.lane.b32.xlu0 %v994, 8
      %v1068 = vpop.permute.xlu0 %1067
      %1069 = vrot.lane.b32.xlu0 %v997, 8
      %v1070 = vpop.permute.xlu0 %1069
      %1071 = vrot.lane.b32.xlu0 %v999, 8
      %v1072 = vpop.permute.xlu0 %1071
      %1073 = vrot.lane.b32.xlu0 %v1002, 8
      %v1074 = vpop.permute.xlu0 %1073
      %1075 = vrot.lane.b32.xlu0 %v1004, 8
      %v1076 = vpop.permute.xlu0 %1075
      %1077 = vrot.lane.b32.xlu0 %v1007, 8
      %v1078 = vpop.permute.xlu0 %1077
      %1079 = vrot.lane.b32.xlu0 %v1009, 8
      %v1080 = vpop.permute.xlu0 %1079
      %1081 = vrot.lane.b32.xlu0 %v1012, 8
      %v1082 = vpop.permute.xlu0 %1081
      %1083 = vrot.lane.b32.xlu0 %v1014, 8
      %v1084 = vpop.permute.xlu0 %1083
      %1085 = vrot.lane.b32.xlu0 %v1017, 8
      %v1086 = vpop.permute.xlu0 %1085
      %1087 = vrot.lane.b32.xlu0 %v1019, 8
      %v1088 = vpop.permute.xlu0 %1087
      %1089 = vrot.lane.b32.xlu0 %v1022, 8
      %v1090 = vpop.permute.xlu0 %1089
      %1091 = vrot.lane.b32.xlu0 %v1024, 8
      %v1092 = vpop.permute.xlu0 %1091
      %1093 = vrot.lane.b32.xlu0 %v1027, 8
      %v1094 = vpop.permute.xlu0 %1093
      %1095 = vrot.lane.b32.xlu0 %v1029, 8
      %v1096 = vpop.permute.xlu0 %1095
      %1097 = vrot.lane.b32.xlu0 %v1032, 8
      %v1098 = vpop.permute.xlu0 %1097
      %1099 = vrot.lane.b32.xlu0 %v1034, 8
      %v1100 = vpop.permute.xlu0 %1099
      %1101 = vrot.lane.b32.xlu0 %v1037, 8
      %v1102 = vpop.permute.xlu0 %1101
      %1103 = vrot.lane.b32.xlu0 %v1039, 8
      %v1104 = vpop.permute.xlu0 %1103
      %1105 = vrot.lane.b32.xlu0 %v1042, 8
      %v1106 = vpop.permute.xlu0 %1105
      %1107 = vrot.lane.b32.xlu0 %v1044, 8
      %v1108 = vpop.permute.xlu0 %1107
      %1142 = vrot.lane.b32.xlu0 %v720, 12
      %v1143 = vpop.permute.xlu0 %1142
      %1144 = vrot.lane.b32.xlu0 %v618, 12
      %v1145 = vpop.permute.xlu0 %1144
      %1146 = vrot.lane.b32.xlu0 %v721, 12
      %v1147 = vpop.permute.xlu0 %1146
      %1148 = vrot.lane.b32.xlu0 %v621, 12
      %v1149 = vpop.permute.xlu0 %1148
      %1150 = vrot.lane.b32.xlu0 %v722, 12
      %v1151 = vpop.permute.xlu0 %1150
      %1152 = vrot.lane.b32.xlu0 %v624, 12
      %v1153 = vpop.permute.xlu0 %1152
      %1154 = vrot.lane.b32.xlu0 %v723, 12
      %v1155 = vpop.permute.xlu0 %1154
      %1156 = vrot.lane.b32.xlu0 %v627, 12
      %v1157 = vpop.permute.xlu0 %1156
      %1158 = vrot.lane.b32.xlu0 %v724, 12
      %v1159 = vpop.permute.xlu0 %1158
      %1160 = vrot.lane.b32.xlu0 %v630, 12
      %v1161 = vpop.permute.xlu0 %1160
      %1162 = vrot.lane.b32.xlu0 %v725, 12
      %v1163 = vpop.permute.xlu0 %1162
      %1164 = vrot.lane.b32.xlu0 %v633, 12
      %v1165 = vpop.permute.xlu0 %1164
      %1166 = vrot.lane.b32.xlu0 %v726, 12
      %v1167 = vpop.permute.xlu0 %1166
      %1168 = vrot.lane.b32.xlu0 %v636, 12
      %v1169 = vpop.permute.xlu0 %1168
      %1170 = vrot.lane.b32.xlu0 %v727, 12
      %v1171 = vpop.permute.xlu0 %1170
      %1172 = vrot.lane.b32.xlu0 %v639, 12
      %v1173 = vpop.permute.xlu0 %1172
      %1174 = vrot.lane.b32.xlu0 %v728, 12
      %v1175 = vpop.permute.xlu0 %1174
      %1176 = vrot.lane.b32.xlu0 %v642, 12
      %v1177 = vpop.permute.xlu0 %1176
      %1178 = vrot.lane.b32.xlu0 %v729, 12
      %v1179 = vpop.permute.xlu0 %1178
      %1180 = vrot.lane.b32.xlu0 %v645, 12
      %v1181 = vpop.permute.xlu0 %1180
      %1182 = vrot.lane.b32.xlu0 %v730, 12
      %v1183 = vpop.permute.xlu0 %1182
      %1184 = vrot.lane.b32.xlu0 %v648, 12
      %v1185 = vpop.permute.xlu0 %1184
      %1186 = vrot.lane.b32.xlu0 %v731, 12
      %v1187 = vpop.permute.xlu0 %1186
      %1188 = vrot.lane.b32.xlu0 %v651, 12
      %v1189 = vpop.permute.xlu0 %1188
      %1190 = vrot.lane.b32.xlu0 %v732, 12
      %v1191 = vpop.permute.xlu0 %1190
      %1192 = vrot.lane.b32.xlu0 %v654, 12
      %v1193 = vpop.permute.xlu0 %1192
      %1194 = vrot.lane.b32.xlu0 %v733, 12
      %v1195 = vpop.permute.xlu0 %1194
      %1196 = vrot.lane.b32.xlu0 %v657, 12
      %v1197 = vpop.permute.xlu0 %1196
      %1198 = vrot.lane.b32.xlu0 %v734, 12
      %v1199 = vpop.permute.xlu0 %1198
      %1200 = vrot.lane.b32.xlu0 %v660, 12
      %v1201 = vpop.permute.xlu0 %1200
      %1202 = vrot.lane.b32.xlu0 %v735, 12
      %v1203 = vpop.permute.xlu0 %1202
      %1204 = vrot.lane.b32.xlu0 %v663, 12
      %v1205 = vpop.permute.xlu0 %1204
      %v1239 = vrot.slane %v735, 1
      %v1240 = vrot.slane %v663, 1
      %v1241 = vsel %vm787, %v1239, %v1240
      %v1242 = vrot.slane %v753, 1
      %v1243 = vsel %vm787, %v1240, %v1242
      %1244 = vrot.lane.b32.xlu0 %v795, 16
      %v1245 = vpop.permute.xlu0 %1244
      %1246 = vrot.lane.b32.xlu0 %v797, 16
      %v1247 = vpop.permute.xlu0 %1246
      %1248 = vrot.lane.b32.xlu0 %v800, 16
      %v1249 = vpop.permute.xlu0 %1248
      %1250 = vrot.lane.b32.xlu0 %v802, 16
      %v1251 = vpop.permute.xlu0 %1250
      %1252 = vrot.lane.b32.xlu0 %v805, 16
      %v1253 = vpop.permute.xlu0 %1252
      %1254 = vrot.lane.b32.xlu0 %v807, 16
      %v1255 = vpop.permute.xlu0 %1254
      %1256 = vrot.lane.b32.xlu0 %v810, 16
      %v1257 = vpop.permute.xlu0 %1256
      %1258 = vrot.lane.b32.xlu0 %v812, 16
      %v1259 = vpop.permute.xlu0 %1258
      %1260 = vrot.lane.b32.xlu0 %v815, 16
      %v1261 = vpop.permute.xlu0 %1260
      %1262 = vrot.lane.b32.xlu0 %v817, 16
      %v1263 = vpop.permute.xlu0 %1262
      %1264 = vrot.lane.b32.xlu0 %v820, 16
      %v1265 = vpop.permute.xlu0 %1264
      %1266 = vrot.lane.b32.xlu0 %v822, 16
      %v1267 = vpop.permute.xlu0 %1266
      %1268 = vrot.lane.b32.xlu0 %v825, 16
      %v1269 = vpop.permute.xlu0 %1268
      %1270 = vrot.lane.b32.xlu0 %v827, 16
      %v1271 = vpop.permute.xlu0 %1270
      %1272 = vrot.lane.b32.xlu0 %v830, 16
      %v1273 = vpop.permute.xlu0 %1272
      %1274 = vrot.lane.b32.xlu0 %v832, 16
      %v1275 = vpop.permute.xlu0 %1274
      %1276 = vrot.lane.b32.xlu0 %v835, 16
      %v1277 = vpop.permute.xlu0 %1276
      %1278 = vrot.lane.b32.xlu0 %v837, 16
      %v1279 = vpop.permute.xlu0 %1278
      %1280 = vrot.lane.b32.xlu0 %v840, 16
      %v1281 = vpop.permute.xlu0 %1280
      %1282 = vrot.lane.b32.xlu0 %v842, 16
      %v1283 = vpop.permute.xlu0 %1282
      %1284 = vrot.lane.b32.xlu0 %v845, 16
      %v1285 = vpop.permute.xlu0 %1284
      %1286 = vrot.lane.b32.xlu0 %v847, 16
      %v1287 = vpop.permute.xlu0 %1286
      %1288 = vrot.lane.b32.xlu0 %v850, 16
      %v1289 = vpop.permute.xlu0 %1288
      %1290 = vrot.lane.b32.xlu0 %v852, 16
      %v1291 = vpop.permute.xlu0 %1290
      %1292 = vrot.lane.b32.xlu0 %v855, 16
      %v1293 = vpop.permute.xlu0 %1292
      %1294 = vrot.lane.b32.xlu0 %v857, 16
      %v1295 = vpop.permute.xlu0 %1294
      %1296 = vrot.lane.b32.xlu0 %v860, 16
      %v1297 = vpop.permute.xlu0 %1296
      %1298 = vrot.lane.b32.xlu0 %v862, 16
      %v1299 = vpop.permute.xlu0 %1298
      %1300 = vrot.lane.b32.xlu0 %v865, 16
      %v1301 = vpop.permute.xlu0 %1300
      %1302 = vrot.lane.b32.xlu0 %v867, 16
      %v1303 = vpop.permute.xlu0 %1302
      %1304 = vrot.lane.b32.xlu0 %v1241, 16
      %v1305 = vpop.permute.xlu0 %1304
      %1306 = vrot.lane.b32.xlu0 %v1243, 16
      %v1307 = vpop.permute.xlu0 %1306
      %v1340 = vrot.slane %v735, 2
      %v1341 = vrot.slane %v663, 2
      %v1342 = vsel %vm964, %v1340, %v1341
      %v1343 = vrot.slane %v753, 2
      %v1344 = vsel %vm964, %v1341, %v1343
      %1345 = vrot.lane.b32.xlu0 %v972, 20
      %v1346 = vpop.permute.xlu0 %1345
      %1347 = vrot.lane.b32.xlu0 %v974, 20
      %v1348 = vpop.permute.xlu0 %1347
      %1349 = vrot.lane.b32.xlu0 %v977, 20
      %v1350 = vpop.permute.xlu0 %1349
      %1351 = vrot.lane.b32.xlu0 %v979, 20
      %v1352 = vpop.permute.xlu0 %1351
      %1353 = vrot.lane.b32.xlu0 %v982, 20
      %v1354 = vpop.permute.xlu0 %1353
      %1355 = vrot.lane.b32.xlu0 %v984, 20
      %v1356 = vpop.permute.xlu0 %1355
      %1357 = vrot.lane.b32.xlu0 %v987, 20
      %v1358 = vpop.permute.xlu0 %1357
      %1359 = vrot.lane.b32.xlu0 %v989, 20
      %v1360 = vpop.permute.xlu0 %1359
      %1361 = vrot.lane.b32.xlu0 %v992, 20
      %v1362 = vpop.permute.xlu0 %1361
      %1363 = vrot.lane.b32.xlu0 %v994, 20
      %v1364 = vpop.permute.xlu0 %1363
      %1365 = vrot.lane.b32.xlu0 %v997, 20
      %v1366 = vpop.permute.xlu0 %1365
      %1367 = vrot.lane.b32.xlu0 %v999, 20
      %v1368 = vpop.permute.xlu0 %1367
      %1369 = vrot.lane.b32.xlu0 %v1002, 20
      %v1370 = vpop.permute.xlu0 %1369
      %1371 = vrot.lane.b32.xlu0 %v1004, 20
      %v1372 = vpop.permute.xlu0 %1371
      %1373 = vrot.lane.b32.xlu0 %v1007, 20
      %v1374 = vpop.permute.xlu0 %1373
      %1375 = vrot.lane.b32.xlu0 %v1009, 20
      %v1376 = vpop.permute.xlu0 %1375
      %1377 = vrot.lane.b32.xlu0 %v1012, 20
      %v1378 = vpop.permute.xlu0 %1377
      %1379 = vrot.lane.b32.xlu0 %v1014, 20
      %v1380 = vpop.permute.xlu0 %1379
      %1381 = vrot.lane.b32.xlu0 %v1017, 20
      %v1382 = vpop.permute.xlu0 %1381
      %1383 = vrot.lane.b32.xlu0 %v1019, 20
      %v1384 = vpop.permute.xlu0 %1383
      %1385 = vrot.lane.b32.xlu0 %v1022, 20
      %v1386 = vpop.permute.xlu0 %1385
      %1387 = vrot.lane.b32.xlu0 %v1024, 20
      %v1388 = vpop.permute.xlu0 %1387
      %1389 = vrot.lane.b32.xlu0 %v1027, 20
      %v1390 = vpop.permute.xlu0 %1389
      %1391 = vrot.lane.b32.xlu0 %v1029, 20
      %v1392 = vpop.permute.xlu0 %1391
      %1393 = vrot.lane.b32.xlu0 %v1032, 20
      %v1394 = vpop.permute.xlu0 %1393
      %1395 = vrot.lane.b32.xlu0 %v1034, 20
      %v1396 = vpop.permute.xlu0 %1395
      %1397 = vrot.lane.b32.xlu0 %v1037, 20
      %v1398 = vpop.permute.xlu0 %1397
      %1399 = vrot.lane.b32.xlu0 %v1039, 20
      %v1400 = vpop.permute.xlu0 %1399
      %1401 = vrot.lane.b32.xlu0 %v1042, 20
      %v1402 = vpop.permute.xlu0 %1401
      %1403 = vrot.lane.b32.xlu0 %v1044, 20
      %v1404 = vpop.permute.xlu0 %1403
      %1405 = vrot.lane.b32.xlu0 %v1342, 20
      %v1406 = vpop.permute.xlu0 %1405
      %1407 = vrot.lane.b32.xlu0 %v1344, 20
      %v1408 = vpop.permute.xlu0 %1407
      %1442 = vrot.lane.b32.xlu0 %v721, 24
      %v1443 = vpop.permute.xlu0 %1442
      %1444 = vrot.lane.b32.xlu0 %v621, 24
      %v1445 = vpop.permute.xlu0 %1444
      %1446 = vrot.lane.b32.xlu0 %v722, 24
      %v1447 = vpop.permute.xlu0 %1446
      %1448 = vrot.lane.b32.xlu0 %v624, 24
      %v1449 = vpop.permute.xlu0 %1448
      %1450 = vrot.lane.b32.xlu0 %v723, 24
      %v1451 = vpop.permute.xlu0 %1450
      %1452 = vrot.lane.b32.xlu0 %v627, 24
      %v1453 = vpop.permute.xlu0 %1452
      %1454 = vrot.lane.b32.xlu0 %v724, 24
      %v1455 = vpop.permute.xlu0 %1454
      %1456 = vrot.lane.b32.xlu0 %v630, 24
      %v1457 = vpop.permute.xlu0 %1456
      %1458 = vrot.lane.b32.xlu0 %v725, 24
      %v1459 = vpop.permute.xlu0 %1458
      %1460 = vrot.lane.b32.xlu0 %v633, 24
      %v1461 = vpop.permute.xlu0 %1460
      %1462 = vrot.lane.b32.xlu0 %v726, 24
      %v1463 = vpop.permute.xlu0 %1462
      %1464 = vrot.lane.b32.xlu0 %v636, 24
      %v1465 = vpop.permute.xlu0 %1464
      %1466 = vrot.lane.b32.xlu0 %v727, 24
      %v1467 = vpop.permute.xlu0 %1466
      %1468 = vrot.lane.b32.xlu0 %v639, 24
      %v1469 = vpop.permute.xlu0 %1468
      %1470 = vrot.lane.b32.xlu0 %v728, 24
      %v1471 = vpop.permute.xlu0 %1470
      %1472 = vrot.lane.b32.xlu0 %v642, 24
      %v1473 = vpop.permute.xlu0 %1472
      %1474 = vrot.lane.b32.xlu0 %v729, 24
      %v1475 = vpop.permute.xlu0 %1474
      %1476 = vrot.lane.b32.xlu0 %v645, 24
      %v1477 = vpop.permute.xlu0 %1476
      %1478 = vrot.lane.b32.xlu0 %v730, 24
      %v1479 = vpop.permute.xlu0 %1478
      %1480 = vrot.lane.b32.xlu0 %v648, 24
      %v1481 = vpop.permute.xlu0 %1480
      %1482 = vrot.lane.b32.xlu0 %v731, 24
      %v1483 = vpop.permute.xlu0 %1482
      %1484 = vrot.lane.b32.xlu0 %v651, 24
      %v1485 = vpop.permute.xlu0 %1484
      %1486 = vrot.lane.b32.xlu0 %v732, 24
      %v1487 = vpop.permute.xlu0 %1486
      %1488 = vrot.lane.b32.xlu0 %v654, 24
      %v1489 = vpop.permute.xlu0 %1488
      %1490 = vrot.lane.b32.xlu0 %v733, 24
      %v1491 = vpop.permute.xlu0 %1490
      %1492 = vrot.lane.b32.xlu0 %v657, 24
      %v1493 = vpop.permute.xlu0 %1492
      %1494 = vrot.lane.b32.xlu0 %v734, 24
      %v1495 = vpop.permute.xlu0 %1494
      %1496 = vrot.lane.b32.xlu0 %v660, 24
      %v1497 = vpop.permute.xlu0 %1496
      %1498 = vrot.lane.b32.xlu0 %v735, 24
      %v1499 = vpop.permute.xlu0 %1498
      %1500 = vrot.lane.b32.xlu0 %v663, 24
      %v1501 = vpop.permute.xlu0 %1500
      %1502 = vrot.lane.b32.xlu0 %v736, 24
      %v1503 = vpop.permute.xlu0 %1502
      %1504 = vrot.lane.b32.xlu0 %v666, 24
      %v1505 = vpop.permute.xlu0 %1504
      %v1539 = vrot.slane %v736, 1
      %v1540 = vrot.slane %v666, 1
      %v1541 = vsel %vm787, %v1539, %v1540
      %v1542 = vrot.slane %v754, 1
      %v1543 = vsel %vm787, %v1540, %v1542
      %1544 = vrot.lane.b32.xlu0 %v800, 28
      %v1545 = vpop.permute.xlu0 %1544
      %1546 = vrot.lane.b32.xlu0 %v802, 28
      %v1547 = vpop.permute.xlu0 %1546
      %1548 = vrot.lane.b32.xlu0 %v805, 28
      %v1549 = vpop.permute.xlu0 %1548
      %1550 = vrot.lane.b32.xlu0 %v807, 28
      %v1551 = vpop.permute.xlu0 %1550
      %1552 = vrot.lane.b32.xlu0 %v810, 28
      %v1553 = vpop.permute.xlu0 %1552
      %1554 = vrot.lane.b32.xlu0 %v812, 28
      %v1555 = vpop.permute.xlu0 %1554
      %1556 = vrot.lane.b32.xlu0 %v815, 28
      %v1557 = vpop.permute.xlu0 %1556
      %1558 = vrot.lane.b32.xlu0 %v817, 28
      %v1559 = vpop.permute.xlu0 %1558
      %1560 = vrot.lane.b32.xlu0 %v820, 28
      %v1561 = vpop.permute.xlu0 %1560
      %1562 = vrot.lane.b32.xlu0 %v822, 28
      %v1563 = vpop.permute.xlu0 %1562
      %1564 = vrot.lane.b32.xlu0 %v825, 28
      %v1565 = vpop.permute.xlu0 %1564
      %1566 = vrot.lane.b32.xlu0 %v827, 28
      %v1567 = vpop.permute.xlu0 %1566
      %1568 = vrot.lane.b32.xlu0 %v830, 28
      %v1569 = vpop.permute.xlu0 %1568
      %1570 = vrot.lane.b32.xlu0 %v832, 28
      %v1571 = vpop.permute.xlu0 %1570
      %1572 = vrot.lane.b32.xlu0 %v835, 28
      %v1573 = vpop.permute.xlu0 %1572
      %1574 = vrot.lane.b32.xlu0 %v837, 28
      %v1575 = vpop.permute.xlu0 %1574
      %1576 = vrot.lane.b32.xlu0 %v840, 28
      %v1577 = vpop.permute.xlu0 %1576
      %1578 = vrot.lane.b32.xlu0 %v842, 28
      %v1579 = vpop.permute.xlu0 %1578
      %1580 = vrot.lane.b32.xlu0 %v845, 28
      %v1581 = vpop.permute.xlu0 %1580
      %1582 = vrot.lane.b32.xlu0 %v847, 28
      %v1583 = vpop.permute.xlu0 %1582
      %1584 = vrot.lane.b32.xlu0 %v850, 28
      %v1585 = vpop.permute.xlu0 %1584
      %1586 = vrot.lane.b32.xlu0 %v852, 28
      %v1587 = vpop.permute.xlu0 %1586
      %1588 = vrot.lane.b32.xlu0 %v855, 28
      %v1589 = vpop.permute.xlu0 %1588
      %1590 = vrot.lane.b32.xlu0 %v857, 28
      %v1591 = vpop.permute.xlu0 %1590
      %1592 = vrot.lane.b32.xlu0 %v860, 28
      %v1593 = vpop.permute.xlu0 %1592
      %1594 = vrot.lane.b32.xlu0 %v862, 28
      %v1595 = vpop.permute.xlu0 %1594
      %1596 = vrot.lane.b32.xlu0 %v865, 28
      %v1597 = vpop.permute.xlu0 %1596
      %1598 = vrot.lane.b32.xlu0 %v867, 28
      %v1599 = vpop.permute.xlu0 %1598
      %1600 = vrot.lane.b32.xlu0 %v1241, 28
      %v1601 = vpop.permute.xlu0 %1600
      %1602 = vrot.lane.b32.xlu0 %v1243, 28
      %v1603 = vpop.permute.xlu0 %1602
      %1604 = vrot.lane.b32.xlu0 %v1541, 28
      %v1605 = vpop.permute.xlu0 %1604
      %1606 = vrot.lane.b32.xlu0 %v1543, 28
      %v1607 = vpop.permute.xlu0 %1606
      %v1640 = vrot.slane %v736, 2
      %v1641 = vrot.slane %v666, 2
      %v1642 = vsel %vm964, %v1640, %v1641
      %v1643 = vrot.slane %v754, 2
      %v1644 = vsel %vm964, %v1641, %v1643
      %1645 = vrot.lane.b32.xlu0 %v977, 32
      %v1646 = vpop.permute.xlu0 %1645
      %1647 = vrot.lane.b32.xlu0 %v979, 32
      %v1648 = vpop.permute.xlu0 %1647
      %1649 = vrot.lane.b32.xlu0 %v982, 32
      %v1650 = vpop.permute.xlu0 %1649
      %1651 = vrot.lane.b32.xlu0 %v984, 32
      %v1652 = vpop.permute.xlu0 %1651
      %1653 = vrot.lane.b32.xlu0 %v987, 32
      %v1654 = vpop.permute.xlu0 %1653
      %1655 = vrot.lane.b32.xlu0 %v989, 32
      %v1656 = vpop.permute.xlu0 %1655
      %1657 = vrot.lane.b32.xlu0 %v992, 32
      %v1658 = vpop.permute.xlu0 %1657
      %1659 = vrot.lane.b32.xlu0 %v994, 32
      %v1660 = vpop.permute.xlu0 %1659
      %1661 = vrot.lane.b32.xlu0 %v997, 32
      %v1662 = vpop.permute.xlu0 %1661
      %1663 = vrot.lane.b32.xlu0 %v999, 32
      %v1664 = vpop.permute.xlu0 %1663
      %1665 = vrot.lane.b32.xlu0 %v1002, 32
      %v1666 = vpop.permute.xlu0 %1665
      %1667 = vrot.lane.b32.xlu0 %v1004, 32
      %v1668 = vpop.permute.xlu0 %1667
      %1669 = vrot.lane.b32.xlu0 %v1007, 32
      %v1670 = vpop.permute.xlu0 %1669
      %1671 = vrot.lane.b32.xlu0 %v1009, 32
      %v1672 = vpop.permute.xlu0 %1671
      %1673 = vrot.lane.b32.xlu0 %v1012, 32
      %v1674 = vpop.permute.xlu0 %1673
      %1675 = vrot.lane.b32.xlu0 %v1014, 32
      %v1676 = vpop.permute.xlu0 %1675
      %1677 = vrot.lane.b32.xlu0 %v1017, 32
      %v1678 = vpop.permute.xlu0 %1677
      %1679 = vrot.lane.b32.xlu0 %v1019, 32
      %v1680 = vpop.permute.xlu0 %1679
      %1681 = vrot.lane.b32.xlu0 %v1022, 32
      %v1682 = vpop.permute.xlu0 %1681
      %1683 = vrot.lane.b32.xlu0 %v1024, 32
      %v1684 = vpop.permute.xlu0 %1683
      %1685 = vrot.lane.b32.xlu0 %v1027, 32
      %v1686 = vpop.permute.xlu0 %1685
      %1687 = vrot.lane.b32.xlu0 %v1029, 32
      %v1688 = vpop.permute.xlu0 %1687
      %1689 = vrot.lane.b32.xlu0 %v1032, 32
      %v1690 = vpop.permute.xlu0 %1689
      %1691 = vrot.lane.b32.xlu0 %v1034, 32
      %v1692 = vpop.permute.xlu0 %1691
      %1693 = vrot.lane.b32.xlu0 %v1037, 32
      %v1694 = vpop.permute.xlu0 %1693
      %1695 = vrot.lane.b32.xlu0 %v1039, 32
      %v1696 = vpop.permute.xlu0 %1695
      %1697 = vrot.lane.b32.xlu0 %v1042, 32
      %v1698 = vpop.permute.xlu0 %1697
      %1699 = vrot.lane.b32.xlu0 %v1044, 32
      %v1700 = vpop.permute.xlu0 %1699
      %1701 = vrot.lane.b32.xlu0 %v1342, 32
      %v1702 = vpop.permute.xlu0 %1701
      %1703 = vrot.lane.b32.xlu0 %v1344, 32
      %v1704 = vpop.permute.xlu0 %1703
      %1705 = vrot.lane.b32.xlu0 %v1642, 32
      %v1706 = vpop.permute.xlu0 %1705
      %1707 = vrot.lane.b32.xlu0 %v1644, 32
      %v1708 = vpop.permute.xlu0 %1707
      %vm1741 = vcmask 31744
      %v1742 = vsel %vm1741, %v719, %v869
      %v1743 = vsel %vm1741, %v615, %v871
      %v1744 = vsel %vm1741, %v720, %v873
      %v1745 = vsel %vm1741, %v618, %v875
      %v1746 = vsel %vm1741, %v721, %v877
      %v1747 = vsel %vm1741, %v621, %v879
      %v1748 = vsel %vm1741, %v722, %v881
      %v1749 = vsel %vm1741, %v624, %v883
      %v1750 = vsel %vm1741, %v723, %v885
      %v1751 = vsel %vm1741, %v627, %v887
      %v1752 = vsel %vm1741, %v724, %v889
      %v1753 = vsel %vm1741, %v630, %v891
      %v1754 = vsel %vm1741, %v725, %v893
      %v1755 = vsel %vm1741, %v633, %v895
      %v1756 = vsel %vm1741, %v726, %v897
      %v1757 = vsel %vm1741, %v636, %v899
      %v1758 = vsel %vm1741, %v727, %v901
      %v1759 = vsel %vm1741, %v639, %v903
      %v1760 = vsel %vm1741, %v728, %v905
      %v1761 = vsel %vm1741, %v642, %v907
      %v1762 = vsel %vm1741, %v729, %v909
      %v1763 = vsel %vm1741, %v645, %v911
      %v1764 = vsel %vm1741, %v730, %v913
      %v1765 = vsel %vm1741, %v648, %v915
      %v1766 = vsel %vm1741, %v731, %v917
      %v1767 = vsel %vm1741, %v651, %v919
      %v1768 = vsel %vm1741, %v732, %v921
      %v1769 = vsel %vm1741, %v654, %v923
      %v1770 = vsel %vm1741, %v733, %v925
      %v1771 = vsel %vm1741, %v657, %v927
      %v1772 = vsel %vm1741, %v734, %v929
      %v1773 = vsel %vm1741, %v660, %v931
      %vm1774 = vcmask 64512
      %v1775 = vsel %vm1774, %v1742, %v1046
      %v1776 = vsel %vm1774, %v1743, %v1048
      %v1777 = vsel %vm1774, %v1744, %v1050
      %v1778 = vsel %vm1774, %v1745, %v1052
      %v1779 = vsel %vm1774, %v1746, %v1054
      %v1780 = vsel %vm1774, %v1747, %v1056
      %v1781 = vsel %vm1774, %v1748, %v1058
      %v1782 = vsel %vm1774, %v1749, %v1060
      %v1783 = vsel %vm1774, %v1750, %v1062
      %v1784 = vsel %vm1774, %v1751, %v1064
      %v1785 = vsel %vm1774, %v1752, %v1066
      %v1786 = vsel %vm1774, %v1753, %v1068
      %v1787 = vsel %vm1774, %v1754, %v1070
      %v1788 = vsel %vm1774, %v1755, %v1072
      %v1789 = vsel %vm1774, %v1756, %v1074
      %v1790 = vsel %vm1774, %v1757, %v1076
      %v1791 = vsel %vm1774, %v1758, %v1078
      %v1792 = vsel %vm1774, %v1759, %v1080
      %v1793 = vsel %vm1774, %v1760, %v1082
      %v1794 = vsel %vm1774, %v1761, %v1084
      %v1795 = vsel %vm1774, %v1762, %v1086
      %v1796 = vsel %vm1774, %v1763, %v1088
      %v1797 = vsel %vm1774, %v1764, %v1090
      %v1798 = vsel %vm1774, %v1765, %v1092
      %v1799 = vsel %vm1774, %v1766, %v1094
      %v1800 = vsel %vm1774, %v1767, %v1096
      %v1801 = vsel %vm1774, %v1768, %v1098
      %v1802 = vsel %vm1774, %v1769, %v1100
      %v1803 = vsel %vm1774, %v1770, %v1102
      %v1804 = vsel %vm1774, %v1771, %v1104
      %v1805 = vsel %vm1774, %v1772, %v1106
      %v1806 = vsel %vm1774, %v1773, %v1108
      %vm1807 = vcmask 97280
      %v1808 = vsel %vm1807, %v1775, %v1143
      %v1809 = vsel %vm1807, %v1776, %v1145
      %v1810 = vsel %vm1807, %v1777, %v1147
      %v1811 = vsel %vm1807, %v1778, %v1149
      %v1812 = vsel %vm1807, %v1779, %v1151
      %v1813 = vsel %vm1807, %v1780, %v1153
      %v1814 = vsel %vm1807, %v1781, %v1155
      %v1815 = vsel %vm1807, %v1782, %v1157
      %v1816 = vsel %vm1807, %v1783, %v1159
      %v1817 = vsel %vm1807, %v1784, %v1161
      %v1818 = vsel %vm1807, %v1785, %v1163
      %v1819 = vsel %vm1807, %v1786, %v1165
      %v1820 = vsel %vm1807, %v1787, %v1167
      %v1821 = vsel %vm1807, %v1788, %v1169
      %v1822 = vsel %vm1807, %v1789, %v1171
      %v1823 = vsel %vm1807, %v1790, %v1173
      %v1824 = vsel %vm1807, %v1791, %v1175
      %v1825 = vsel %vm1807, %v1792, %v1177
      %v1826 = vsel %vm1807, %v1793, %v1179
      %v1827 = vsel %vm1807, %v1794, %v1181
      %v1828 = vsel %vm1807, %v1795, %v1183
      %v1829 = vsel %vm1807, %v1796, %v1185
      %v1830 = vsel %vm1807, %v1797, %v1187
      %v1831 = vsel %vm1807, %v1798, %v1189
      %v1832 = vsel %vm1807, %v1799, %v1191
      %v1833 = vsel %vm1807, %v1800, %v1193
      %v1834 = vsel %vm1807, %v1801, %v1195
      %v1835 = vsel %vm1807, %v1802, %v1197
      %v1836 = vsel %vm1807, %v1803, %v1199
      %v1837 = vsel %vm1807, %v1804, %v1201
      %v1838 = vsel %vm1807, %v1805, %v1203
      %v1839 = vsel %vm1807, %v1806, %v1205
      %vm1840 = vcmask 130048
      %v1841 = vsel %vm1840, %v1808, %v1245
      %v1842 = vsel %vm1840, %v1809, %v1247
      %v1843 = vsel %vm1840, %v1810, %v1249
      %v1844 = vsel %vm1840, %v1811, %v1251
      %v1845 = vsel %vm1840, %v1812, %v1253
      %v1846 = vsel %vm1840, %v1813, %v1255
      %v1847 = vsel %vm1840, %v1814, %v1257
      %v1848 = vsel %vm1840, %v1815, %v1259
      %v1849 = vsel %vm1840, %v1816, %v1261
      %v1850 = vsel %vm1840, %v1817, %v1263
      %v1851 = vsel %vm1840, %v1818, %v1265
      %v1852 = vsel %vm1840, %v1819, %v1267
      %v1853 = vsel %vm1840, %v1820, %v1269
      %v1854 = vsel %vm1840, %v1821, %v1271
      %v1855 = vsel %vm1840, %v1822, %v1273
      %v1856 = vsel %vm1840, %v1823, %v1275
      %v1857 = vsel %vm1840, %v1824, %v1277
      %v1858 = vsel %vm1840, %v1825, %v1279
      %v1859 = vsel %vm1840, %v1826, %v1281
      %v1860 = vsel %vm1840, %v1827, %v1283
      %v1861 = vsel %vm1840, %v1828, %v1285
      %v1862 = vsel %vm1840, %v1829, %v1287
      %v1863 = vsel %vm1840, %v1830, %v1289
      %v1864 = vsel %vm1840, %v1831, %v1291
      %v1865 = vsel %vm1840, %v1832, %v1293
      %v1866 = vsel %vm1840, %v1833, %v1295
      %v1867 = vsel %vm1840, %v1834, %v1297
      %v1868 = vsel %vm1840, %v1835, %v1299
      %v1869 = vsel %vm1840, %v1836, %v1301
      %v1870 = vsel %vm1840, %v1837, %v1303
      %v1871 = vsel %vm1840, %v1838, %v1305
      %v1872 = vsel %vm1840, %v1839, %v1307
      %vm1873 = vcmask 162816
      %v1874 = vsel %vm1873, %v1841, %v1346
      %v1875 = vsel %vm1873, %v1842, %v1348
      %v1876 = vsel %vm1873, %v1843, %v1350
      %v1877 = vsel %vm1873, %v1844, %v1352
      %v1878 = vsel %vm1873, %v1845, %v1354
      %v1879 = vsel %vm1873, %v1846, %v1356
      %v1880 = vsel %vm1873, %v1847, %v1358
      %v1881 = vsel %vm1873, %v1848, %v1360
      %v1882 = vsel %vm1873, %v1849, %v1362
      %v1883 = vsel %vm1873, %v1850, %v1364
      %v1884 = vsel %vm1873, %v1851, %v1366
      %v1885 = vsel %vm1873, %v1852, %v1368
      %v1886 = vsel %vm1873, %v1853, %v1370
      %v1887 = vsel %vm1873, %v1854, %v1372
      %v1888 = vsel %vm1873, %v1855, %v1374
      %v1889 = vsel %vm1873, %v1856, %v1376
      %v1890 = vsel %vm1873, %v1857, %v1378
      %v1891 = vsel %vm1873, %v1858, %v1380
      %v1892 = vsel %vm1873, %v1859, %v1382
      %v1893 = vsel %vm1873, %v1860, %v1384
      %v1894 = vsel %vm1873, %v1861, %v1386
      %v1895 = vsel %vm1873, %v1862, %v1388
      %v1896 = vsel %vm1873, %v1863, %v1390
      %v1897 = vsel %vm1873, %v1864, %v1392
      %v1898 = vsel %vm1873, %v1865, %v1394
      %v1899 = vsel %vm1873, %v1866, %v1396
      %v1900 = vsel %vm1873, %v1867, %v1398
      %v1901 = vsel %vm1873, %v1868, %v1400
      %v1902 = vsel %vm1873, %v1869, %v1402
      %v1903 = vsel %vm1873, %v1870, %v1404
      %v1904 = vsel %vm1873, %v1871, %v1406
      %v1905 = vsel %vm1873, %v1872, %v1408
      %vm1906 = vcmask 195584
      %v1907 = vsel %vm1906, %v1874, %v1443
      %v1908 = vsel %vm1906, %v1875, %v1445
      %v1909 = vsel %vm1906, %v1876, %v1447
      %v1910 = vsel %vm1906, %v1877, %v1449
      %v1911 = vsel %vm1906, %v1878, %v1451
      %v1912 = vsel %vm1906, %v1879, %v1453
      %v1913 = vsel %vm1906, %v1880, %v1455
      %v1914 = vsel %vm1906, %v1881, %v1457
      %v1915 = vsel %vm1906, %v1882, %v1459
      %v1916 = vsel %vm1906, %v1883, %v1461
      %v1917 = vsel %vm1906, %v1884, %v1463
      %v1918 = vsel %vm1906, %v1885, %v1465
      %v1919 = vsel %vm1906, %v1886, %v1467
      %v1920 = vsel %vm1906, %v1887, %v1469
      %v1921 = vsel %vm1906, %v1888, %v1471
      %v1922 = vsel %vm1906, %v1889, %v1473
      %v1923 = vsel %vm1906, %v1890, %v1475
      %v1924 = vsel %vm1906, %v1891, %v1477
      %v1925 = vsel %vm1906, %v1892, %v1479
      %v1926 = vsel %vm1906, %v1893, %v1481
      %v1927 = vsel %vm1906, %v1894, %v1483
      %v1928 = vsel %vm1906, %v1895, %v1485
      %v1929 = vsel %vm1906, %v1896, %v1487
      %v1930 = vsel %vm1906, %v1897, %v1489
      %v1931 = vsel %vm1906, %v1898, %v1491
      %v1932 = vsel %vm1906, %v1899, %v1493
      %v1933 = vsel %vm1906, %v1900, %v1495
      %v1934 = vsel %vm1906, %v1901, %v1497
      %v1935 = vsel %vm1906, %v1902, %v1499
      %v1936 = vsel %vm1906, %v1903, %v1501
      %v1937 = vsel %vm1906, %v1904, %v1503
      %v1938 = vsel %vm1906, %v1905, %v1505
      %vm1939 = vcmask 228352
      %v1940 = vsel %vm1939, %v1907, %v1545
      %v1941 = vsel %vm1939, %v1908, %v1547
      %v1942 = vsel %vm1939, %v1909, %v1549
      %v1943 = vsel %vm1939, %v1910, %v1551
      %v1944 = vsel %vm1939, %v1911, %v1553
      %v1945 = vsel %vm1939, %v1912, %v1555
      %v1946 = vsel %vm1939, %v1913, %v1557
      %v1947 = vsel %vm1939, %v1914, %v1559
      %v1948 = vsel %vm1939, %v1915, %v1561
      %v1949 = vsel %vm1939, %v1916, %v1563
      %v1950 = vsel %vm1939, %v1917, %v1565
      %v1951 = vsel %vm1939, %v1918, %v1567
      %v1952 = vsel %vm1939, %v1919, %v1569
      %v1953 = vsel %vm1939, %v1920, %v1571
      %v1954 = vsel %vm1939, %v1921, %v1573
      %v1955 = vsel %vm1939, %v1922, %v1575
      %v1956 = vsel %vm1939, %v1923, %v1577
      %v1957 = vsel %vm1939, %v1924, %v1579
      %v1958 = vsel %vm1939, %v1925, %v1581
      %v1959 = vsel %vm1939, %v1926, %v1583
      %v1960 = vsel %vm1939, %v1927, %v1585
      %v1961 = vsel %vm1939, %v1928, %v1587
      %v1962 = vsel %vm1939, %v1929, %v1589
      %v1963 = vsel %vm1939, %v1930, %v1591
      %v1964 = vsel %vm1939, %v1931, %v1593
      %v1965 = vsel %vm1939, %v1932, %v1595
      %v1966 = vsel %vm1939, %v1933, %v1597
      %v1967 = vsel %vm1939, %v1934, %v1599
      %v1968 = vsel %vm1939, %v1935, %v1601
      %v1969 = vsel %vm1939, %v1936, %v1603
      %v1970 = vsel %vm1939, %v1937, %v1605
      %v1971 = vsel %vm1939, %v1938, %v1607
      %vm1972 = vcmask 261120
      %v1973 = vsel %vm1972, %v1940, %v1646
      %v1974 = vsel %vm1972, %v1941, %v1648
      %v1975 = vsel %vm1972, %v1942, %v1650
      %v1976 = vsel %vm1972, %v1943, %v1652
      %v1977 = vsel %vm1972, %v1944, %v1654
      %v1978 = vsel %vm1972, %v1945, %v1656
      %v1979 = vsel %vm1972, %v1946, %v1658
      %v1980 = vsel %vm1972, %v1947, %v1660
      %v1981 = vsel %vm1972, %v1948, %v1662
      %v1982 = vsel %vm1972, %v1949, %v1664
      %v1983 = vsel %vm1972, %v1950, %v1666
      %v1984 = vsel %vm1972, %v1951, %v1668
      %v1985 = vsel %vm1972, %v1952, %v1670
      %v1986 = vsel %vm1972, %v1953, %v1672
      %v1987 = vsel %vm1972, %v1954, %v1674
      %v1988 = vsel %vm1972, %v1955, %v1676
      %v1989 = vsel %vm1972, %v1956, %v1678
      %v1990 = vsel %vm1972, %v1957, %v1680
      %v1991 = vsel %vm1972, %v1958, %v1682
      %v1992 = vsel %vm1972, %v1959, %v1684
      %v1993 = vsel %vm1972, %v1960, %v1686
      %v1994 = vsel %vm1972, %v1961, %v1688
      %v1995 = vsel %vm1972, %v1962, %v1690
      %v1996 = vsel %vm1972, %v1963, %v1692
      %v1997 = vsel %vm1972, %v1964, %v1694
      %v1998 = vsel %vm1972, %v1965, %v1696
      %v1999 = vsel %vm1972, %v1966, %v1698
      %v2000 = vsel %vm1972, %v1967, %v1700
      %v2001 = vsel %vm1972, %v1968, %v1702
      %v2002 = vsel %vm1972, %v1969, %v1704
      %v2003 = vsel %vm1972, %v1970, %v1706
      %v2004 = vsel %vm1972, %v1971, %v1708
      %v2005 = vld [vmem:[%s359] sm:$0xff]
      %v2006 = vld [vmem:[%s359 + $0x8] sm:$0xff]
      %v2007 = vld [vmem:[%s359 + $0x10] sm:$0xff]
      %v2008 = vld [vmem:[%s359 + $0x18] sm:$0xff]
      %v2009 = vld [vmem:[%s359 + $0x20] sm:$0xf]
      %v2010 = vld [vmem:[%s362] sm:$0x1]
      %v2012 = vlaneseq
      %v2013 = vshrl.u32 %v2012, 7
      %v2014 = vsub.s32 0, %v2013
      %v2015 = vrot.slane %v2010, %v2014
      %vm2017 = vcmask 293888
      %v2019 = vsel %vm2017, %v1973, 0
      %v2022 = vsel %vm2017, %v1974, 0
      %v2025 = vsel %vm2017, %v1975, 0
      %v2028 = vsel %vm2017, %v1976, 0
      %v2031 = vsel %vm2017, %v1977, 0
      %v2034 = vsel %vm2017, %v1978, 0
      %v2037 = vsel %vm2017, %v1979, 0
      %v2040 = vsel %vm2017, %v1980, 0
      %v2043 = vsel %vm2017, %v1981, 0
      %v2046 = vsel %vm2017, %v1982, 0
      %v2049 = vsel %vm2017, %v1983, 0
      %v2052 = vsel %vm2017, %v1984, 0
      %v2055 = vsel %vm2017, %v1985, 0
      %v2058 = vsel %vm2017, %v1986, 0
      %v2061 = vsel %vm2017, %v1987, 0
      %v2064 = vsel %vm2017, %v1988, 0
      %v2067 = vsel %vm2017, %v1989, 0
      %v2070 = vsel %vm2017, %v1990, 0
      %v2073 = vsel %vm2017, %v1991, 0
      %v2076 = vsel %vm2017, %v1992, 0
      %v2079 = vsel %vm2017, %v1993, 0
      %v2082 = vsel %vm2017, %v1994, 0
      %v2085 = vsel %vm2017, %v1995, 0
      %v2088 = vsel %vm2017, %v1996, 0
      %v2091 = vsel %vm2017, %v1997, 0
      %v2094 = vsel %vm2017, %v1998, 0
      %v2097 = vsel %vm2017, %v1999, 0
      %v2100 = vsel %vm2017, %v2000, 0
      %v2103 = vsel %vm2017, %v2001, 0
      %v2106 = vsel %vm2017, %v2002, 0
      %v2109 = vsel %vm2017, %v2003, 0
      %v2112 = vsel %vm2017, %v2004, 0
      %vm2114 = vcmask 1043456
      %v2116 = vsel %vm2114, %v2009, 0
      %2118 = vmatprep.subr.mxu0 0.0
      %2119 = vmatpush1.msra.mxu0 0.0
      %2120 = vmatprep.subr.mxu0 0.0
      %2121 = vmatpush1.msra.mxu0 0.0
      %2122 = vmatprep.subr.mxu0 0.0
      %2123 = vmatpush1.msra.mxu0 0.0
      %2124 = vmatprep.subr.mxu0 0.0
      %2125 = vmatpush1.msra.mxu0 0.0
      %2126 = vmatprep.subr.mxu0 0.0
      %2127 = vmatpush1.msra.mxu0 0.0
      %2128 = vmatprep.subr.mxu0 0.0
      %2129 = vmatpush1.msra.mxu0 0.0
      %2130 = vmatprep.subr.mxu0 0.0
      %2131 = vmatpush1.msra.mxu0 0.0
      %2132 = vmatprep.subr.mxu0 0.0
      %2133 = vmatpush1.msra.mxu0 0.0
      %2134 = vmatprep.subr.mxu0 0.0
      %2135 = vmatpush1.msra.mxu0 0.0
      %2136 = vmatprep.subr.mxu0 0.0
      %2137 = vmatpush1.msra.mxu0 0.0
      %2138 = vmatprep.subr.mxu0 0.0
      %2139 = vmatpush1.msra.mxu0 0.0
      %2140 = vmatprep.subr.mxu0 0.0
      %2141 = vmatpush1.msra.mxu0 %v2116
      %2142 = vmatprep.subr.mxu0 0.0
      %2143 = vmatpush1.msra.mxu0 %v2008
      %2144 = vmatprep.subr.mxu0 0.0
      %2145 = vmatpush1.msra.mxu0 %v2007
      %2146 = vmatprep.subr.mxu0 0.0
      %2147 = vmatpush1.msra.mxu0 %v2006
      %2148 = vmatprep.subr.mxu0 0.0
      %2149 = vmatpush1.msra.mxu0 %v2005
      %2150 = vmatprep.subr.mxu0 0.0
      %2151 = vmatpush2.msra.mxu0 0.0
      %2152 = vmatprep.subr.mxu0 0.0
      %2153 = vmatpush2.msra.mxu0 0.0
      %2154 = vmatprep.subr.mxu0 0.0
      %2155 = vmatpush2.msra.mxu0 0.0
      %2156 = vmatprep.subr.mxu0 0.0
      %2157 = vmatpush2.msra.mxu0 0.0
      %2158 = vmatprep.subr.mxu0 0.0
      %2159 = vmatpush2.msra.mxu0 0.0
      %2160 = vmatprep.subr.mxu0 0.0
      %2161 = vmatpush2.msra.mxu0 0.0
      %2162 = vmatprep.subr.mxu0 0.0
      %2163 = vmatpush2.msra.mxu0 0.0
      %2164 = vmatprep.subr.mxu0 0.0
      %2165 = vmatpush2.msra.mxu0 0.0
      %2166 = vmatprep.subr.mxu0 0.0
      %2167 = vmatpush2.msra.mxu0 0.0
      %2168 = vmatprep.subr.mxu0 0.0
      %2169 = vmatpush2.msra.mxu0 0.0
      %2170 = vmatprep.subr.mxu0 0.0
      %2171 = vmatpush2.msra.mxu0 0.0
      %2172 = vmatprep.subr.mxu0 0.0
      %2173 = vmatpush2.msra.mxu0 0.0
      %2174 = vmatprep.subr.mxu0 0.0
      %2175 = vmatpush2.msra.mxu0 0.0
      %2176 = vmatprep.subr.mxu0 0.0
      %2177 = vmatpush2.msra.mxu0 0.0
      %2178 = vmatprep.subr.mxu0 0.0
      %2179 = vmatpush2.msra.mxu0 0.0
      %2180 = vmatprep.subr.mxu0 0.0
      %2181 = vmatpush2.msra.mxu0 0.0
      %2182 = vmatprep.mubr.f32.mxu0 0.0
      %2183 = vmatmul.mubr.f32.gmra.mxu0 %v2019
      %v2184 = vpop.f32.mrf.mxu0
      %v2185 = vadd.f32 %v2015, %v2184
      %v2186 = vpop.f32.mrf.mxu0
      %2187 = vmatprep.mubr.f32.mxu0 0.0
      %2188 = vmatmul.mubr.f32.gmra.mxu0 %v2022
      %v2189 = vpop.f32.mrf.mxu0
      %v2190 = vadd.f32 %v2015, %v2189
      %v2191 = vpop.f32.mrf.mxu0
      %2192 = vmatprep.mubr.f32.mxu0 0.0
      %2193 = vmatmul.mubr.f32.gmra.mxu0 %v2025
      %v2194 = vpop.f32.mrf.mxu0
      %v2195 = vadd.f32 %v2015, %v2194
      %v2196 = vpop.f32.mrf.mxu0
      %2197 = vmatprep.mubr.f32.mxu0 0.0
      %2198 = vmatmul.mubr.f32.gmra.mxu0 %v2028
      %v2199 = vpop.f32.mrf.mxu0
      %v2200 = vadd.f32 %v2015, %v2199
      %v2201 = vpop.f32.mrf.mxu0
      %2202 = vmatprep.mubr.f32.mxu0 0.0
      %2203 = vmatmul.mubr.f32.gmra.mxu0 %v2031
      %v2204 = vpop.f32.mrf.mxu0
      %v2205 = vadd.f32 %v2015, %v2204
      %v2206 = vpop.f32.mrf.mxu0
      %2207 = vmatprep.mubr.f32.mxu0 0.0
      %2208 = vmatmul.mubr.f32.gmra.mxu0 %v2034
      %v2209 = vpop.f32.mrf.mxu0
      %v2210 = vadd.f32 %v2015, %v2209
      %v2211 = vpop.f32.mrf.mxu0
      %2212 = vmatprep.mubr.f32.mxu0 0.0
      %2213 = vmatmul.mubr.f32.gmra.mxu0 %v2037
      %v2214 = vpop.f32.mrf.mxu0
      %v2215 = vadd.f32 %v2015, %v2214
      %v2216 = vpop.f32.mrf.mxu0
      %2217 = vmatprep.mubr.f32.mxu0 0.0
      %2218 = vmatmul.mubr.f32.gmra.mxu0 %v2040
      %v2219 = vpop.f32.mrf.mxu0
      %v2220 = vadd.f32 %v2015, %v2219
      %v2221 = vpop.f32.mrf.mxu0
      %2222 = vmatprep.mubr.f32.mxu0 0.0
      %2223 = vmatmul.mubr.f32.gmra.mxu0 %v2043
      %v2224 = vpop.f32.mrf.mxu0
      %v2225 = vadd.f32 %v2015, %v2224
      %v2226 = vpop.f32.mrf.mxu0
      %2227 = vmatprep.mubr.f32.mxu0 0.0
      %2228 = vmatmul.mubr.f32.gmra.mxu0 %v2046
      %v2229 = vpop.f32.mrf.mxu0
      %v2230 = vadd.f32 %v2015, %v2229
      %v2231 = vpop.f32.mrf.mxu0
      %2232 = vmatprep.mubr.f32.mxu0 0.0
      %2233 = vmatmul.mubr.f32.gmra.mxu0 %v2049
      %v2234 = vpop.f32.mrf.mxu0
      %v2235 = vadd.f32 %v2015, %v2234
      %v2236 = vpop.f32.mrf.mxu0
      %2237 = vmatprep.mubr.f32.mxu0 0.0
      %2238 = vmatmul.mubr.f32.gmra.mxu0 %v2052
      %v2239 = vpop.f32.mrf.mxu0
      %v2240 = vadd.f32 %v2015, %v2239
      %v2241 = vpop.f32.mrf.mxu0
      %2242 = vmatprep.mubr.f32.mxu0 0.0
      %2243 = vmatmul.mubr.f32.gmra.mxu0 %v2055
      %v2244 = vpop.f32.mrf.mxu0
      %v2245 = vadd.f32 %v2015, %v2244
      %v2246 = vpop.f32.mrf.mxu0
      %2247 = vmatprep.mubr.f32.mxu0 0.0
      %2248 = vmatmul.mubr.f32.gmra.mxu0 %v2058
      %v2249 = vpop.f32.mrf.mxu0
      %v2250 = vadd.f32 %v2015, %v2249
      %v2251 = vpop.f32.mrf.mxu0
      %2252 = vmatprep.mubr.f32.mxu0 0.0
      %2253 = vmatmul.mubr.f32.gmra.mxu0 %v2061
      %v2254 = vpop.f32.mrf.mxu0
      %v2255 = vadd.f32 %v2015, %v2254
      %v2256 = vpop.f32.mrf.mxu0
      %2257 = vmatprep.mubr.f32.mxu0 0.0
      %2258 = vmatmul.mubr.f32.gmra.mxu0 %v2064
      %v2259 = vpop.f32.mrf.mxu0
      %v2260 = vadd.f32 %v2015, %v2259
      %v2261 = vpop.f32.mrf.mxu0
      %2262 = vmatprep.mubr.f32.mxu0 0.0
      %2263 = vmatmul.mubr.f32.gmra.mxu0 %v2067
      %v2264 = vpop.f32.mrf.mxu0
      %v2265 = vadd.f32 %v2015, %v2264
      %v2266 = vpop.f32.mrf.mxu0
      %2267 = vmatprep.mubr.f32.mxu0 0.0
      %2268 = vmatmul.mubr.f32.gmra.mxu0 %v2070
      %v2269 = vpop.f32.mrf.mxu0
      %v2270 = vadd.f32 %v2015, %v2269
      %v2271 = vpop.f32.mrf.mxu0
      %2272 = vmatprep.mubr.f32.mxu0 0.0
      %2273 = vmatmul.mubr.f32.gmra.mxu0 %v2073
      %v2274 = vpop.f32.mrf.mxu0
      %v2275 = vadd.f32 %v2015, %v2274
      %v2276 = vpop.f32.mrf.mxu0
      %2277 = vmatprep.mubr.f32.mxu0 0.0
      %2278 = vmatmul.mubr.f32.gmra.mxu0 %v2076
      %v2279 = vpop.f32.mrf.mxu0
      %v2280 = vadd.f32 %v2015, %v2279
      %v2281 = vpop.f32.mrf.mxu0
      %2282 = vmatprep.mubr.f32.mxu0 0.0
      %2283 = vmatmul.mubr.f32.gmra.mxu0 %v2079
      %v2284 = vpop.f32.mrf.mxu0
      %v2285 = vadd.f32 %v2015, %v2284
      %v2286 = vpop.f32.mrf.mxu0
      %2287 = vmatprep.mubr.f32.mxu0 0.0
      %2288 = vmatmul.mubr.f32.gmra.mxu0 %v2082
      %v2289 = vpop.f32.mrf.mxu0
      %v2290 = vadd.f32 %v2015, %v2289
      %v2291 = vpop.f32.mrf.mxu0
      %2292 = vmatprep.mubr.f32.mxu0 0.0
      %2293 = vmatmul.mubr.f32.gmra.mxu0 %v2085
      %v2294 = vpop.f32.mrf.mxu0
      %v2295 = vadd.f32 %v2015, %v2294
      %v2296 = vpop.f32.mrf.mxu0
      %2297 = vmatprep.mubr.f32.mxu0 0.0
      %2298 = vmatmul.mubr.f32.gmra.mxu0 %v2088
      %v2299 = vpop.f32.mrf.mxu0
      %v2300 = vadd.f32 %v2015, %v2299
      %v2301 = vpop.f32.mrf.mxu0
      %2302 = vmatprep.mubr.f32.mxu0 0.0
      %2303 = vmatmul.mubr.f32.gmra.mxu0 %v2091
      %v2304 = vpop.f32.mrf.mxu0
      %v2305 = vadd.f32 %v2015, %v2304
      %v2306 = vpop.f32.mrf.mxu0
      %2307 = vmatprep.mubr.f32.mxu0 0.0
      %2308 = vmatmul.mubr.f32.gmra.mxu0 %v2094
      %v2309 = vpop.f32.mrf.mxu0
      %v2310 = vadd.f32 %v2015, %v2309
      %v2311 = vpop.f32.mrf.mxu0
      %2312 = vmatprep.mubr.f32.mxu0 0.0
      %2313 = vmatmul.mubr.f32.gmra.mxu0 %v2097
      %v2314 = vpop.f32.mrf.mxu0
      %v2315 = vadd.f32 %v2015, %v2314
      %v2316 = vpop.f32.mrf.mxu0
      %2317 = vmatprep.mubr.f32.mxu0 0.0
      %2318 = vmatmul.mubr.f32.gmra.mxu0 %v2100
      %v2319 = vpop.f32.mrf.mxu0
      %v2320 = vadd.f32 %v2015, %v2319
      %v2321 = vpop.f32.mrf.mxu0
      %2322 = vmatprep.mubr.f32.mxu0 0.0
      %2323 = vmatmul.mubr.f32.gmra.mxu0 %v2103
      %v2324 = vpop.f32.mrf.mxu0
      %v2325 = vadd.f32 %v2015, %v2324
      %v2326 = vpop.f32.mrf.mxu0
      %2327 = vmatprep.mubr.f32.mxu0 0.0
      %2328 = vmatmul.mubr.f32.gmra.mxu0 %v2106
      %v2329 = vpop.f32.mrf.mxu0
      %v2330 = vadd.f32 %v2015, %v2329
      %v2331 = vpop.f32.mrf.mxu0
      %2332 = vmatprep.mubr.f32.mxu0 0.0
      %2333 = vmatmul.mubr.f32.gmra.mxu0 %v2109
      %v2334 = vpop.f32.mrf.mxu0
      %v2335 = vadd.f32 %v2015, %v2334
      %v2336 = vpop.f32.mrf.mxu0
      %2337 = vmatprep.mubr.f32.mxu0 0.0
      %2338 = vmatmul.mubr.f32.gmra.mxu0 %v2112
      %v2339 = vpop.f32.mrf.mxu0
      %v2340 = vadd.f32 %v2015, %v2339
      %v2341 = vpop.f32.mrf.mxu0
      %2342 = vdwg.mxu0
      %v2343 = vsel %vm1774, %v2185, 0.0
      %v2344 = vsel %vm1774, %v2190, 0.0
      %v2345 = vadd.f32 %v2343, %v2344
      %v2346 = vsel %vm1774, %v2195, 0.0
      %v2347 = vadd.f32 %v2345, %v2346
      %v2348 = vsel %vm1774, %v2200, 0.0
      %v2349 = vadd.f32 %v2347, %v2348
      %v2350 = vsel %vm1774, %v2205, 0.0
      %v2351 = vadd.f32 %v2349, %v2350
      %v2352 = vsel %vm1774, %v2210, 0.0
      %v2353 = vadd.f32 %v2351, %v2352
      %v2354 = vsel %vm1774, %v2215, 0.0
      %v2355 = vadd.f32 %v2353, %v2354
      %v2356 = vsel %vm1774, %v2220, 0.0
      %v2357 = vadd.f32 %v2355, %v2356
      %v2358 = vsel %vm1774, %v2225, 0.0
      %v2359 = vadd.f32 %v2357, %v2358
      %v2360 = vsel %vm1774, %v2230, 0.0
      %v2361 = vadd.f32 %v2359, %v2360
      %v2362 = vsel %vm1774, %v2235, 0.0
      %v2363 = vadd.f32 %v2361, %v2362
      %v2364 = vsel %vm1774, %v2240, 0.0
      %v2365 = vadd.f32 %v2363, %v2364
      %v2366 = vsel %vm1774, %v2245, 0.0
      %v2367 = vadd.f32 %v2365, %v2366
      %v2368 = vsel %vm1774, %v2250, 0.0
      %v2369 = vadd.f32 %v2367, %v2368
      %v2370 = vsel %vm1774, %v2255, 0.0
      %v2371 = vadd.f32 %v2369, %v2370
      %v2372 = vsel %vm1774, %v2260, 0.0
      %v2373 = vadd.f32 %v2371, %v2372
      %v2374 = vsel %vm1774, %v2265, 0.0
      %v2375 = vadd.f32 %v2373, %v2374
      %v2376 = vsel %vm1774, %v2270, 0.0
      %v2377 = vadd.f32 %v2375, %v2376
      %v2378 = vsel %vm1774, %v2275, 0.0
      %v2379 = vadd.f32 %v2377, %v2378
      %v2380 = vsel %vm1774, %v2280, 0.0
      %v2381 = vadd.f32 %v2379, %v2380
      %v2382 = vsel %vm1774, %v2285, 0.0
      %v2383 = vadd.f32 %v2381, %v2382
      %v2384 = vsel %vm1774, %v2290, 0.0
      %v2385 = vadd.f32 %v2383, %v2384
      %v2386 = vsel %vm1774, %v2295, 0.0
      %v2387 = vadd.f32 %v2385, %v2386
      %v2388 = vsel %vm1774, %v2300, 0.0
      %v2389 = vadd.f32 %v2387, %v2388
      %v2390 = vsel %vm1774, %v2305, 0.0
      %v2391 = vadd.f32 %v2389, %v2390
      %v2392 = vsel %vm1774, %v2310, 0.0
      %v2393 = vadd.f32 %v2391, %v2392
      %v2394 = vsel %vm1774, %v2315, 0.0
      %v2395 = vadd.f32 %v2393, %v2394
      %v2396 = vsel %vm1774, %v2320, 0.0
      %v2397 = vadd.f32 %v2395, %v2396
      %v2398 = vsel %vm1774, %v2325, 0.0
      %v2399 = vadd.f32 %v2397, %v2398
      %v2400 = vsel %vm1774, %v2330, 0.0
      %v2401 = vadd.f32 %v2399, %v2400
      %v2402 = vsel %vm1774, %v2335, 0.0
      %v2403 = vadd.f32 %v2401, %v2402
      %v2404 = vsel %vm1774, %v2340, 0.0
      %v2405 = vadd.f32 %v2403, %v2404
      %v2406 = vrot.slane %v2405, 4
      %v2407 = vadd.f32 %v2405, %v2406
      %v2408 = vrot.slane %v2407, 2
      %v2409 = vadd.f32 %v2407, %v2408
      %v2410 = vrot.slane %v2409, 1
      %v2411 = vadd.f32 %v2409, %v2410
      %vm2412 = vcmask 57344
      %2413 = vst.msk [vmem:[%s383] sm:$0x1] %vm2412, %v2411
      %v2414 = vmul.f32 %v2185, %v2185
      %v2415 = vmul.f32 %v2190, %v2190
      %v2416 = vmul.f32 %v2195, %v2195
      %v2417 = vmul.f32 %v2200, %v2200
      %v2418 = vmul.f32 %v2205, %v2205
      %v2419 = vmul.f32 %v2210, %v2210
      %v2420 = vmul.f32 %v2215, %v2215
      %v2421 = vmul.f32 %v2220, %v2220
      %v2422 = vmul.f32 %v2225, %v2225
      %v2423 = vmul.f32 %v2230, %v2230
      %v2424 = vmul.f32 %v2235, %v2235
      %v2425 = vmul.f32 %v2240, %v2240
      %v2426 = vmul.f32 %v2245, %v2245
      %v2427 = vmul.f32 %v2250, %v2250
      %v2428 = vmul.f32 %v2255, %v2255
      %v2429 = vmul.f32 %v2260, %v2260
      %v2430 = vmul.f32 %v2265, %v2265
      %v2431 = vmul.f32 %v2270, %v2270
      %v2432 = vmul.f32 %v2275, %v2275
      %v2433 = vmul.f32 %v2280, %v2280
      %v2434 = vmul.f32 %v2285, %v2285
      %v2435 = vmul.f32 %v2290, %v2290
      %v2436 = vmul.f32 %v2295, %v2295
      %v2437 = vmul.f32 %v2300, %v2300
      %v2438 = vmul.f32 %v2305, %v2305
      %v2439 = vmul.f32 %v2310, %v2310
      %v2440 = vmul.f32 %v2315, %v2315
      %v2441 = vmul.f32 %v2320, %v2320
      %v2442 = vmul.f32 %v2325, %v2325
      %v2443 = vmul.f32 %v2330, %v2330
      %v2444 = vmul.f32 %v2335, %v2335
      %v2445 = vmul.f32 %v2340, %v2340
      %v2446 = vsel %vm1774, %v2414, 0.0
      %v2447 = vsel %vm1774, %v2415, 0.0
      %v2448 = vadd.f32 %v2446, %v2447
      %v2449 = vsel %vm1774, %v2416, 0.0
      %v2450 = vadd.f32 %v2448, %v2449
      %v2451 = vsel %vm1774, %v2417, 0.0
      %v2452 = vadd.f32 %v2450, %v2451
      %v2453 = vsel %vm1774, %v2418, 0.0
      %v2454 = vadd.f32 %v2452, %v2453
      %v2455 = vsel %vm1774, %v2419, 0.0
      %v2456 = vadd.f32 %v2454, %v2455
      %v2457 = vsel %vm1774, %v2420, 0.0
      %v2458 = vadd.f32 %v2456, %v2457
      %v2459 = vsel %vm1774, %v2421, 0.0
      %v2460 = vadd.f32 %v2458, %v2459
      %v2461 = vsel %vm1774, %v2422, 0.0
      %v2462 = vadd.f32 %v2460, %v2461
      %v2463 = vsel %vm1774, %v2423, 0.0
      %v2464 = vadd.f32 %v2462, %v2463
      %v2465 = vsel %vm1774, %v2424, 0.0
      %v2466 = vadd.f32 %v2464, %v2465
      %v2467 = vsel %vm1774, %v2425, 0.0
      %v2468 = vadd.f32 %v2466, %v2467
      %v2469 = vsel %vm1774, %v2426, 0.0
      %v2470 = vadd.f32 %v2468, %v2469
      %v2471 = vsel %vm1774, %v2427, 0.0
      %v2472 = vadd.f32 %v2470, %v2471
      %v2473 = vsel %vm1774, %v2428, 0.0
      %v2474 = vadd.f32 %v2472, %v2473
      %v2475 = vsel %vm1774, %v2429, 0.0
      %v2476 = vadd.f32 %v2474, %v2475
      %v2477 = vsel %vm1774, %v2430, 0.0
      %v2478 = vadd.f32 %v2476, %v2477
      %v2479 = vsel %vm1774, %v2431, 0.0
      %v2480 = vadd.f32 %v2478, %v2479
      %v2481 = vsel %vm1774, %v2432, 0.0
      %v2482 = vadd.f32 %v2480, %v2481
      %v2483 = vsel %vm1774, %v2433, 0.0
      %v2484 = vadd.f32 %v2482, %v2483
      %v2485 = vsel %vm1774, %v2434, 0.0
      %v2486 = vadd.f32 %v2484, %v2485
      %v2487 = vsel %vm1774, %v2435, 0.0
      %v2488 = vadd.f32 %v2486, %v2487
      %v2489 = vsel %vm1774, %v2436, 0.0
      %v2490 = vadd.f32 %v2488, %v2489
      %v2491 = vsel %vm1774, %v2437, 0.0
      %v2492 = vadd.f32 %v2490, %v2491
      %v2493 = vsel %vm1774, %v2438, 0.0
      %v2494 = vadd.f32 %v2492, %v2493
      %v2495 = vsel %vm1774, %v2439, 0.0
      %v2496 = vadd.f32 %v2494, %v2495
      %v2497 = vsel %vm1774, %v2440, 0.0
      %v2498 = vadd.f32 %v2496, %v2497
      %v2499 = vsel %vm1774, %v2441, 0.0
      %v2500 = vadd.f32 %v2498, %v2499
      %v2501 = vsel %vm1774, %v2442, 0.0
      %v2502 = vadd.f32 %v2500, %v2501
      %v2503 = vsel %vm1774, %v2443, 0.0
      %v2504 = vadd.f32 %v2502, %v2503
      %v2505 = vsel %vm1774, %v2444, 0.0
      %v2506 = vadd.f32 %v2504, %v2505
      %v2507 = vsel %vm1774, %v2445, 0.0
      %v2508 = vadd.f32 %v2506, %v2507
      %v2509 = vrot.slane %v2508, 4
      %v2510 = vadd.f32 %v2508, %v2509
      %v2511 = vrot.slane %v2510, 2
      %v2512 = vadd.f32 %v2510, %v2511
      %v2513 = vrot.slane %v2512, 1
      %v2514 = vadd.f32 %v2512, %v2513
      %2515 = vst.msk [vmem:[%s391] sm:$0x1] %vm2412, %v2514
      %2516 = vst.msk [vmem:[%s375] sm:$0xff] %vm1774, %v2185
      %2517 = vst.msk [vmem:[%s375 + $0x8] sm:$0xff] %vm1774, %v2190
      %2518 = vst.msk [vmem:[%s375 + $0x10] sm:$0xff] %vm1774, %v2195
      %2519 = vst.msk [vmem:[%s375 + $0x18] sm:$0xff] %vm1774, %v2200
      %2520 = vst.msk [vmem:[%s375 + $0x20] sm:$0xff] %vm1774, %v2205
      %2521 = vst.msk [vmem:[%s375 + $0x28] sm:$0xff] %vm1774, %v2210
      %2522 = vst.msk [vmem:[%s375 + $0x30] sm:$0xff] %vm1774, %v2215
      %2523 = vst.msk [vmem:[%s375 + $0x38] sm:$0xff] %vm1774, %v2220
      %2524 = vst.msk [vmem:[%s375 + $0x40] sm:$0xff] %vm1774, %v2225
      %2525 = vst.msk [vmem:[%s375 + $0x48] sm:$0xff] %vm1774, %v2230
      %2526 = vst.msk [vmem:[%s375 + $0x50] sm:$0xff] %vm1774, %v2235
      %2527 = vst.msk [vmem:[%s375 + $0x58] sm:$0xff] %vm1774, %v2240
      %2528 = vst.msk [vmem:[%s375 + $0x60] sm:$0xff] %vm1774, %v2245
      %2529 = vst.msk [vmem:[%s375 + $0x68] sm:$0xff] %vm1774, %v2250
      %2530 = vst.msk [vmem:[%s375 + $0x70] sm:$0xff] %vm1774, %v2255
      %2531 = vst.msk [vmem:[%s375 + $0x78] sm:$0xff] %vm1774, %v2260
      %2532 = vst.msk [vmem:[%s375 + $0x80] sm:$0xff] %vm1774, %v2265
      %2533 = vst.msk [vmem:[%s375 + $0x88] sm:$0xff] %vm1774, %v2270
      %2534 = vst.msk [vmem:[%s375 + $0x90] sm:$0xff] %vm1774, %v2275
      %2535 = vst.msk [vmem:[%s375 + $0x98] sm:$0xff] %vm1774, %v2280
      %2536 = vst.msk [vmem:[%s375 + $0xa0] sm:$0xff] %vm1774, %v2285
      %2537 = vst.msk [vmem:[%s375 + $0xa8] sm:$0xff] %vm1774, %v2290
      %2538 = vst.msk [vmem:[%s375 + $0xb0] sm:$0xff] %vm1774, %v2295
      %2539 = vst.msk [vmem:[%s375 + $0xb8] sm:$0xff] %vm1774, %v2300
      %2540 = vst.msk [vmem:[%s375 + $0xc0] sm:$0xff] %vm1774, %v2305
      %2541 = vst.msk [vmem:[%s375 + $0xc8] sm:$0xff] %vm1774, %v2310
      %2542 = vst.msk [vmem:[%s375 + $0xd0] sm:$0xff] %vm1774, %v2315
      %2543 = vst.msk [vmem:[%s375 + $0xd8] sm:$0xff] %vm1774, %v2320
      %2544 = vst.msk [vmem:[%s375 + $0xe0] sm:$0xff] %vm1774, %v2325
      %2545 = vst.msk [vmem:[%s375 + $0xe8] sm:$0xff] %vm1774, %v2330
      %2546 = vst.msk [vmem:[%s375 + $0xf0] sm:$0xff] %vm1774, %v2335
      %2547 = vst.msk [vmem:[%s375 + $0xf8] sm:$0xff] %vm1774, %v2340
      %s2548 = smul.u32 16, %s25
      %p2549 = scmp.lt.s32.totalorder %s24, 1
      %s2550 = scalar_select %p2549, %s24, 1
      %p2551 = scmp.lt.s32.totalorder %s2548, 15
      %s2552 = scalar_select %p2551, %s2548, 15
      %p2553 = scmp.lt.s32.totalorder %s26, 0
      %s2554 = scalar_select %p2553, %s26, 0
      %s2555 = smul.addr %s2552, 2
      %s2556 = sadd.s32 %s2554, %s2555
      %s2557 = smul.addr %s2550, 32
      %s2558 = sadd.s32 %s2556, %s2557
      %s2559 = smul.addr %s2558, 8
      %s2560 = scalar_lea.vmem %s5, %s2559
      %s2561 = sadd.s32 %s24, %s25
      %p2562 = scmp.lt.s32.totalorder %s2561, 1
      %s2563 = scalar_select %p2562, %s2561, 1
      %p2564 = scmp.lt.s32.totalorder %s26, 0
      %s2565 = scalar_select %p2564, %s26, 0
      %s2566 = sadd.s32 %s2565, %s2563
      %s2567 = scalar_lea.vmem %s6, %s2566
      %s2568 = sadd.s32 %s24, %s25
      %p2569 = scmp.lt.s32.totalorder %s2568, 1
      %s2570 = scalar_select %p2569, %s2568, 1
      %p2571 = scmp.lt.s32.totalorder %s26, 0
      %s2572 = scalar_select %p2571, %s26, 0
      %s2573 = sadd.s32 %s2572, %s2570
      %s2574 = scalar_lea.vmem %s7, %s2573
      // Predicated region
      $region41: #{residual_block_forward.4} parent=39 // pred_check
        %p2575 = pneg %p180
      $region42: #{residual_block_forward.4} parent=39 // pred_check_branch
        %2577 = sbr.rel (%p2575) target = $region44
      $region43: #{residual_block_forward.4} parent=39 // pred_region
        %s2578 = smul.u32 16, %s25
      $region44: #{residual_block_forward.4} parent=39 // pred_fallthru
        _
      // Predicated region
      $region45: #{residual_block_forward.4} parent=39 // pred_check
        %p2579 = pneg %p210
      $region46: #{residual_block_forward.4} parent=39 // pred_check_branch
        %2581 = sbr.rel (%p2579) target = $region48
      $region47: #{residual_block_forward.4} parent=39 // pred_region
        %s2582 = sadd.s32 %s24, %s25
      $region48: #{residual_block_forward.4} parent=39 // pred_fallthru
        _
      // Predicated region
      $region49: #{residual_block_forward.4} parent=39 // pred_check
        %p2583 = pneg %p240
      $region50: #{residual_block_forward.4} parent=39 // pred_check_branch
        %2585 = sbr.rel (%p2583) target = $region52
      $region51: #{residual_block_forward.4} parent=39 // pred_region
        %s2586 = sadd.s32 %s24, %s25
      $region52: #{residual_block_forward.4} parent=39 // pred_fallthru
        _
    $region40: #{residual_block_forward.4} parent=5 // pred_fallthru
      _
    %p2587 = scmp.le.s32.totalorder 2, %s14
    // Predicated region
    $region53: #{residual_block_forward.4} parent=5 // pred_check
      %p2588 = pneg %p2587
    $region54: #{residual_block_forward.4} parent=5 // pred_check_branch
      %2590 = sbr.rel (%p2588) target = $region56
    $region55: #{residual_block_forward.4} parent=5 // pred_region
      %s2591 = ssub.s32 %s14, 2
      // Predicated region
      $region57: #{residual_block_forward.4} parent=55 // pred_check
        %p2592 = pneg %p186
      $region58: #{residual_block_forward.4} parent=55 // pred_check_branch
        %2594 = sbr.rel (%p2592) target = $region60
      $region59: #{residual_block_forward.4} parent=55 // pred_region
        %s2595 = smul.u32 16, %s28
        %p2596 = scmp.lt.s32.totalorder %s27, 1
        %s2597 = scalar_select %p2596, %s27, 1
        %p2598 = scmp.lt.s32.totalorder %s2595, 15
        %s2599 = scalar_select %p2598, %s2595, 15
        %p2600 = scmp.lt.s32.totalorder %s29, 0
        %s2601 = scalar_select %p2600, %s29, 0
        %s2602 = smul.addr %s2599, 2
        %s2603 = sadd.s32 %s2601, %s2602
        %s2604 = smul.addr %s2597, 32
        %s2605 = sadd.s32 %s2603, %s2604
        %s2606 = smul.addr %s2605, 8
        %s2607 = scalar_lea.vmem %s5, %s2606
      $region60: #{residual_block_forward.4} parent=55 // pred_fallthru
        _
      // Predicated region
      $region61: #{residual_block_forward.4} parent=55 // pred_check
        %p2608 = pneg %p216
      $region62: #{residual_block_forward.4} parent=55 // pred_check_branch
        %2610 = sbr.rel (%p2608) target = $region64
      $region63: #{residual_block_forward.4} parent=55 // pred_region
        %s2611 = sadd.s32 %s27, %s28
        %p2612 = scmp.lt.s32.totalorder %s2611, 1
        %s2613 = scalar_select %p2612, %s2611, 1
        %p2614 = scmp.lt.s32.totalorder %s29, 0
        %s2615 = scalar_select %p2614, %s29, 0
        %s2616 = sadd.s32 %s2615, %s2613
        %s2617 = scalar_lea.vmem %s6, %s2616
      $region64: #{residual_block_forward.4} parent=55 // pred_fallthru
        _
      // Predicated region
      $region65: #{residual_block_forward.4} parent=55 // pred_check
        %p2618 = pneg %p246
      $region66: #{residual_block_forward.4} parent=55 // pred_check_branch
        %2620 = sbr.rel (%p2618) target = $region68
      $region67: #{residual_block_forward.4} parent=55 // pred_region
        %s2621 = sadd.s32 %s27, %s28
        %p2622 = scmp.lt.s32.totalorder %s2621, 1
        %s2623 = scalar_select %p2622, %s2621, 1
        %p2624 = scmp.lt.s32.totalorder %s29, 0
        %s2625 = scalar_select %p2624, %s29, 0
        %s2626 = sadd.s32 %s2625, %s2623
        %s2627 = scalar_lea.vmem %s7, %s2626
      $region68: #{residual_block_forward.4} parent=55 // pred_fallthru
        _
    $region56: #{residual_block_forward.4} parent=5 // pred_fallthru
      _
  $region6: #{residual_block_forward.4} parent=0 // loop_footer
    %s18 = sadd.s32 1, %s14
  $region7: #{residual_block_forward.4} parent=0 // loop_footer_branch
    %13 = sbr.rel target = $region3
  $region8: #{residual_block_forward.4} parent=0 // loop_exit
    _

</llo_original>
